<compile_context>
chip_gen: v5e
topology: v5e:2x2
jax: 0.10.0
libtpu: 0.0.40
codegen_flags: <defaults>
</compile_context>

<pallas_src>
import functools

import jax
import jax.numpy as jnp
from jax.experimental import pallas as pl
from jax.experimental.pallas import tpu as pltpu


def _deep_conv_kernel(masks_ref, xt_ref, v1_ref, b1_ref, v2_ref, b2_ref,
                      v34_ref, b34_ref, o_ref, *, h, w, c):
    """Fused conv1..conv4 + sigmoid for one block of stacked images.

    Layout: channels on sublanes, spatial (padded rows * W) on lanes.
      masks_ref : (3, M)  f32  [row_ok, left_ok, right_ok] lane masks
      xt_ref    : (3, M)  bf16 im2col (dw taps) of the padded 1-channel input
      v1_ref    : (3C, 3) f32  conv1 weights, row = dh*C + c_out, col = dw
      v2_ref    : (3C,3C) bf16 conv2 weights, row = dh*C+c_out, col = dw*C+c_in
      b1/b2     : (C, 1)  f32  biases (broadcast across lanes)
      v34_ref   : (3, 3C) bf16 conv3 weights pre-contracted with conv4 (1x1)
      b34_ref   : (1, 1)  f32  fused scalar bias (w4.b3 + b4) in SMEM
      o_ref     : (1, M)  f32  lane-dense output slab (halo rows stripped by XLA)
    with M = block_n * (H+2) * W.
    """
    f32 = jnp.float32
    bf16 = jnp.bfloat16
    m = masks_ref.shape[-1]

    row_ok = masks_ref[0:1, :]     # 0 on the zero-halo rows of each image
    left_ok = masks_ref[1:2, :]    # 0 where the lane is the first column of a row
    right_ok = masks_ref[2:3, :]   # 0 where the lane is the last column of a row

    def lroll(x, shift):
        # Single XLU lane rotation; normalize negative shifts to positive.
        return pltpu.roll(x, shift % m, axis=1)

    def fold_dh(p, nch):
        # p: (3*nch, M) with the dh taps stacked on sublanes.  Fold them with
        # +-W lane rotations.  NOTE: this relies on p being exactly zero on the
        # halo-row lanes (taps/xt are zero there), so the rotation wrap-around
        # only ever lands on halo lanes that are re-masked or discarded.  Do
        # not move the bias add before this fold.
        return (p[nch:2 * nch, :]
                + lroll(p[0:nch, :], w)       # contribution from the row above
                + lroll(p[2 * nch:3 * nch, :], -w))  # row below

    def taps(q):
        # q: (C, M) activation (zero on halo rows) -> (3C, M) bf16 with the dw
        # taps stacked on the contraction (sublane) axis.  +-1 lane rotations
        # plus column masks implement the horizontal zero padding.
        left = lroll(q, 1) * left_ok
        right = lroll(q, -1) * right_ok
        return jnp.concatenate([left, q, right], axis=0).astype(bf16)

    # ---- conv1: 1 -> C, three f32 VPU broadcast MACs (kept off the MXU) ----
    xt = xt_ref[...].astype(f32)                              # (3, M)
    p1 = (v1_ref[:, 0:1] * xt[0:1, :]
          + v1_ref[:, 1:2] * xt[1:2, :]
          + v1_ref[:, 2:3] * xt[2:3, :])                      # (3C, M)
    q1 = (fold_dh(p1, c) + b1_ref[...]) * row_ok              # (C, M)

    # ---- conv2: C -> C, one bf16 (3C,3C)@(3C,M) MXU matmul ----
    p2 = jnp.dot(v2_ref[...], taps(q1), preferred_element_type=f32)
    q2 = (fold_dh(p2, c) + b2_ref[...]) * row_ok              # (C, M)

    # ---- conv3 with conv4 (1x1) pre-folded: one bf16 (3,3C)@(3C,M) matmul ----
    p3 = jnp.dot(v34_ref[...], taps(q2), preferred_element_type=f32)  # (3, M)
    s = fold_dh(p3, 1) + b34_ref[0, 0]                        # (1, M)

    # Lane-dense, unmasked (1, M) store; halo rows stripped in the wrapper.
    o_ref[...] = jax.nn.sigmoid(s)


@functools.partial(jax.jit, static_argnames=("block_n",))
def deep_conv_forward(x_nchw, w1, b1, w2, b2, w3, b3, w4, b4, *, block_n=8):
    """DeepConv forward.  x_nchw: (N, 1, H, W) f32; weights in PyTorch OIHW."""
    n, cin, h, w = x_nchw.shape
    assert cin == 1 and n % block_n == 0
    c = w1.shape[0]
    hp2, wp2 = h + 2, w + 2
    nblk = n // block_n            # keep even and >= 2 so v7x can use both TCs
    m = block_n * hp2 * w

    # ---- wrapper-side layout plumbing (cheap XLA ops) ----
    # Stack `block_n` zero-padded images vertically; the private halo rows keep
    # the 3x3 windows of different images from touching each other.
    x_pad = jnp.pad(x_nchw[:, 0], ((0, 0), (1, 1), (1, 1)))        # (N, H+2, W+2)
    x_pad = x_pad.reshape(nblk, block_n * hp2, wp2)
    # im2col over the 3 horizontal taps of the single input channel, bf16 so
    # the only per-step streaming DMA is half-width.
    xt = jnp.stack([x_pad[:, :, dw:dw + w] for dw in range(3)], axis=1)
    xt = xt.reshape(nblk, 3, m).astype(jnp.bfloat16)

    # Lane masks (identical for every grid step -> constant block index, so
    # Pallas only DMAs them once).
    lane = jnp.arange(m, dtype=jnp.int32)
    col = lane % w
    row_in_img = (lane // w) % hp2
    masks = jnp.stack([
        jnp.logical_and(row_in_img >= 1, row_in_img <= h),   # not a halo row
        col != 0,                                            # has a left neighbour
        col != (w - 1),                                       # has a right neighbour
    ]).astype(jnp.float32)                                   # (3, M)

    # conv1 weights stay f32 (VPU path): row = dh*C + c_out, col = dw.
    v1 = jnp.transpose(w1[:, 0], (1, 0, 2)).reshape(3 * c, 3).astype(jnp.float32)
    # conv2 weights for the MXU: row = dh*C + c_out, col = dw*C + c_in.
    v2 = jnp.transpose(w2, (2, 0, 3, 1)).reshape(3 * c, 3 * c).astype(jnp.bfloat16)
    # conv4 (1x1) folded into conv3 (legal: no nonlinearity between them):
    #   v34[dh, dw*C + c_in] = sum_{c_out} w4[c_out] * w3[c_out, c_in, dh, dw]
    #   b34 = w4 . b3 + b4
    w4v = w4[0, :, 0, 0].astype(jnp.float32)
    v34 = jnp.einsum("o,oihw->hwi", w4v, w3.astype(jnp.float32))
    v34 = v34.reshape(3, 3 * c).astype(jnp.bfloat16)
    b34 = (jnp.dot(w4v, b3.astype(jnp.float32)) + b4[0]).reshape(1, 1)
    b34 = b34.astype(jnp.float32)
    b1c = b1.reshape(c, 1).astype(jnp.float32)
    b2c = b2.reshape(c, 1).astype(jnp.float32)

    kernel = functools.partial(_deep_conv_kernel, h=h, w=w, c=c)
    full = lambda g: (0, 0)
    out = pl.pallas_call(
        kernel,
        out_shape=jax.ShapeDtypeStruct((nblk, 1, m), jnp.float32),
        grid_spec=pltpu.PrefetchScalarGridSpec(
            num_scalar_prefetch=0,
            grid=(nblk,),
            in_specs=[
                pl.BlockSpec((3, m), full),                        # lane masks
                pl.BlockSpec((None, 3, m), lambda g: (g, 0, 0)),   # input im2col
                pl.BlockSpec((3 * c, 3), full),                    # conv1 weights
                pl.BlockSpec((c, 1), full),                        # b1
                pl.BlockSpec((3 * c, 3 * c), full),                # conv2 weights
                pl.BlockSpec((c, 1), full),                        # b2
                pl.BlockSpec((3, 3 * c), full),                    # conv3*conv4 weights
                pl.BlockSpec(memory_space=pltpu.MemorySpace.SMEM), # fused scalar bias
            ],
            out_specs=pl.BlockSpec((None, 1, m), lambda g: (g, 0, 0)),
        ),
        compiler_params=pltpu.CompilerParams(
            # Batch grid axis shards across both TensorCores on v7x.
            dimension_semantics=("parallel",),
            # Above the 16/32 MiB scoped defaults, below v7x's 64 MiB physical.
            vmem_limit_bytes=48 * 1024 * 1024,
        ),
    )(masks, xt, v1, b1c, v2, b2c, v34, b34)

    # Strip the per-image zero-halo rows with a cheap XLA slice/reshape.
    out = out.reshape(n, hp2, w)[:, 1:h + 1, :]
    return out.reshape(n, 1, h, w)


def ref_forward(x_nchw, w1, b1, w2, b2, w3, b3, w4, b4):
    """Plain-JAX f32 reference matching the PyTorch module (NCHW / OIHW)."""
    def conv(x, wt, b, pad):
        y = jax.lax.conv_general_dilated(
            x, wt, window_strides=(1, 1), padding=[(pad, pad), (pad, pad)],
            dimension_numbers=("NCHW", "OIHW", "NCHW"))
        return y + b.reshape(1, -1, 1, 1)
    y = conv(x_nchw, w1, b1, 1)
    y = conv(y, w2, b2, 1)
    y = conv(y, w3, b3, 1)
    y = conv(y, w4, b4, 0)
    return jax.nn.sigmoid(y)


if __name__ == "__main__":
    # block_n=8 images per grid step, nblk = 16/8 = 2 (even -> both v7x TCs).
    N, C, H, W = 16, 32, 16, 16
    key = jax.random.PRNGKey(0)
    ks = jax.random.split(key, 9)

    # Deterministic synthetic parameters (PyTorch OIHW convention).
    w1 = jax.random.normal(ks[0], (C, 1, 3, 3), jnp.float32) * 0.3
    b1 = jax.random.normal(ks[1], (C,), jnp.float32) * 0.1
    w2 = jax.random.normal(ks[2], (C, C, 3, 3), jnp.float32) * 0.06
    b2 = jax.random.normal(ks[3], (C,), jnp.float32) * 0.1
    w3 = jax.random.normal(ks[4], (C, C, 3, 3), jnp.float32) * 0.06
    b3 = jax.random.normal(ks[5], (C,), jnp.float32) * 0.1
    w4 = jax.random.normal(ks[6], (1, C, 1, 1), jnp.float32) * 0.2
    b4 = jax.random.normal(ks[7], (1,), jnp.float32) * 0.1
    x = jax.random.normal(ks[8], (N, 1, H, W), jnp.float32)

    out = deep_conv_forward(x, w1, b1, w2, b2, w3, b3, w4, b4, block_n=8)
    out = jax.block_until_ready(out)

    ref = ref_forward(x, w1, b1, w2, b2, w3, b3, w4, b4)
    assert out.shape == ref.shape == (N, 1, H, W)
    # bf16 MXU inputs (and bf16 im2col DMA) with f32 accumulation.
    err = float(jnp.max(jnp.abs(out - ref)))
    assert jnp.allclose(out, ref, atol=3e-2, rtol=3e-2), err

    print("KERNEL_OK")
</pallas_src>

<mosaic_0001>
module attributes {stable_mosaic.version = 11 : i64} {
  func.func @_deep_conv_kernel(%arg0: i32, %arg1: memref<3x2304xf32, #tpu.memory_space<vmem>>, %arg2: memref<1x3x2304xbf16, #tpu.memory_space<vmem>>, %arg3: memref<96x3xf32, #tpu.memory_space<vmem>>, %arg4: memref<32x1xf32, #tpu.memory_space<vmem>>, %arg5: memref<96x96xbf16, #tpu.memory_space<vmem>>, %arg6: memref<32x1xf32, #tpu.memory_space<vmem>>, %arg7: memref<3x96xbf16, #tpu.memory_space<vmem>>, %arg8: memref<1x1xf32, #tpu.memory_space<smem>>, %arg9: memref<1x1x2304xf32, #tpu.memory_space<vmem>>) attributes {dimension_semantics = [#tpu.dimension_semantics<parallel>], iteration_bounds = array<i64: 2>, scalar_prefetch = 0 : i64, scratch_operands = 0 : i64, tpu.core_type = #tpu.core_type<tc>, window_params = [{pipeline_mode = #tpu.pipeline_mode<synchronous>, transform_indices = @transform_0, window_bounds = array<i64: 3, 2304>}, {transform_indices = @transform_1, window_bounds = array<i64: 1, 3, 2304>}, {pipeline_mode = #tpu.pipeline_mode<synchronous>, transform_indices = @transform_2, window_bounds = array<i64: 96, 3>}, {pipeline_mode = #tpu.pipeline_mode<synchronous>, transform_indices = @transform_3, window_bounds = array<i64: 32, 1>}, {pipeline_mode = #tpu.pipeline_mode<synchronous>, transform_indices = @transform_4, window_bounds = array<i64: 96, 96>}, {pipeline_mode = #tpu.pipeline_mode<synchronous>, transform_indices = @transform_5, window_bounds = array<i64: 32, 1>}, {pipeline_mode = #tpu.pipeline_mode<synchronous>, transform_indices = @transform_6, window_bounds = array<i64: 3, 96>}, {transform_indices = @transform_7, window_bounds = array<i64: 1, 1>}, {transform_indices = @transform_8, window_bounds = array<i64: 1, 1, 2304>}]} {
    %c0 = arith.constant 0 : index
    %c0_0 = arith.constant 0 : index
    %0 = vector.load %arg1[%c0, %c0_0] : memref<3x2304xf32, #tpu.memory_space<vmem>>, vector<1x2304xf32>
    %c1 = arith.constant 1 : index
    %c0_1 = arith.constant 0 : index
    %1 = vector.load %arg1[%c1, %c0_1] : memref<3x2304xf32, #tpu.memory_space<vmem>>, vector<1x2304xf32>
    %c2 = arith.constant 2 : index
    %c0_2 = arith.constant 0 : index
    %2 = vector.load %arg1[%c2, %c0_2] : memref<3x2304xf32, #tpu.memory_space<vmem>>, vector<1x2304xf32>
    %c0_3 = arith.constant 0 : index
    %c0_4 = arith.constant 0 : index
    %c0_5 = arith.constant 0 : index
    %3 = vector.load %arg2[%c0_3, %c0_4, %c0_5] : memref<1x3x2304xbf16, #tpu.memory_space<vmem>>, vector<1x3x2304xbf16>
    %4 = vector.shape_cast %3 : vector<1x3x2304xbf16> to vector<3x2304xbf16>
    %5 = arith.extf %4 : vector<3x2304xbf16> to vector<3x2304xf32>
    %c0_6 = arith.constant 0 : index
    %c0_7 = arith.constant 0 : index
    %6 = vector.load %arg3[%c0_6, %c0_7] : memref<96x3xf32, #tpu.memory_space<vmem>>, vector<96x1xf32>
    %7 = vector.extract_strided_slice %5 {offsets = [0, 0], sizes = [1, 2304], strides = [1, 1]} : vector<3x2304xf32> to vector<1x2304xf32>
    %8 = vector.broadcast %6 : vector<96x1xf32> to vector<96x2304xf32>
    %9 = vector.broadcast %7 : vector<1x2304xf32> to vector<96x2304xf32>
    %10 = arith.mulf %8, %9 : vector<96x2304xf32>
    %c0_8 = arith.constant 0 : index
    %c1_9 = arith.constant 1 : index
    %11 = vector.load %arg3[%c0_8, %c1_9] : memref<96x3xf32, #tpu.memory_space<vmem>>, vector<96x1xf32>
    %12 = vector.extract_strided_slice %5 {offsets = [1, 0], sizes = [1, 2304], strides = [1, 1]} : vector<3x2304xf32> to vector<1x2304xf32>
    %13 = vector.broadcast %11 : vector<96x1xf32> to vector<96x2304xf32>
    %14 = vector.broadcast %12 : vector<1x2304xf32> to vector<96x2304xf32>
    %15 = arith.mulf %13, %14 : vector<96x2304xf32>
    %16 = arith.addf %10, %15 : vector<96x2304xf32>
    %c0_10 = arith.constant 0 : index
    %c2_11 = arith.constant 2 : index
    %17 = vector.load %arg3[%c0_10, %c2_11] : memref<96x3xf32, #tpu.memory_space<vmem>>, vector<96x1xf32>
    %18 = vector.extract_strided_slice %5 {offsets = [2, 0], sizes = [1, 2304], strides = [1, 1]} : vector<3x2304xf32> to vector<1x2304xf32>
    %19 = vector.broadcast %17 : vector<96x1xf32> to vector<96x2304xf32>
    %20 = vector.broadcast %18 : vector<1x2304xf32> to vector<96x2304xf32>
    %21 = arith.mulf %19, %20 : vector<96x2304xf32>
    %22 = arith.addf %16, %21 : vector<96x2304xf32>
    %23 = vector.extract_strided_slice %22 {offsets = [32, 0], sizes = [32, 2304], strides = [1, 1]} : vector<96x2304xf32> to vector<32x2304xf32>
    %24 = vector.extract_strided_slice %22 {offsets = [0, 0], sizes = [32, 2304], strides = [1, 1]} : vector<96x2304xf32> to vector<32x2304xf32>
    %c16_i32 = arith.constant 16 : i32
    %25 = tpu.dynamic_rotate %24 by %c16_i32 dim 1 : vector<32x2304xf32>, i32 -> vector<32x2304xf32>
    %26 = arith.addf %23, %25 : vector<32x2304xf32>
    %27 = vector.extract_strided_slice %22 {offsets = [64, 0], sizes = [32, 2304], strides = [1, 1]} : vector<96x2304xf32> to vector<32x2304xf32>
    %c2288_i32 = arith.constant 2288 : i32
    %28 = tpu.dynamic_rotate %27 by %c2288_i32 dim 1 : vector<32x2304xf32>, i32 -> vector<32x2304xf32>
    %29 = arith.addf %26, %28 : vector<32x2304xf32>
    %c0_12 = arith.constant 0 : index
    %c0_13 = arith.constant 0 : index
    %30 = vector.load %arg4[%c0_12, %c0_13] : memref<32x1xf32, #tpu.memory_space<vmem>>, vector<32x1xf32>
    %31 = vector.broadcast %30 : vector<32x1xf32> to vector<32x2304xf32>
    %32 = arith.addf %29, %31 : vector<32x2304xf32>
    %33 = vector.broadcast %0 : vector<1x2304xf32> to vector<32x2304xf32>
    %34 = arith.mulf %32, %33 : vector<32x2304xf32>
    %c0_14 = arith.constant 0 : index
    %c0_15 = arith.constant 0 : index
    %35 = vector.load %arg5[%c0_14, %c0_15] : memref<96x96xbf16, #tpu.memory_space<vmem>>, vector<96x96xbf16>
    %c1_i32 = arith.constant 1 : i32
    %36 = tpu.dynamic_rotate %34 by %c1_i32 dim 1 : vector<32x2304xf32>, i32 -> vector<32x2304xf32>
    %37 = vector.broadcast %1 : vector<1x2304xf32> to vector<32x2304xf32>
    %38 = arith.mulf %36, %37 : vector<32x2304xf32>
    %c2303_i32 = arith.constant 2303 : i32
    %39 = tpu.dynamic_rotate %34 by %c2303_i32 dim 1 : vector<32x2304xf32>, i32 -> vector<32x2304xf32>
    %40 = vector.broadcast %2 : vector<1x2304xf32> to vector<32x2304xf32>
    %41 = arith.mulf %39, %40 : vector<32x2304xf32>
    %42 = tpu.concatenate %38, %34, %41 in 0 : vector<32x2304xf32>, vector<32x2304xf32>, vector<32x2304xf32> -> vector<96x2304xf32>
    %43 = arith.truncf %42 : vector<96x2304xf32> to vector<96x2304xbf16>
    %cst = arith.constant dense<0.000000e+00> : vector<96x2304xf32>
    %44 = tpu.matmul %35, %43, %cst {dimension_numbers = #tpu.dot_dimension_numbers<[1], [0], [0], [1], [0, 0, 1, 1], [], []>} : vector<96x96xbf16>, vector<96x2304xbf16>, vector<96x2304xf32> -> vector<96x2304xf32>
    %45 = vector.extract_strided_slice %44 {offsets = [32, 0], sizes = [32, 2304], strides = [1, 1]} : vector<96x2304xf32> to vector<32x2304xf32>
    %46 = vector.extract_strided_slice %44 {offsets = [0, 0], sizes = [32, 2304], strides = [1, 1]} : vector<96x2304xf32> to vector<32x2304xf32>
    %c16_i32_16 = arith.constant 16 : i32
    %47 = tpu.dynamic_rotate %46 by %c16_i32_16 dim 1 : vector<32x2304xf32>, i32 -> vector<32x2304xf32>
    %48 = arith.addf %45, %47 : vector<32x2304xf32>
    %49 = vector.extract_strided_slice %44 {offsets = [64, 0], sizes = [32, 2304], strides = [1, 1]} : vector<96x2304xf32> to vector<32x2304xf32>
    %c2288_i32_17 = arith.constant 2288 : i32
    %50 = tpu.dynamic_rotate %49 by %c2288_i32_17 dim 1 : vector<32x2304xf32>, i32 -> vector<32x2304xf32>
    %51 = arith.addf %48, %50 : vector<32x2304xf32>
    %c0_18 = arith.constant 0 : index
    %c0_19 = arith.constant 0 : index
    %52 = vector.load %arg6[%c0_18, %c0_19] : memref<32x1xf32, #tpu.memory_space<vmem>>, vector<32x1xf32>
    %53 = vector.broadcast %52 : vector<32x1xf32> to vector<32x2304xf32>
    %54 = arith.addf %51, %53 : vector<32x2304xf32>
    %55 = vector.broadcast %0 : vector<1x2304xf32> to vector<32x2304xf32>
    %56 = arith.mulf %54, %55 : vector<32x2304xf32>
    %c0_20 = arith.constant 0 : index
    %c0_21 = arith.constant 0 : index
    %57 = vector.load %arg7[%c0_20, %c0_21] : memref<3x96xbf16, #tpu.memory_space<vmem>>, vector<3x96xbf16>
    %c1_i32_22 = arith.constant 1 : i32
    %58 = tpu.dynamic_rotate %56 by %c1_i32_22 dim 1 : vector<32x2304xf32>, i32 -> vector<32x2304xf32>
    %59 = vector.broadcast %1 : vector<1x2304xf32> to vector<32x2304xf32>
    %60 = arith.mulf %58, %59 : vector<32x2304xf32>
    %c2303_i32_23 = arith.constant 2303 : i32
    %61 = tpu.dynamic_rotate %56 by %c2303_i32_23 dim 1 : vector<32x2304xf32>, i32 -> vector<32x2304xf32>
    %62 = vector.broadcast %2 : vector<1x2304xf32> to vector<32x2304xf32>
    %63 = arith.mulf %61, %62 : vector<32x2304xf32>
    %64 = tpu.concatenate %60, %56, %63 in 0 : vector<32x2304xf32>, vector<32x2304xf32>, vector<32x2304xf32> -> vector<96x2304xf32>
    %65 = arith.truncf %64 : vector<96x2304xf32> to vector<96x2304xbf16>
    %cst_24 = arith.constant dense<0.000000e+00> : vector<3x2304xf32>
    %66 = tpu.matmul %57, %65, %cst_24 {dimension_numbers = #tpu.dot_dimension_numbers<[1], [0], [0], [1], [0, 0, 1, 1], [], []>} : vector<3x96xbf16>, vector<96x2304xbf16>, vector<3x2304xf32> -> vector<3x2304xf32>
    %67 = vector.extract_strided_slice %66 {offsets = [1, 0], sizes = [1, 2304], strides = [1, 1]} : vector<3x2304xf32> to vector<1x2304xf32>
    %68 = vector.extract_strided_slice %66 {offsets = [0, 0], sizes = [1, 2304], strides = [1, 1]} : vector<3x2304xf32> to vector<1x2304xf32>
    %c16_i32_25 = arith.constant 16 : i32
    %69 = tpu.dynamic_rotate %68 by %c16_i32_25 dim 1 : vector<1x2304xf32>, i32 -> vector<1x2304xf32>
    %70 = arith.addf %67, %69 : vector<1x2304xf32>
    %71 = vector.extract_strided_slice %66 {offsets = [2, 0], sizes = [1, 2304], strides = [1, 1]} : vector<3x2304xf32> to vector<1x2304xf32>
    %c2288_i32_26 = arith.constant 2288 : i32
    %72 = tpu.dynamic_rotate %71 by %c2288_i32_26 dim 1 : vector<1x2304xf32>, i32 -> vector<1x2304xf32>
    %73 = arith.addf %70, %72 : vector<1x2304xf32>
    %c0_27 = arith.constant 0 : index
    %c0_28 = arith.constant 0 : index
    %74 = memref.load %arg8[%c0_27, %c0_28] : memref<1x1xf32, #tpu.memory_space<smem>>
    %75 = vector.broadcast %74 : f32 to vector<1x2304xf32>
    %76 = arith.addf %73, %75 : vector<1x2304xf32>
    %77 = arith.negf %76 : vector<1x2304xf32>
    %78 = math.exp %77 : vector<1x2304xf32>
    %cst_29 = arith.constant 1.000000e+00 : f32
    %79 = vector.broadcast %cst_29 : f32 to vector<1x2304xf32>
    %80 = arith.addf %79, %78 : vector<1x2304xf32>
    %81 = arith.divf %79, %80 : vector<1x2304xf32>
    %c0_30 = arith.constant 0 : index
    %c0_31 = arith.constant 0 : index
    %c0_32 = arith.constant 0 : index
    %82 = vector.load %arg9[%c0_30, %c0_31, %c0_32] : memref<1x1x2304xf32, #tpu.memory_space<vmem>>, vector<1x1x2304xf32>
    %83 = vector.shape_cast %82 : vector<1x1x2304xf32> to vector<1x2304xf32>
    %84 = vector.shape_cast %81 : vector<1x2304xf32> to vector<1x1x2304xf32>
    tpu.vector_store %arg9[%c0_30, %c0_31, %c0_32], %84 {strides = array<i32>} : memref<1x1x2304xf32, #tpu.memory_space<vmem>>, vector<1x1x2304xf32>,
    return
  }
  func.func @transform_0(%arg0: i32) -> (i32, i32) {
    %c0_i32 = arith.constant 0 : i32
    %c0_i32_0 = arith.constant 0 : i32
    %c0_i32_1 = arith.constant 0 : i32
    return %c0_i32, %c0_i32_0 : i32, i32
  }
  func.func @transform_1(%arg0: i32) -> (i32, i32, i32) {
    %c0_i32 = arith.constant 0 : i32
    %c0_i32_0 = arith.constant 0 : i32
    %c0_i32_1 = arith.constant 0 : i32
    return %arg0, %c0_i32, %c0_i32_0 : i32, i32, i32
  }
  func.func @transform_2(%arg0: i32) -> (i32, i32) {
    %c0_i32 = arith.constant 0 : i32
    %c0_i32_0 = arith.constant 0 : i32
    %c0_i32_1 = arith.constant 0 : i32
    return %c0_i32, %c0_i32_0 : i32, i32
  }
  func.func @transform_3(%arg0: i32) -> (i32, i32) {
    %c0_i32 = arith.constant 0 : i32
    %c0_i32_0 = arith.constant 0 : i32
    %c0_i32_1 = arith.constant 0 : i32
    return %c0_i32, %c0_i32_0 : i32, i32
  }
  func.func @transform_4(%arg0: i32) -> (i32, i32) {
    %c0_i32 = arith.constant 0 : i32
    %c0_i32_0 = arith.constant 0 : i32
    %c0_i32_1 = arith.constant 0 : i32
    return %c0_i32, %c0_i32_0 : i32, i32
  }
  func.func @transform_5(%arg0: i32) -> (i32, i32) {
    %c0_i32 = arith.constant 0 : i32
    %c0_i32_0 = arith.constant 0 : i32
    %c0_i32_1 = arith.constant 0 : i32
    return %c0_i32, %c0_i32_0 : i32, i32
  }
  func.func @transform_6(%arg0: i32) -> (i32, i32) {
    %c0_i32 = arith.constant 0 : i32
    %c0_i32_0 = arith.constant 0 : i32
    %c0_i32_1 = arith.constant 0 : i32
    return %c0_i32, %c0_i32_0 : i32, i32
  }
  func.func @transform_7(%arg0: i32) -> (i32, i32) {
    %c0_i32 = arith.constant 0 : i32
    %c0_i32_0 = arith.constant 0 : i32
    %c0_i32_1 = arith.constant 0 : i32
    return %c0_i32, %c0_i32_0 : i32, i32
  }
  func.func @transform_8(%arg0: i32) -> (i32, i32, i32) {
    %c0_i32 = arith.constant 0 : i32
    %c0_i32_0 = arith.constant 0 : i32
    %c0_i32_1 = arith.constant 0 : i32
    return %arg0, %c0_i32, %c0_i32_0 : i32, i32, i32
  }
}

</mosaic_0001>

<llo_original>
// kernel: deep_conv_forward.1
$region0: #{deep_conv_forward.1}
  #allocation0 [shape = 'u32[]', space=smem, size = 0x4, offset = 0x4, fixed_abs, tag = 'smem constant byte address 0x4 - core index']
  #allocation1 [shape = 'u32[72,128]{1,0:T(1,128)}', space=vmem, size = 0x9000, scoped, tag = 'internal scratch']
  #allocation2 [shape = 'f32[1,1]{1,0:T(1,128)S(6)}', space=smem, size = 0x200, scoped, tag = 'scoped memory for deep_conv_forward.1']
  %s0 = inlined_call_operand.vmem [shape: f32[3,2304], index: 0, kind: input, shape index: {}]
  %s1 = inlined_call_operand.vmem [shape: bf16[2,3,2304], index: 1, kind: input, shape index: {}]
  %s2 = inlined_call_operand.vmem [shape: f32[96,3], index: 2, kind: input, shape index: {}]
  %s3 = inlined_call_operand.vmem [shape: f32[32,1], index: 3, kind: input, shape index: {}]
  %s4 = inlined_call_operand.vmem [shape: bf16[96,96], index: 4, kind: input, shape index: {}]
  %s5 = inlined_call_operand.vmem [shape: f32[32,1], index: 5, kind: input, shape index: {}]
  %s6 = inlined_call_operand.vmem [shape: bf16[3,96], index: 6, kind: input, shape index: {}]
  %s7 = inlined_call_operand.<no memory space> [shape: f32[1,1], index: 7, kind: input, shape index: {}]
  %s8 = inlined_call_operand.vmem [shape: f32[2,1,2304], index: 8, kind: output, shape index: {}]
  %s9 = sld [smem:[#allocation0]]
  $region65: #{deep_conv_forward.1} parent=0
    _
  %s11 = ssub.s32 1, %s9
  %s12 = scalar_select 0, %s11, %s9
  %13 = sst [smem:[#allocation2]] %s7
  loop: start=0, step=1, limit=4
  $region2: #{deep_conv_forward.1} parent=0 // loop_pre_header
    _
  $region3: #{deep_conv_forward.1} parent=0 // loop_header
    %s15 = sphi 0, %s19
    %p16 = scmp.ge.s32.totalorder %s15, 4
    %s23 = sphi 0, %s23
    %s25 = sphi 0, %s23
    %s26 = sphi 0, %s25
    %s40 = sphi 0, %s26
    %s46 = sphi 0, %s48
    %s49 = sphi 0, %s46
    %s50 = sphi 0, %s49
    %s66 = sphi 0, %s50
    %s70 = sphi 0, %s70
    %s72 = sphi 0, %s70
    %s73 = sphi 0, %s72
    %s87 = sphi 0, %s73
    %s91 = sphi 0, %s91
    %s93 = sphi 0, %s91
    %s94 = sphi 0, %s93
    %s108 = sphi 0, %s94
    %s112 = sphi 0, %s112
    %s114 = sphi 0, %s112
    %s115 = sphi 0, %s114
    %s129 = sphi 0, %s115
    %s133 = sphi 0, %s133
    %s135 = sphi 0, %s133
    %s136 = sphi 0, %s135
    %s150 = sphi 0, %s136
    %s154 = sphi 0, %s154
    %s156 = sphi 0, %s154
    %s157 = sphi 0, %s156
    %s171 = sphi 0, %s157
    %s175 = sphi 0, %s175
    %s177 = sphi 0, %s175
    %s178 = sphi 0, %s177
    %s192 = sphi 0, %s178
    %s198 = sphi 0, %s200
    %s201 = sphi 0, %s198
    %s202 = sphi 0, %s201
    %s218 = sphi 0, %s202
  $region4: #{deep_conv_forward.1} parent=0 // loop_header_branch
    %18 = sbr.rel (%p16) target = $region8
  $region5: #{deep_conv_forward.1} parent=0 // loop_body
    %s20 = ssub.s32 %s15, 1
    %s21 = ssub.s32 %s15, 2
    %s22 = sadd.s32 %s15, 1
    %s24 = sadd.s32 %s23, 1
    %p27 = scmp.eq.s32.totalorder %s15, 1
    %p28 = scmp.ne.s32.totalorder %s23, %s25
    %p29 = scmp.eq.s32.totalorder %s15, 0
    %p30 = por %p28, %p29
    %p31 = scmp.ne.s32.totalorder %s23, %s25
    %p32 = scmp.eq.s32.totalorder %s20, 1
    %p33 = por %p31, %p32
    %p34 = scmp.ne.s32.totalorder %s25, %s26
    %p35 = scmp.eq.s32.totalorder %s20, 0
    %p36 = por %p34, %p35
    %p37 = scmp.ne.s32.totalorder %s25, %s26
    %p38 = scmp.eq.s32.totalorder %s21, 1
    %p39 = por %p37, %p38
    %p41 = scmp.ne.s32.totalorder %s26, %s40
    %p42 = scmp.eq.s32.totalorder %s21, 0
    %p43 = por %p41, %p42
    %s44 = ssub.s32 %s15, %s22
    %p45 = scmp.eq.s32.totalorder %s44, 0
    %s47 = sadd.s32 %s46, 1
    %s48 = scalar_select %p45, %s46, %s47
    %p51 = pneg %p45
    %p52 = scmp.eq.s32.totalorder %s15, 1
    %p53 = por %p51, %p52
    %p54 = scmp.ne.s32.totalorder %s46, %s49
    %p55 = scmp.eq.s32.totalorder %s15, 0
    %p56 = por %p54, %p55
    %p57 = scmp.ne.s32.totalorder %s46, %s49
    %p58 = scmp.eq.s32.totalorder %s20, 1
    %p59 = por %p57, %p58
    %p60 = scmp.ne.s32.totalorder %s49, %s50
    %p61 = scmp.eq.s32.totalorder %s20, 0
    %p62 = por %p60, %p61
    %p63 = scmp.ne.s32.totalorder %s49, %s50
    %p64 = scmp.eq.s32.totalorder %s21, 1
    %p65 = por %p63, %p64
    %p67 = scmp.ne.s32.totalorder %s50, %s66
    %p68 = scmp.eq.s32.totalorder %s21, 0
    %p69 = por %p67, %p68
    %s71 = sadd.s32 %s70, 1
    %p74 = scmp.eq.s32.totalorder %s15, 1
    %p75 = scmp.ne.s32.totalorder %s70, %s72
    %p76 = scmp.eq.s32.totalorder %s15, 0
    %p77 = por %p75, %p76
    %p78 = scmp.ne.s32.totalorder %s70, %s72
    %p79 = scmp.eq.s32.totalorder %s20, 1
    %p80 = por %p78, %p79
    %p81 = scmp.ne.s32.totalorder %s72, %s73
    %p82 = scmp.eq.s32.totalorder %s20, 0
    %p83 = por %p81, %p82
    %p84 = scmp.ne.s32.totalorder %s72, %s73
    %p85 = scmp.eq.s32.totalorder %s21, 1
    %p86 = por %p84, %p85
    %p88 = scmp.ne.s32.totalorder %s73, %s87
    %p89 = scmp.eq.s32.totalorder %s21, 0
    %p90 = por %p88, %p89
    %s92 = sadd.s32 %s91, 1
    %p95 = scmp.eq.s32.totalorder %s15, 1
    %p96 = scmp.ne.s32.totalorder %s91, %s93
    %p97 = scmp.eq.s32.totalorder %s15, 0
    %p98 = por %p96, %p97
    %p99 = scmp.ne.s32.totalorder %s91, %s93
    %p100 = scmp.eq.s32.totalorder %s20, 1
    %p101 = por %p99, %p100
    %p102 = scmp.ne.s32.totalorder %s93, %s94
    %p103 = scmp.eq.s32.totalorder %s20, 0
    %p104 = por %p102, %p103
    %p105 = scmp.ne.s32.totalorder %s93, %s94
    %p106 = scmp.eq.s32.totalorder %s21, 1
    %p107 = por %p105, %p106
    %p109 = scmp.ne.s32.totalorder %s94, %s108
    %p110 = scmp.eq.s32.totalorder %s21, 0
    %p111 = por %p109, %p110
    %s113 = sadd.s32 %s112, 1
    %p116 = scmp.eq.s32.totalorder %s15, 1
    %p117 = scmp.ne.s32.totalorder %s112, %s114
    %p118 = scmp.eq.s32.totalorder %s15, 0
    %p119 = por %p117, %p118
    %p120 = scmp.ne.s32.totalorder %s112, %s114
    %p121 = scmp.eq.s32.totalorder %s20, 1
    %p122 = por %p120, %p121
    %p123 = scmp.ne.s32.totalorder %s114, %s115
    %p124 = scmp.eq.s32.totalorder %s20, 0
    %p125 = por %p123, %p124
    %p126 = scmp.ne.s32.totalorder %s114, %s115
    %p127 = scmp.eq.s32.totalorder %s21, 1
    %p128 = por %p126, %p127
    %p130 = scmp.ne.s32.totalorder %s115, %s129
    %p131 = scmp.eq.s32.totalorder %s21, 0
    %p132 = por %p130, %p131
    %s134 = sadd.s32 %s133, 1
    %p137 = scmp.eq.s32.totalorder %s15, 1
    %p138 = scmp.ne.s32.totalorder %s133, %s135
    %p139 = scmp.eq.s32.totalorder %s15, 0
    %p140 = por %p138, %p139
    %p141 = scmp.ne.s32.totalorder %s133, %s135
    %p142 = scmp.eq.s32.totalorder %s20, 1
    %p143 = por %p141, %p142
    %p144 = scmp.ne.s32.totalorder %s135, %s136
    %p145 = scmp.eq.s32.totalorder %s20, 0
    %p146 = por %p144, %p145
    %p147 = scmp.ne.s32.totalorder %s135, %s136
    %p148 = scmp.eq.s32.totalorder %s21, 1
    %p149 = por %p147, %p148
    %p151 = scmp.ne.s32.totalorder %s136, %s150
    %p152 = scmp.eq.s32.totalorder %s21, 0
    %p153 = por %p151, %p152
    %s155 = sadd.s32 %s154, 1
    %p158 = scmp.eq.s32.totalorder %s15, 1
    %p159 = scmp.ne.s32.totalorder %s154, %s156
    %p160 = scmp.eq.s32.totalorder %s15, 0
    %p161 = por %p159, %p160
    %p162 = scmp.ne.s32.totalorder %s154, %s156
    %p163 = scmp.eq.s32.totalorder %s20, 1
    %p164 = por %p162, %p163
    %p165 = scmp.ne.s32.totalorder %s156, %s157
    %p166 = scmp.eq.s32.totalorder %s20, 0
    %p167 = por %p165, %p166
    %p168 = scmp.ne.s32.totalorder %s156, %s157
    %p169 = scmp.eq.s32.totalorder %s21, 1
    %p170 = por %p168, %p169
    %p172 = scmp.ne.s32.totalorder %s157, %s171
    %p173 = scmp.eq.s32.totalorder %s21, 0
    %p174 = por %p172, %p173
    %s176 = sadd.s32 %s175, 1
    %p179 = scmp.eq.s32.totalorder %s15, 1
    %p180 = scmp.ne.s32.totalorder %s175, %s177
    %p181 = scmp.eq.s32.totalorder %s15, 0
    %p182 = por %p180, %p181
    %p183 = scmp.ne.s32.totalorder %s175, %s177
    %p184 = scmp.eq.s32.totalorder %s20, 1
    %p185 = por %p183, %p184
    %p186 = scmp.ne.s32.totalorder %s177, %s178
    %p187 = scmp.eq.s32.totalorder %s20, 0
    %p188 = por %p186, %p187
    %p189 = scmp.ne.s32.totalorder %s177, %s178
    %p190 = scmp.eq.s32.totalorder %s21, 1
    %p191 = por %p189, %p190
    %p193 = scmp.ne.s32.totalorder %s178, %s192
    %p194 = scmp.eq.s32.totalorder %s21, 0
    %p195 = por %p193, %p194
    %s196 = ssub.s32 %s15, %s22
    %p197 = scmp.eq.s32.totalorder %s196, 0
    %s199 = sadd.s32 %s198, 1
    %s200 = scalar_select %p197, %s198, %s199
    %p203 = pneg %p197
    %p204 = scmp.eq.s32.totalorder %s15, 1
    %p205 = por %p203, %p204
    %p206 = scmp.ne.s32.totalorder %s198, %s201
    %p207 = scmp.eq.s32.totalorder %s15, 0
    %p208 = por %p206, %p207
    %p209 = scmp.ne.s32.totalorder %s198, %s201
    %p210 = scmp.eq.s32.totalorder %s20, 1
    %p211 = por %p209, %p210
    %p212 = scmp.ne.s32.totalorder %s201, %s202
    %p213 = scmp.eq.s32.totalorder %s20, 0
    %p214 = por %p212, %p213
    %p215 = scmp.ne.s32.totalorder %s201, %s202
    %p216 = scmp.eq.s32.totalorder %s21, 1
    %p217 = por %p215, %p216
    %p219 = scmp.ne.s32.totalorder %s202, %s218
    %p220 = scmp.eq.s32.totalorder %s21, 0
    %p221 = por %p219, %p220
    %p222 = scmp.le.s32.totalorder 1, %s15
    %p223 = scmp.lt.s32.totalorder %s15, 3
    %p224 = pnand %p222, %p223
    %p225 = pneg %p224
    // Predicated region
    $region9: #{deep_conv_forward.1} parent=5 // pred_check
      _
    $region10: #{deep_conv_forward.1} parent=5 // pred_check_branch
      %227 = sbr.rel (%p224) target = $region12
    $region11: #{deep_conv_forward.1} parent=5 // pred_region
      %s228 = ssub.s32 %s15, 1
      // Predicated region
      $region13: #{deep_conv_forward.1} parent=11 // pred_check
        %p229 = pneg %p36
      $region14: #{deep_conv_forward.1} parent=11 // pred_check_branch
        %231 = sbr.rel (%p229) target = $region16
      $region15: #{deep_conv_forward.1} parent=11 // pred_region
        _
      $region16: #{deep_conv_forward.1} parent=11 // pred_fallthru
        _
      // Predicated region
      $region17: #{deep_conv_forward.1} parent=11 // pred_check
        %p232 = pneg %p83
      $region18: #{deep_conv_forward.1} parent=11 // pred_check_branch
        %234 = sbr.rel (%p232) target = $region20
      $region19: #{deep_conv_forward.1} parent=11 // pred_region
        _
      $region20: #{deep_conv_forward.1} parent=11 // pred_fallthru
        _
      // Predicated region
      $region21: #{deep_conv_forward.1} parent=11 // pred_check
        %p235 = pneg %p104
      $region22: #{deep_conv_forward.1} parent=11 // pred_check_branch
        %237 = sbr.rel (%p235) target = $region24
      $region23: #{deep_conv_forward.1} parent=11 // pred_region
        _
      $region24: #{deep_conv_forward.1} parent=11 // pred_fallthru
        _
      // Predicated region
      $region25: #{deep_conv_forward.1} parent=11 // pred_check
        %p238 = pneg %p125
      $region26: #{deep_conv_forward.1} parent=11 // pred_check_branch
        %240 = sbr.rel (%p238) target = $region28
      $region27: #{deep_conv_forward.1} parent=11 // pred_region
        _
      $region28: #{deep_conv_forward.1} parent=11 // pred_fallthru
        _
      // Predicated region
      $region29: #{deep_conv_forward.1} parent=11 // pred_check
        %p241 = pneg %p146
      $region30: #{deep_conv_forward.1} parent=11 // pred_check_branch
        %243 = sbr.rel (%p241) target = $region32
      $region31: #{deep_conv_forward.1} parent=11 // pred_region
        _
      $region32: #{deep_conv_forward.1} parent=11 // pred_fallthru
        _
      // Predicated region
      $region33: #{deep_conv_forward.1} parent=11 // pred_check
        %p244 = pneg %p167
      $region34: #{deep_conv_forward.1} parent=11 // pred_check_branch
        %246 = sbr.rel (%p244) target = $region36
      $region35: #{deep_conv_forward.1} parent=11 // pred_region
        _
      $region36: #{deep_conv_forward.1} parent=11 // pred_fallthru
        _
      // Predicated region
      $region37: #{deep_conv_forward.1} parent=11 // pred_check
        %p247 = pneg %p188
      $region38: #{deep_conv_forward.1} parent=11 // pred_check_branch
        %249 = sbr.rel (%p247) target = $region40
      $region39: #{deep_conv_forward.1} parent=11 // pred_region
        _
      $region40: #{deep_conv_forward.1} parent=11 // pred_fallthru
        _
    $region12: #{deep_conv_forward.1} parent=5 // pred_fallthru
      _
    %p250 = scmp.lt.s32.totalorder %s15, 2
    // Predicated region
    $region41: #{deep_conv_forward.1} parent=5 // pred_check
      %p251 = pneg %p250
    $region42: #{deep_conv_forward.1} parent=5 // pred_check_branch
      %253 = sbr.rel (%p251) target = $region44
    $region43: #{deep_conv_forward.1} parent=5 // pred_region
      // Predicated region
      $region45: #{deep_conv_forward.1} parent=43 // pred_check
        %p254 = pneg %p56
      $region46: #{deep_conv_forward.1} parent=43 // pred_check_branch
        %256 = sbr.rel (%p254) target = $region48
      $region47: #{deep_conv_forward.1} parent=43 // pred_region
        %p257 = scmp.lt.s32.totalorder %s15, 1
        %s258 = scalar_select %p257, %s15, 1
        %s259 = smul.addr %s258, 18
        %s260 = smul.addr %s259, 2
        %s261 = scalar_lea.vmem %s1, %s260
      $region48: #{deep_conv_forward.1} parent=43 // pred_fallthru
        _
    $region44: #{deep_conv_forward.1} parent=5 // pred_fallthru
      _
    %p262 = scmp.le.s32.totalorder 1, %s15
    %p263 = scmp.lt.s32.totalorder %s15, 3
    %p264 = pnand %p262, %p263
    %p265 = pneg %p264
    // Predicated region
    $region49: #{deep_conv_forward.1} parent=5 // pred_check
      _
    $region50: #{deep_conv_forward.1} parent=5 // pred_check_branch
      %267 = sbr.rel (%p264) target = $region52
    $region51: #{deep_conv_forward.1} parent=5 // pred_region
      %s268 = ssub.s32 %s15, 1
      %p269 = pneg %p36
      %p270 = pneg %p33
      %p271 = scmp.lt.s32.totalorder %s20, 1
      %s272 = scalar_select %p271, %s20, 1
      %s273 = smul.addr %s272, 18
      %s274 = smul.addr %s273, 2
      %s275 = scalar_lea.vmem %s1, %s274
      %p276 = pneg %p62
      %p277 = pneg %p59
      %p278 = pneg %p83
      %p279 = pneg %p80
      %p280 = pneg %p104
      %p281 = pneg %p101
      %p282 = pneg %p125
      %p283 = pneg %p122
      %p284 = pneg %p146
      %p285 = pneg %p143
      %p286 = pneg %p167
      %p287 = pneg %p164
      %p288 = pneg %p188
      %p289 = pneg %p185
      %p290 = pneg %p214
      %p291 = pneg %p211
      %p292 = scmp.lt.s32.totalorder %s20, 1
      %s293 = scalar_select %p292, %s20, 1
      %s294 = smul.addr %s293, 18
      %s295 = scalar_lea.vmem %s8, %s294
      %p296 = scmp.lt.s32.totalorder %s20, 1
      %s297 = scalar_select %p296, %s20, 1
      %s298 = smul.addr %s297, 18
      %s299 = smul.addr %s298, 2
      %s300 = scalar_lea.vmem %s1, %s299
      %p301 = scmp.lt.s32.totalorder %s20, 1
      %s302 = scalar_select %p301, %s20, 1
      %s303 = smul.addr %s302, 18
      %s304 = scalar_lea.vmem %s8, %s303
      %v306 = vld [vmem:[%s0] ss:$4 sm:$0xff]
      %s307 = scalar_lea.vmem %s0, 32
      %v308 = vld [vmem:[%s307] ss:$4 sm:$0xff]
      %s309 = scalar_lea.vmem %s0, 64
      %v310 = vld [vmem:[%s309] ss:$4 sm:$0x3]
      %s311 = scalar_lea.vmem %s0, 1
      %v312 = vld [vmem:[%s311] ss:$4 sm:$0xff]
      %s313 = scalar_lea.vmem %s0, 33
      %v314 = vld [vmem:[%s313] ss:$4 sm:$0xff]
      %s315 = scalar_lea.vmem %s0, 65
      %v316 = vld [vmem:[%s315] ss:$4 sm:$0x3]
      %s317 = scalar_lea.vmem %s0, 2
      %v318 = vld [vmem:[%s317] ss:$4 sm:$0xff]
      %s319 = scalar_lea.vmem %s0, 34
      %v320 = vld [vmem:[%s319] ss:$4 sm:$0xff]
      %s321 = scalar_lea.vmem %s0, 66
      %v322 = vld [vmem:[%s321] ss:$4 sm:$0x3]
      %v323 = vld [vmem:[%s300] sm:$0xff]
      %v324 = vld [vmem:[%s300 + $0x8] sm:$0xff]
      %v325 = vld [vmem:[%s300 + $0x10] sm:$0xff]
      %v326 = vld [vmem:[%s300 + $0x18] sm:$0xff]
      %v327 = vld [vmem:[%s300 + $0x20] sm:$0xf]
      %v328 = vunpack.c.l.bf16 %v323
      %v329 = vunpack.c.h.bf16 %v323
      %v330 = vunpack.c.l.bf16 %v324
      %v331 = vunpack.c.h.bf16 %v324
      %v332 = vunpack.c.l.bf16 %v325
      %v333 = vunpack.c.h.bf16 %v325
      %v334 = vunpack.c.l.bf16 %v326
      %v335 = vunpack.c.h.bf16 %v326
      %v336 = vunpack.c.l.bf16 %v327
      %v337 = vld [vmem:[%s2] sm:$0xff]
      %v338 = vld [vmem:[%s2 + $0x8] sm:$0xff]
      %v339 = vld [vmem:[%s2 + $0x10] sm:$0xff]
      %v340 = vld [vmem:[%s2 + $0x18] sm:$0xff]
      %v341 = vld [vmem:[%s2 + $0x20] sm:$0xff]
      %v342 = vld [vmem:[%s2 + $0x28] sm:$0xff]
      %v343 = vld [vmem:[%s2 + $0x30] sm:$0xff]
      %v344 = vld [vmem:[%s2 + $0x38] sm:$0xff]
      %v345 = vld [vmem:[%s2 + $0x40] sm:$0xff]
      %v346 = vld [vmem:[%s2 + $0x48] sm:$0xff]
      %v347 = vld [vmem:[%s2 + $0x50] sm:$0xff]
      %v348 = vld [vmem:[%s2 + $0x58] sm:$0xff]
      %350 = vset.pattern.permute.xlu0 0
      %351 = vperm.xlu0 %350, %v337
      %v352 = vpop.permute.xlu0 %351
      %355 = vset.pattern.permute.xlu0 0
      %356 = vperm.xlu0 %355, %v338
      %v357 = vpop.permute.xlu0 %356
      %360 = vset.pattern.permute.xlu0 0
      %361 = vperm.xlu0 %360, %v339
      %v362 = vpop.permute.xlu0 %361
      %365 = vset.pattern.permute.xlu0 0
      %366 = vperm.xlu0 %365, %v340
      %v367 = vpop.permute.xlu0 %366
      %370 = vset.pattern.permute.xlu0 0
      %371 = vperm.xlu0 %370, %v341
      %v372 = vpop.permute.xlu0 %371
      %375 = vset.pattern.permute.xlu0 0
      %376 = vperm.xlu0 %375, %v342
      %v377 = vpop.permute.xlu0 %376
      %380 = vset.pattern.permute.xlu0 0
      %381 = vperm.xlu0 %380, %v343
      %v382 = vpop.permute.xlu0 %381
      %385 = vset.pattern.permute.xlu0 0
      %386 = vperm.xlu0 %385, %v344
      %v387 = vpop.permute.xlu0 %386
      %390 = vset.pattern.permute.xlu0 0
      %391 = vperm.xlu0 %390, %v345
      %v392 = vpop.permute.xlu0 %391
      %395 = vset.pattern.permute.xlu0 0
      %396 = vperm.xlu0 %395, %v346
      %v397 = vpop.permute.xlu0 %396
      %400 = vset.pattern.permute.xlu0 0
      %401 = vperm.xlu0 %400, %v347
      %v402 = vpop.permute.xlu0 %401
      %405 = vset.pattern.permute.xlu0 0
      %406 = vperm.xlu0 %405, %v348
      %v407 = vpop.permute.xlu0 %406
      %v418 = vperm.slane %v328, 0
      %v419 = vperm.slane %v328, 4
      %v420 = vperm.slane %v329, 0
      %v421 = vperm.slane %v329, 4
      %v422 = vperm.slane %v330, 0
      %v423 = vperm.slane %v330, 4
      %v424 = vperm.slane %v331, 0
      %v425 = vperm.slane %v331, 4
      %v426 = vperm.slane %v332, 0
      %v427 = vperm.slane %v332, 4
      %v428 = vperm.slane %v333, 0
      %v429 = vperm.slane %v333, 4
      %v430 = vperm.slane %v334, 0
      %v431 = vperm.slane %v334, 4
      %v432 = vperm.slane %v335, 0
      %v433 = vperm.slane %v335, 4
      %v434 = vperm.slane %v336, 0
      %v435 = vperm.slane %v336, 4
      %v454 = vperm.slane %v418, 0
      %v455 = vperm.slane %v419, 0
      %v456 = vperm.slane %v420, 0
      %v457 = vperm.slane %v421, 0
      %v458 = vperm.slane %v422, 0
      %v459 = vperm.slane %v423, 0
      %v460 = vperm.slane %v424, 0
      %v461 = vperm.slane %v425, 0
      %v462 = vperm.slane %v426, 0
      %v463 = vperm.slane %v427, 0
      %v464 = vperm.slane %v428, 0
      %v465 = vperm.slane %v429, 0
      %v466 = vperm.slane %v430, 0
      %v467 = vperm.slane %v431, 0
      %v468 = vperm.slane %v432, 0
      %v469 = vperm.slane %v433, 0
      %v470 = vperm.slane %v434, 0
      %v471 = vperm.slane %v435, 0
      %v472 = vmul.f32 %v352, %v454
      %v473 = vmul.f32 %v352, %v455
      %v474 = vmul.f32 %v352, %v456
      %v475 = vmul.f32 %v352, %v457
      %v476 = vmul.f32 %v352, %v458
      %v477 = vmul.f32 %v352, %v459
      %v478 = vmul.f32 %v352, %v460
      %v479 = vmul.f32 %v352, %v461
      %v480 = vmul.f32 %v352, %v462
      %v481 = vmul.f32 %v352, %v463
      %v482 = vmul.f32 %v352, %v464
      %v483 = vmul.f32 %v352, %v465
      %v484 = vmul.f32 %v352, %v466
      %v485 = vmul.f32 %v352, %v467
      %v486 = vmul.f32 %v352, %v468
      %v487 = vmul.f32 %v352, %v469
      %v488 = vmul.f32 %v352, %v470
      %v489 = vmul.f32 %v352, %v471
      %v490 = vmul.f32 %v357, %v454
      %v491 = vmul.f32 %v357, %v455
      %v492 = vmul.f32 %v357, %v456
      %v493 = vmul.f32 %v357, %v457
      %v494 = vmul.f32 %v357, %v458
      %v495 = vmul.f32 %v357, %v459
      %v496 = vmul.f32 %v357, %v460
      %v497 = vmul.f32 %v357, %v461
      %v498 = vmul.f32 %v357, %v462
      %v499 = vmul.f32 %v357, %v463
      %v500 = vmul.f32 %v357, %v464
      %v501 = vmul.f32 %v357, %v465
      %v502 = vmul.f32 %v357, %v466
      %v503 = vmul.f32 %v357, %v467
      %v504 = vmul.f32 %v357, %v468
      %v505 = vmul.f32 %v357, %v469
      %v506 = vmul.f32 %v357, %v470
      %v507 = vmul.f32 %v357, %v471
      %v508 = vmul.f32 %v362, %v454
      %v509 = vmul.f32 %v362, %v455
      %v510 = vmul.f32 %v362, %v456
      %v511 = vmul.f32 %v362, %v457
      %v512 = vmul.f32 %v362, %v458
      %v513 = vmul.f32 %v362, %v459
      %v514 = vmul.f32 %v362, %v460
      %v515 = vmul.f32 %v362, %v461
      %v516 = vmul.f32 %v362, %v462
      %v517 = vmul.f32 %v362, %v463
      %v518 = vmul.f32 %v362, %v464
      %v519 = vmul.f32 %v362, %v465
      %v520 = vmul.f32 %v362, %v466
      %v521 = vmul.f32 %v362, %v467
      %v522 = vmul.f32 %v362, %v468
      %v523 = vmul.f32 %v362, %v469
      %v524 = vmul.f32 %v362, %v470
      %v525 = vmul.f32 %v362, %v471
      %v526 = vmul.f32 %v367, %v454
      %v527 = vmul.f32 %v367, %v455
      %v528 = vmul.f32 %v367, %v456
      %v529 = vmul.f32 %v367, %v457
      %v530 = vmul.f32 %v367, %v458
      %v531 = vmul.f32 %v367, %v459
      %v532 = vmul.f32 %v367, %v460
      %v533 = vmul.f32 %v367, %v461
      %v534 = vmul.f32 %v367, %v462
      %v535 = vmul.f32 %v367, %v463
      %v536 = vmul.f32 %v367, %v464
      %v537 = vmul.f32 %v367, %v465
      %v538 = vmul.f32 %v367, %v466
      %v539 = vmul.f32 %v367, %v467
      %v540 = vmul.f32 %v367, %v468
      %v541 = vmul.f32 %v367, %v469
      %v542 = vmul.f32 %v367, %v470
      %v543 = vmul.f32 %v367, %v471
      %v544 = vmul.f32 %v372, %v454
      %v545 = vmul.f32 %v372, %v455
      %v546 = vmul.f32 %v372, %v456
      %v547 = vmul.f32 %v372, %v457
      %v548 = vmul.f32 %v372, %v458
      %v549 = vmul.f32 %v372, %v459
      %v550 = vmul.f32 %v372, %v460
      %v551 = vmul.f32 %v372, %v461
      %v552 = vmul.f32 %v372, %v462
      %v553 = vmul.f32 %v372, %v463
      %v554 = vmul.f32 %v372, %v464
      %v555 = vmul.f32 %v372, %v465
      %v556 = vmul.f32 %v372, %v466
      %v557 = vmul.f32 %v372, %v467
      %v558 = vmul.f32 %v372, %v468
      %v559 = vmul.f32 %v372, %v469
      %v560 = vmul.f32 %v372, %v470
      %v561 = vmul.f32 %v372, %v471
      %v562 = vmul.f32 %v377, %v454
      %v563 = vmul.f32 %v377, %v455
      %v564 = vmul.f32 %v377, %v456
      %v565 = vmul.f32 %v377, %v457
      %v566 = vmul.f32 %v377, %v458
      %v567 = vmul.f32 %v377, %v459
      %v568 = vmul.f32 %v377, %v460
      %v569 = vmul.f32 %v377, %v461
      %v570 = vmul.f32 %v377, %v462
      %v571 = vmul.f32 %v377, %v463
      %v572 = vmul.f32 %v377, %v464
      %v573 = vmul.f32 %v377, %v465
      %v574 = vmul.f32 %v377, %v466
      %v575 = vmul.f32 %v377, %v467
      %v576 = vmul.f32 %v377, %v468
      %v577 = vmul.f32 %v377, %v469
      %v578 = vmul.f32 %v377, %v470
      %v579 = vmul.f32 %v377, %v471
      %v580 = vmul.f32 %v382, %v454
      %v581 = vmul.f32 %v382, %v455
      %v582 = vmul.f32 %v382, %v456
      %v583 = vmul.f32 %v382, %v457
      %v584 = vmul.f32 %v382, %v458
      %v585 = vmul.f32 %v382, %v459
      %v586 = vmul.f32 %v382, %v460
      %v587 = vmul.f32 %v382, %v461
      %v588 = vmul.f32 %v382, %v462
      %v589 = vmul.f32 %v382, %v463
      %v590 = vmul.f32 %v382, %v464
      %v591 = vmul.f32 %v382, %v465
      %v592 = vmul.f32 %v382, %v466
      %v593 = vmul.f32 %v382, %v467
      %v594 = vmul.f32 %v382, %v468
      %v595 = vmul.f32 %v382, %v469
      %v596 = vmul.f32 %v382, %v470
      %v597 = vmul.f32 %v382, %v471
      %v598 = vmul.f32 %v387, %v454
      %v599 = vmul.f32 %v387, %v455
      %v600 = vmul.f32 %v387, %v456
      %v601 = vmul.f32 %v387, %v457
      %v602 = vmul.f32 %v387, %v458
      %v603 = vmul.f32 %v387, %v459
      %v604 = vmul.f32 %v387, %v460
      %v605 = vmul.f32 %v387, %v461
      %v606 = vmul.f32 %v387, %v462
      %v607 = vmul.f32 %v387, %v463
      %v608 = vmul.f32 %v387, %v464
      %v609 = vmul.f32 %v387, %v465
      %v610 = vmul.f32 %v387, %v466
      %v611 = vmul.f32 %v387, %v467
      %v612 = vmul.f32 %v387, %v468
      %v613 = vmul.f32 %v387, %v469
      %v614 = vmul.f32 %v387, %v470
      %v615 = vmul.f32 %v387, %v471
      %v616 = vmul.f32 %v392, %v454
      %v617 = vmul.f32 %v392, %v455
      %v618 = vmul.f32 %v392, %v456
      %v619 = vmul.f32 %v392, %v457
      %v620 = vmul.f32 %v392, %v458
      %v621 = vmul.f32 %v392, %v459
      %v622 = vmul.f32 %v392, %v460
      %v623 = vmul.f32 %v392, %v461
      %v624 = vmul.f32 %v392, %v462
      %v625 = vmul.f32 %v392, %v463
      %v626 = vmul.f32 %v392, %v464
      %v627 = vmul.f32 %v392, %v465
      %v628 = vmul.f32 %v392, %v466
      %v629 = vmul.f32 %v392, %v467
      %v630 = vmul.f32 %v392, %v468
      %v631 = vmul.f32 %v392, %v469
      %v632 = vmul.f32 %v392, %v470
      %v633 = vmul.f32 %v392, %v471
      %v634 = vmul.f32 %v397, %v454
      %v635 = vmul.f32 %v397, %v455
      %v636 = vmul.f32 %v397, %v456
      %v637 = vmul.f32 %v397, %v457
      %v638 = vmul.f32 %v397, %v458
      %v639 = vmul.f32 %v397, %v459
      %v640 = vmul.f32 %v397, %v460
      %v641 = vmul.f32 %v397, %v461
      %v642 = vmul.f32 %v397, %v462
      %v643 = vmul.f32 %v397, %v463
      %v644 = vmul.f32 %v397, %v464
      %v645 = vmul.f32 %v397, %v465
      %v646 = vmul.f32 %v397, %v466
      %v647 = vmul.f32 %v397, %v467
      %v648 = vmul.f32 %v397, %v468
      %v649 = vmul.f32 %v397, %v469
      %v650 = vmul.f32 %v397, %v470
      %v651 = vmul.f32 %v397, %v471
      %v652 = vmul.f32 %v402, %v454
      %v653 = vmul.f32 %v402, %v455
      %v654 = vmul.f32 %v402, %v456
      %v655 = vmul.f32 %v402, %v457
      %v656 = vmul.f32 %v402, %v458
      %v657 = vmul.f32 %v402, %v459
      %v658 = vmul.f32 %v402, %v460
      %v659 = vmul.f32 %v402, %v461
      %v660 = vmul.f32 %v402, %v462
      %v661 = vmul.f32 %v402, %v463
      %v662 = vmul.f32 %v402, %v464
      %v663 = vmul.f32 %v402, %v465
      %v664 = vmul.f32 %v402, %v466
      %v665 = vmul.f32 %v402, %v467
      %v666 = vmul.f32 %v402, %v468
      %v667 = vmul.f32 %v402, %v469
      %v668 = vmul.f32 %v402, %v470
      %v669 = vmul.f32 %v402, %v471
      %v670 = vmul.f32 %v407, %v454
      %v671 = vmul.f32 %v407, %v455
      %v672 = vmul.f32 %v407, %v456
      %v673 = vmul.f32 %v407, %v457
      %v674 = vmul.f32 %v407, %v458
      %v675 = vmul.f32 %v407, %v459
      %v676 = vmul.f32 %v407, %v460
      %v677 = vmul.f32 %v407, %v461
      %v678 = vmul.f32 %v407, %v462
      %v679 = vmul.f32 %v407, %v463
      %v680 = vmul.f32 %v407, %v464
      %v681 = vmul.f32 %v407, %v465
      %v682 = vmul.f32 %v407, %v466
      %v683 = vmul.f32 %v407, %v467
      %v684 = vmul.f32 %v407, %v468
      %v685 = vmul.f32 %v407, %v469
      %v686 = vmul.f32 %v407, %v470
      %v687 = vmul.f32 %v407, %v471
      %688 = vset.pattern.permute.xlu0 1
      %689 = vperm.xlu0 %688, %v337
      %v690 = vpop.permute.xlu0 %689
      %692 = vset.pattern.permute.xlu0 1
      %693 = vperm.xlu0 %692, %v338
      %v694 = vpop.permute.xlu0 %693
      %696 = vset.pattern.permute.xlu0 1
      %697 = vperm.xlu0 %696, %v339
      %v698 = vpop.permute.xlu0 %697
      %700 = vset.pattern.permute.xlu0 1
      %701 = vperm.xlu0 %700, %v340
      %v702 = vpop.permute.xlu0 %701
      %704 = vset.pattern.permute.xlu0 1
      %705 = vperm.xlu0 %704, %v341
      %v706 = vpop.permute.xlu0 %705
      %708 = vset.pattern.permute.xlu0 1
      %709 = vperm.xlu0 %708, %v342
      %v710 = vpop.permute.xlu0 %709
      %712 = vset.pattern.permute.xlu0 1
      %713 = vperm.xlu0 %712, %v343
      %v714 = vpop.permute.xlu0 %713
      %716 = vset.pattern.permute.xlu0 1
      %717 = vperm.xlu0 %716, %v344
      %v718 = vpop.permute.xlu0 %717
      %720 = vset.pattern.permute.xlu0 1
      %721 = vperm.xlu0 %720, %v345
      %v722 = vpop.permute.xlu0 %721
      %724 = vset.pattern.permute.xlu0 1
      %725 = vperm.xlu0 %724, %v346
      %v726 = vpop.permute.xlu0 %725
      %728 = vset.pattern.permute.xlu0 1
      %729 = vperm.xlu0 %728, %v347
      %v730 = vpop.permute.xlu0 %729
      %732 = vset.pattern.permute.xlu0 1
      %733 = vperm.xlu0 %732, %v348
      %v734 = vpop.permute.xlu0 %733
      %v736 = vperm.slane %v328, 1
      %v737 = vperm.slane %v328, 5
      %v738 = vperm.slane %v329, 1
      %v739 = vperm.slane %v329, 5
      %v740 = vperm.slane %v330, 1
      %v741 = vperm.slane %v330, 5
      %v742 = vperm.slane %v331, 1
      %v743 = vperm.slane %v331, 5
      %v744 = vperm.slane %v332, 1
      %v745 = vperm.slane %v332, 5
      %v746 = vperm.slane %v333, 1
      %v747 = vperm.slane %v333, 5
      %v748 = vperm.slane %v334, 1
      %v749 = vperm.slane %v334, 5
      %v750 = vperm.slane %v335, 1
      %v751 = vperm.slane %v335, 5
      %v752 = vperm.slane %v336, 1
      %v753 = vperm.slane %v336, 5
      %v772 = vperm.slane %v736, 1
      %v773 = vperm.slane %v737, 1
      %v774 = vperm.slane %v738, 1
      %v775 = vperm.slane %v739, 1
      %v776 = vperm.slane %v740, 1
      %v777 = vperm.slane %v741, 1
      %v778 = vperm.slane %v742, 1
      %v779 = vperm.slane %v743, 1
      %v780 = vperm.slane %v744, 1
      %v781 = vperm.slane %v745, 1
      %v782 = vperm.slane %v746, 1
      %v783 = vperm.slane %v747, 1
      %v784 = vperm.slane %v748, 1
      %v785 = vperm.slane %v749, 1
      %v786 = vperm.slane %v750, 1
      %v787 = vperm.slane %v751, 1
      %v788 = vperm.slane %v752, 1
      %v789 = vperm.slane %v753, 1
      %v790 = vmul.f32 %v690, %v772
      %v791 = vmul.f32 %v690, %v773
      %v792 = vmul.f32 %v690, %v774
      %v793 = vmul.f32 %v690, %v775
      %v794 = vmul.f32 %v690, %v776
      %v795 = vmul.f32 %v690, %v777
      %v796 = vmul.f32 %v690, %v778
      %v797 = vmul.f32 %v690, %v779
      %v798 = vmul.f32 %v690, %v780
      %v799 = vmul.f32 %v690, %v781
      %v800 = vmul.f32 %v690, %v782
      %v801 = vmul.f32 %v690, %v783
      %v802 = vmul.f32 %v690, %v784
      %v803 = vmul.f32 %v690, %v785
      %v804 = vmul.f32 %v690, %v786
      %v805 = vmul.f32 %v690, %v787
      %v806 = vmul.f32 %v690, %v788
      %v807 = vmul.f32 %v690, %v789
      %v808 = vmul.f32 %v694, %v772
      %v809 = vmul.f32 %v694, %v773
      %v810 = vmul.f32 %v694, %v774
      %v811 = vmul.f32 %v694, %v775
      %v812 = vmul.f32 %v694, %v776
      %v813 = vmul.f32 %v694, %v777
      %v814 = vmul.f32 %v694, %v778
      %v815 = vmul.f32 %v694, %v779
      %v816 = vmul.f32 %v694, %v780
      %v817 = vmul.f32 %v694, %v781
      %v818 = vmul.f32 %v694, %v782
      %v819 = vmul.f32 %v694, %v783
      %v820 = vmul.f32 %v694, %v784
      %v821 = vmul.f32 %v694, %v785
      %v822 = vmul.f32 %v694, %v786
      %v823 = vmul.f32 %v694, %v787
      %v824 = vmul.f32 %v694, %v788
      %v825 = vmul.f32 %v694, %v789
      %v826 = vmul.f32 %v698, %v772
      %v827 = vmul.f32 %v698, %v773
      %v828 = vmul.f32 %v698, %v774
      %v829 = vmul.f32 %v698, %v775
      %v830 = vmul.f32 %v698, %v776
      %v831 = vmul.f32 %v698, %v777
      %v832 = vmul.f32 %v698, %v778
      %v833 = vmul.f32 %v698, %v779
      %v834 = vmul.f32 %v698, %v780
      %v835 = vmul.f32 %v698, %v781
      %v836 = vmul.f32 %v698, %v782
      %v837 = vmul.f32 %v698, %v783
      %v838 = vmul.f32 %v698, %v784
      %v839 = vmul.f32 %v698, %v785
      %v840 = vmul.f32 %v698, %v786
      %v841 = vmul.f32 %v698, %v787
      %v842 = vmul.f32 %v698, %v788
      %v843 = vmul.f32 %v698, %v789
      %v844 = vmul.f32 %v702, %v772
      %v845 = vmul.f32 %v702, %v773
      %v846 = vmul.f32 %v702, %v774
      %v847 = vmul.f32 %v702, %v775
      %v848 = vmul.f32 %v702, %v776
      %v849 = vmul.f32 %v702, %v777
      %v850 = vmul.f32 %v702, %v778
      %v851 = vmul.f32 %v702, %v779
      %v852 = vmul.f32 %v702, %v780
      %v853 = vmul.f32 %v702, %v781
      %v854 = vmul.f32 %v702, %v782
      %v855 = vmul.f32 %v702, %v783
      %v856 = vmul.f32 %v702, %v784
      %v857 = vmul.f32 %v702, %v785
      %v858 = vmul.f32 %v702, %v786
      %v859 = vmul.f32 %v702, %v787
      %v860 = vmul.f32 %v702, %v788
      %v861 = vmul.f32 %v702, %v789
      %v862 = vmul.f32 %v706, %v772
      %v863 = vmul.f32 %v706, %v773
      %v864 = vmul.f32 %v706, %v774
      %v865 = vmul.f32 %v706, %v775
      %v866 = vmul.f32 %v706, %v776
      %v867 = vmul.f32 %v706, %v777
      %v868 = vmul.f32 %v706, %v778
      %v869 = vmul.f32 %v706, %v779
      %v870 = vmul.f32 %v706, %v780
      %v871 = vmul.f32 %v706, %v781
      %v872 = vmul.f32 %v706, %v782
      %v873 = vmul.f32 %v706, %v783
      %v874 = vmul.f32 %v706, %v784
      %v875 = vmul.f32 %v706, %v785
      %v876 = vmul.f32 %v706, %v786
      %v877 = vmul.f32 %v706, %v787
      %v878 = vmul.f32 %v706, %v788
      %v879 = vmul.f32 %v706, %v789
      %v880 = vmul.f32 %v710, %v772
      %v881 = vmul.f32 %v710, %v773
      %v882 = vmul.f32 %v710, %v774
      %v883 = vmul.f32 %v710, %v775
      %v884 = vmul.f32 %v710, %v776
      %v885 = vmul.f32 %v710, %v777
      %v886 = vmul.f32 %v710, %v778
      %v887 = vmul.f32 %v710, %v779
      %v888 = vmul.f32 %v710, %v780
      %v889 = vmul.f32 %v710, %v781
      %v890 = vmul.f32 %v710, %v782
      %v891 = vmul.f32 %v710, %v783
      %v892 = vmul.f32 %v710, %v784
      %v893 = vmul.f32 %v710, %v785
      %v894 = vmul.f32 %v710, %v786
      %v895 = vmul.f32 %v710, %v787
      %v896 = vmul.f32 %v710, %v788
      %v897 = vmul.f32 %v710, %v789
      %v898 = vmul.f32 %v714, %v772
      %v899 = vmul.f32 %v714, %v773
      %v900 = vmul.f32 %v714, %v774
      %v901 = vmul.f32 %v714, %v775
      %v902 = vmul.f32 %v714, %v776
      %v903 = vmul.f32 %v714, %v777
      %v904 = vmul.f32 %v714, %v778
      %v905 = vmul.f32 %v714, %v779
      %v906 = vmul.f32 %v714, %v780
      %v907 = vmul.f32 %v714, %v781
      %v908 = vmul.f32 %v714, %v782
      %v909 = vmul.f32 %v714, %v783
      %v910 = vmul.f32 %v714, %v784
      %v911 = vmul.f32 %v714, %v785
      %v912 = vmul.f32 %v714, %v786
      %v913 = vmul.f32 %v714, %v787
      %v914 = vmul.f32 %v714, %v788
      %v915 = vmul.f32 %v714, %v789
      %v916 = vmul.f32 %v718, %v772
      %v917 = vmul.f32 %v718, %v773
      %v918 = vmul.f32 %v718, %v774
      %v919 = vmul.f32 %v718, %v775
      %v920 = vmul.f32 %v718, %v776
      %v921 = vmul.f32 %v718, %v777
      %v922 = vmul.f32 %v718, %v778
      %v923 = vmul.f32 %v718, %v779
      %v924 = vmul.f32 %v718, %v780
      %v925 = vmul.f32 %v718, %v781
      %v926 = vmul.f32 %v718, %v782
      %v927 = vmul.f32 %v718, %v783
      %v928 = vmul.f32 %v718, %v784
      %v929 = vmul.f32 %v718, %v785
      %v930 = vmul.f32 %v718, %v786
      %v931 = vmul.f32 %v718, %v787
      %v932 = vmul.f32 %v718, %v788
      %v933 = vmul.f32 %v718, %v789
      %v934 = vmul.f32 %v722, %v772
      %v935 = vmul.f32 %v722, %v773
      %v936 = vmul.f32 %v722, %v774
      %v937 = vmul.f32 %v722, %v775
      %v938 = vmul.f32 %v722, %v776
      %v939 = vmul.f32 %v722, %v777
      %v940 = vmul.f32 %v722, %v778
      %v941 = vmul.f32 %v722, %v779
      %v942 = vmul.f32 %v722, %v780
      %v943 = vmul.f32 %v722, %v781
      %v944 = vmul.f32 %v722, %v782
      %v945 = vmul.f32 %v722, %v783
      %v946 = vmul.f32 %v722, %v784
      %v947 = vmul.f32 %v722, %v785
      %v948 = vmul.f32 %v722, %v786
      %v949 = vmul.f32 %v722, %v787
      %v950 = vmul.f32 %v722, %v788
      %v951 = vmul.f32 %v722, %v789
      %v952 = vmul.f32 %v726, %v772
      %v953 = vmul.f32 %v726, %v773
      %v954 = vmul.f32 %v726, %v774
      %v955 = vmul.f32 %v726, %v775
      %v956 = vmul.f32 %v726, %v776
      %v957 = vmul.f32 %v726, %v777
      %v958 = vmul.f32 %v726, %v778
      %v959 = vmul.f32 %v726, %v779
      %v960 = vmul.f32 %v726, %v780
      %v961 = vmul.f32 %v726, %v781
      %v962 = vmul.f32 %v726, %v782
      %v963 = vmul.f32 %v726, %v783
      %v964 = vmul.f32 %v726, %v784
      %v965 = vmul.f32 %v726, %v785
      %v966 = vmul.f32 %v726, %v786
      %v967 = vmul.f32 %v726, %v787
      %v968 = vmul.f32 %v726, %v788
      %v969 = vmul.f32 %v726, %v789
      %v970 = vmul.f32 %v730, %v772
      %v971 = vmul.f32 %v730, %v773
      %v972 = vmul.f32 %v730, %v774
      %v973 = vmul.f32 %v730, %v775
      %v974 = vmul.f32 %v730, %v776
      %v975 = vmul.f32 %v730, %v777
      %v976 = vmul.f32 %v730, %v778
      %v977 = vmul.f32 %v730, %v779
      %v978 = vmul.f32 %v730, %v780
      %v979 = vmul.f32 %v730, %v781
      %v980 = vmul.f32 %v730, %v782
      %v981 = vmul.f32 %v730, %v783
      %v982 = vmul.f32 %v730, %v784
      %v983 = vmul.f32 %v730, %v785
      %v984 = vmul.f32 %v730, %v786
      %v985 = vmul.f32 %v730, %v787
      %v986 = vmul.f32 %v730, %v788
      %v987 = vmul.f32 %v730, %v789
      %v988 = vmul.f32 %v734, %v772
      %v989 = vmul.f32 %v734, %v773
      %v990 = vmul.f32 %v734, %v774
      %v991 = vmul.f32 %v734, %v775
      %v992 = vmul.f32 %v734, %v776
      %v993 = vmul.f32 %v734, %v777
      %v994 = vmul.f32 %v734, %v778
      %v995 = vmul.f32 %v734, %v779
      %v996 = vmul.f32 %v734, %v780
      %v997 = vmul.f32 %v734, %v781
      %v998 = vmul.f32 %v734, %v782
      %v999 = vmul.f32 %v734, %v783
      %v1000 = vmul.f32 %v734, %v784
      %v1001 = vmul.f32 %v734, %v785
      %v1002 = vmul.f32 %v734, %v786
      %v1003 = vmul.f32 %v734, %v787
      %v1004 = vmul.f32 %v734, %v788
      %v1005 = vmul.f32 %v734, %v789
      %v1006 = vadd.f32 %v472, %v790
      %v1007 = vadd.f32 %v473, %v791
      %v1008 = vadd.f32 %v474, %v792
      %v1009 = vadd.f32 %v475, %v793
      %v1010 = vadd.f32 %v476, %v794
      %v1011 = vadd.f32 %v477, %v795
      %v1012 = vadd.f32 %v478, %v796
      %v1013 = vadd.f32 %v479, %v797
      %v1014 = vadd.f32 %v480, %v798
      %v1015 = vadd.f32 %v481, %v799
      %v1016 = vadd.f32 %v482, %v800
      %v1017 = vadd.f32 %v483, %v801
      %v1018 = vadd.f32 %v484, %v802
      %v1019 = vadd.f32 %v485, %v803
      %v1020 = vadd.f32 %v486, %v804
      %v1021 = vadd.f32 %v487, %v805
      %v1022 = vadd.f32 %v488, %v806
      %v1023 = vadd.f32 %v489, %v807
      %v1024 = vadd.f32 %v490, %v808
      %v1025 = vadd.f32 %v491, %v809
      %v1026 = vadd.f32 %v492, %v810
      %v1027 = vadd.f32 %v493, %v811
      %v1028 = vadd.f32 %v494, %v812
      %v1029 = vadd.f32 %v495, %v813
      %v1030 = vadd.f32 %v496, %v814
      %v1031 = vadd.f32 %v497, %v815
      %v1032 = vadd.f32 %v498, %v816
      %v1033 = vadd.f32 %v499, %v817
      %v1034 = vadd.f32 %v500, %v818
      %v1035 = vadd.f32 %v501, %v819
      %v1036 = vadd.f32 %v502, %v820
      %v1037 = vadd.f32 %v503, %v821
      %v1038 = vadd.f32 %v504, %v822
      %v1039 = vadd.f32 %v505, %v823
      %v1040 = vadd.f32 %v506, %v824
      %v1041 = vadd.f32 %v507, %v825
      %v1042 = vadd.f32 %v508, %v826
      %v1043 = vadd.f32 %v509, %v827
      %v1044 = vadd.f32 %v510, %v828
      %v1045 = vadd.f32 %v511, %v829
      %v1046 = vadd.f32 %v512, %v830
      %v1047 = vadd.f32 %v513, %v831
      %v1048 = vadd.f32 %v514, %v832
      %v1049 = vadd.f32 %v515, %v833
      %v1050 = vadd.f32 %v516, %v834
      %v1051 = vadd.f32 %v517, %v835
      %v1052 = vadd.f32 %v518, %v836
      %v1053 = vadd.f32 %v519, %v837
      %v1054 = vadd.f32 %v520, %v838
      %v1055 = vadd.f32 %v521, %v839
      %v1056 = vadd.f32 %v522, %v840
      %v1057 = vadd.f32 %v523, %v841
      %v1058 = vadd.f32 %v524, %v842
      %v1059 = vadd.f32 %v525, %v843
      %v1060 = vadd.f32 %v526, %v844
      %v1061 = vadd.f32 %v527, %v845
      %v1062 = vadd.f32 %v528, %v846
      %v1063 = vadd.f32 %v529, %v847
      %v1064 = vadd.f32 %v530, %v848
      %v1065 = vadd.f32 %v531, %v849
      %v1066 = vadd.f32 %v532, %v850
      %v1067 = vadd.f32 %v533, %v851
      %v1068 = vadd.f32 %v534, %v852
      %v1069 = vadd.f32 %v535, %v853
      %v1070 = vadd.f32 %v536, %v854
      %v1071 = vadd.f32 %v537, %v855
      %v1072 = vadd.f32 %v538, %v856
      %v1073 = vadd.f32 %v539, %v857
      %v1074 = vadd.f32 %v540, %v858
      %v1075 = vadd.f32 %v541, %v859
      %v1076 = vadd.f32 %v542, %v860
      %v1077 = vadd.f32 %v543, %v861
      %v1078 = vadd.f32 %v544, %v862
      %v1079 = vadd.f32 %v545, %v863
      %v1080 = vadd.f32 %v546, %v864
      %v1081 = vadd.f32 %v547, %v865
      %v1082 = vadd.f32 %v548, %v866
      %v1083 = vadd.f32 %v549, %v867
      %v1084 = vadd.f32 %v550, %v868
      %v1085 = vadd.f32 %v551, %v869
      %v1086 = vadd.f32 %v552, %v870
      %v1087 = vadd.f32 %v553, %v871
      %v1088 = vadd.f32 %v554, %v872
      %v1089 = vadd.f32 %v555, %v873
      %v1090 = vadd.f32 %v556, %v874
      %v1091 = vadd.f32 %v557, %v875
      %v1092 = vadd.f32 %v558, %v876
      %v1093 = vadd.f32 %v559, %v877
      %v1094 = vadd.f32 %v560, %v878
      %v1095 = vadd.f32 %v561, %v879
      %v1096 = vadd.f32 %v562, %v880
      %v1097 = vadd.f32 %v563, %v881
      %v1098 = vadd.f32 %v564, %v882
      %v1099 = vadd.f32 %v565, %v883
      %v1100 = vadd.f32 %v566, %v884
      %v1101 = vadd.f32 %v567, %v885
      %v1102 = vadd.f32 %v568, %v886
      %v1103 = vadd.f32 %v569, %v887
      %v1104 = vadd.f32 %v570, %v888
      %v1105 = vadd.f32 %v571, %v889
      %v1106 = vadd.f32 %v572, %v890
      %v1107 = vadd.f32 %v573, %v891
      %v1108 = vadd.f32 %v574, %v892
      %v1109 = vadd.f32 %v575, %v893
      %v1110 = vadd.f32 %v576, %v894
      %v1111 = vadd.f32 %v577, %v895
      %v1112 = vadd.f32 %v578, %v896
      %v1113 = vadd.f32 %v579, %v897
      %v1114 = vadd.f32 %v580, %v898
      %v1115 = vadd.f32 %v581, %v899
      %v1116 = vadd.f32 %v582, %v900
      %v1117 = vadd.f32 %v583, %v901
      %v1118 = vadd.f32 %v584, %v902
      %v1119 = vadd.f32 %v585, %v903
      %v1120 = vadd.f32 %v586, %v904
      %v1121 = vadd.f32 %v587, %v905
      %v1122 = vadd.f32 %v588, %v906
      %v1123 = vadd.f32 %v589, %v907
      %v1124 = vadd.f32 %v590, %v908
      %v1125 = vadd.f32 %v591, %v909
      %v1126 = vadd.f32 %v592, %v910
      %v1127 = vadd.f32 %v593, %v911
      %v1128 = vadd.f32 %v594, %v912
      %v1129 = vadd.f32 %v595, %v913
      %v1130 = vadd.f32 %v596, %v914
      %v1131 = vadd.f32 %v597, %v915
      %v1132 = vadd.f32 %v598, %v916
      %v1133 = vadd.f32 %v599, %v917
      %v1134 = vadd.f32 %v600, %v918
      %v1135 = vadd.f32 %v601, %v919
      %v1136 = vadd.f32 %v602, %v920
      %v1137 = vadd.f32 %v603, %v921
      %v1138 = vadd.f32 %v604, %v922
      %v1139 = vadd.f32 %v605, %v923
      %v1140 = vadd.f32 %v606, %v924
      %v1141 = vadd.f32 %v607, %v925
      %v1142 = vadd.f32 %v608, %v926
      %v1143 = vadd.f32 %v609, %v927
      %v1144 = vadd.f32 %v610, %v928
      %v1145 = vadd.f32 %v611, %v929
      %v1146 = vadd.f32 %v612, %v930
      %v1147 = vadd.f32 %v613, %v931
      %v1148 = vadd.f32 %v614, %v932
      %v1149 = vadd.f32 %v615, %v933
      %v1150 = vadd.f32 %v616, %v934
      %v1151 = vadd.f32 %v617, %v935
      %v1152 = vadd.f32 %v618, %v936
      %v1153 = vadd.f32 %v619, %v937
      %v1154 = vadd.f32 %v620, %v938
      %v1155 = vadd.f32 %v621, %v939
      %v1156 = vadd.f32 %v622, %v940
      %v1157 = vadd.f32 %v623, %v941
      %v1158 = vadd.f32 %v624, %v942
      %v1159 = vadd.f32 %v625, %v943
      %v1160 = vadd.f32 %v626, %v944
      %v1161 = vadd.f32 %v627, %v945
      %v1162 = vadd.f32 %v628, %v946
      %v1163 = vadd.f32 %v629, %v947
      %v1164 = vadd.f32 %v630, %v948
      %v1165 = vadd.f32 %v631, %v949
      %v1166 = vadd.f32 %v632, %v950
      %v1167 = vadd.f32 %v633, %v951
      %v1168 = vadd.f32 %v634, %v952
      %v1169 = vadd.f32 %v635, %v953
      %v1170 = vadd.f32 %v636, %v954
      %v1171 = vadd.f32 %v637, %v955
      %v1172 = vadd.f32 %v638, %v956
      %v1173 = vadd.f32 %v639, %v957
      %v1174 = vadd.f32 %v640, %v958
      %v1175 = vadd.f32 %v641, %v959
      %v1176 = vadd.f32 %v642, %v960
      %v1177 = vadd.f32 %v643, %v961
      %v1178 = vadd.f32 %v644, %v962
      %v1179 = vadd.f32 %v645, %v963
      %v1180 = vadd.f32 %v646, %v964
      %v1181 = vadd.f32 %v647, %v965
      %v1182 = vadd.f32 %v648, %v966
      %v1183 = vadd.f32 %v649, %v967
      %v1184 = vadd.f32 %v650, %v968
      %v1185 = vadd.f32 %v651, %v969
      %v1186 = vadd.f32 %v652, %v970
      %v1187 = vadd.f32 %v653, %v971
      %v1188 = vadd.f32 %v654, %v972
      %v1189 = vadd.f32 %v655, %v973
      %v1190 = vadd.f32 %v656, %v974
      %v1191 = vadd.f32 %v657, %v975
      %v1192 = vadd.f32 %v658, %v976
      %v1193 = vadd.f32 %v659, %v977
      %v1194 = vadd.f32 %v660, %v978
      %v1195 = vadd.f32 %v661, %v979
      %v1196 = vadd.f32 %v662, %v980
      %v1197 = vadd.f32 %v663, %v981
      %v1198 = vadd.f32 %v664, %v982
      %v1199 = vadd.f32 %v665, %v983
      %v1200 = vadd.f32 %v666, %v984
      %v1201 = vadd.f32 %v667, %v985
      %v1202 = vadd.f32 %v668, %v986
      %v1203 = vadd.f32 %v669, %v987
      %v1204 = vadd.f32 %v670, %v988
      %v1205 = vadd.f32 %v671, %v989
      %v1206 = vadd.f32 %v672, %v990
      %v1207 = vadd.f32 %v673, %v991
      %v1208 = vadd.f32 %v674, %v992
      %v1209 = vadd.f32 %v675, %v993
      %v1210 = vadd.f32 %v676, %v994
      %v1211 = vadd.f32 %v677, %v995
      %v1212 = vadd.f32 %v678, %v996
      %v1213 = vadd.f32 %v679, %v997
      %v1214 = vadd.f32 %v680, %v998
      %v1215 = vadd.f32 %v681, %v999
      %v1216 = vadd.f32 %v682, %v1000
      %v1217 = vadd.f32 %v683, %v1001
      %v1218 = vadd.f32 %v684, %v1002
      %v1219 = vadd.f32 %v685, %v1003
      %v1220 = vadd.f32 %v686, %v1004
      %v1221 = vadd.f32 %v687, %v1005
      %1222 = vset.pattern.permute.xlu0 2
      %1223 = vperm.xlu0 %1222, %v337
      %v1224 = vpop.permute.xlu0 %1223
      %1226 = vset.pattern.permute.xlu0 2
      %1227 = vperm.xlu0 %1226, %v338
      %v1228 = vpop.permute.xlu0 %1227
      %1230 = vset.pattern.permute.xlu0 2
      %1231 = vperm.xlu0 %1230, %v339
      %v1232 = vpop.permute.xlu0 %1231
      %1234 = vset.pattern.permute.xlu0 2
      %1235 = vperm.xlu0 %1234, %v340
      %v1236 = vpop.permute.xlu0 %1235
      %1238 = vset.pattern.permute.xlu0 2
      %1239 = vperm.xlu0 %1238, %v341
      %v1240 = vpop.permute.xlu0 %1239
      %1242 = vset.pattern.permute.xlu0 2
      %1243 = vperm.xlu0 %1242, %v342
      %v1244 = vpop.permute.xlu0 %1243
      %1246 = vset.pattern.permute.xlu0 2
      %1247 = vperm.xlu0 %1246, %v343
      %v1248 = vpop.permute.xlu0 %1247
      %1250 = vset.pattern.permute.xlu0 2
      %1251 = vperm.xlu0 %1250, %v344
      %v1252 = vpop.permute.xlu0 %1251
      %1254 = vset.pattern.permute.xlu0 2
      %1255 = vperm.xlu0 %1254, %v345
      %v1256 = vpop.permute.xlu0 %1255
      %1258 = vset.pattern.permute.xlu0 2
      %1259 = vperm.xlu0 %1258, %v346
      %v1260 = vpop.permute.xlu0 %1259
      %1262 = vset.pattern.permute.xlu0 2
      %1263 = vperm.xlu0 %1262, %v347
      %v1264 = vpop.permute.xlu0 %1263
      %1266 = vset.pattern.permute.xlu0 2
      %1267 = vperm.xlu0 %1266, %v348
      %v1268 = vpop.permute.xlu0 %1267
      %v1270 = vperm.slane %v328, 2
      %v1271 = vperm.slane %v328, 6
      %v1272 = vperm.slane %v329, 2
      %v1273 = vperm.slane %v329, 6
      %v1274 = vperm.slane %v330, 2
      %v1275 = vperm.slane %v330, 6
      %v1276 = vperm.slane %v331, 2
      %v1277 = vperm.slane %v331, 6
      %v1278 = vperm.slane %v332, 2
      %v1279 = vperm.slane %v332, 6
      %v1280 = vperm.slane %v333, 2
      %v1281 = vperm.slane %v333, 6
      %v1282 = vperm.slane %v334, 2
      %v1283 = vperm.slane %v334, 6
      %v1284 = vperm.slane %v335, 2
      %v1285 = vperm.slane %v335, 6
      %v1286 = vperm.slane %v336, 2
      %v1287 = vperm.slane %v336, 6
      %v1306 = vperm.slane %v1270, 2
      %v1307 = vperm.slane %v1271, 2
      %v1308 = vperm.slane %v1272, 2
      %v1309 = vperm.slane %v1273, 2
      %v1310 = vperm.slane %v1274, 2
      %v1311 = vperm.slane %v1275, 2
      %v1312 = vperm.slane %v1276, 2
      %v1313 = vperm.slane %v1277, 2
      %v1314 = vperm.slane %v1278, 2
      %v1315 = vperm.slane %v1279, 2
      %v1316 = vperm.slane %v1280, 2
      %v1317 = vperm.slane %v1281, 2
      %v1318 = vperm.slane %v1282, 2
      %v1319 = vperm.slane %v1283, 2
      %v1320 = vperm.slane %v1284, 2
      %v1321 = vperm.slane %v1285, 2
      %v1322 = vperm.slane %v1286, 2
      %v1323 = vperm.slane %v1287, 2
      %v1324 = vmul.f32 %v1224, %v1306
      %v1325 = vmul.f32 %v1224, %v1307
      %v1326 = vmul.f32 %v1224, %v1308
      %v1327 = vmul.f32 %v1224, %v1309
      %v1328 = vmul.f32 %v1224, %v1310
      %v1329 = vmul.f32 %v1224, %v1311
      %v1330 = vmul.f32 %v1224, %v1312
      %v1331 = vmul.f32 %v1224, %v1313
      %v1332 = vmul.f32 %v1224, %v1314
      %v1333 = vmul.f32 %v1224, %v1315
      %v1334 = vmul.f32 %v1224, %v1316
      %v1335 = vmul.f32 %v1224, %v1317
      %v1336 = vmul.f32 %v1224, %v1318
      %v1337 = vmul.f32 %v1224, %v1319
      %v1338 = vmul.f32 %v1224, %v1320
      %v1339 = vmul.f32 %v1224, %v1321
      %v1340 = vmul.f32 %v1224, %v1322
      %v1341 = vmul.f32 %v1224, %v1323
      %v1342 = vmul.f32 %v1228, %v1306
      %v1343 = vmul.f32 %v1228, %v1307
      %v1344 = vmul.f32 %v1228, %v1308
      %v1345 = vmul.f32 %v1228, %v1309
      %v1346 = vmul.f32 %v1228, %v1310
      %v1347 = vmul.f32 %v1228, %v1311
      %v1348 = vmul.f32 %v1228, %v1312
      %v1349 = vmul.f32 %v1228, %v1313
      %v1350 = vmul.f32 %v1228, %v1314
      %v1351 = vmul.f32 %v1228, %v1315
      %v1352 = vmul.f32 %v1228, %v1316
      %v1353 = vmul.f32 %v1228, %v1317
      %v1354 = vmul.f32 %v1228, %v1318
      %v1355 = vmul.f32 %v1228, %v1319
      %v1356 = vmul.f32 %v1228, %v1320
      %v1357 = vmul.f32 %v1228, %v1321
      %v1358 = vmul.f32 %v1228, %v1322
      %v1359 = vmul.f32 %v1228, %v1323
      %v1360 = vmul.f32 %v1232, %v1306
      %v1361 = vmul.f32 %v1232, %v1307
      %v1362 = vmul.f32 %v1232, %v1308
      %v1363 = vmul.f32 %v1232, %v1309
      %v1364 = vmul.f32 %v1232, %v1310
      %v1365 = vmul.f32 %v1232, %v1311
      %v1366 = vmul.f32 %v1232, %v1312
      %v1367 = vmul.f32 %v1232, %v1313
      %v1368 = vmul.f32 %v1232, %v1314
      %v1369 = vmul.f32 %v1232, %v1315
      %v1370 = vmul.f32 %v1232, %v1316
      %v1371 = vmul.f32 %v1232, %v1317
      %v1372 = vmul.f32 %v1232, %v1318
      %v1373 = vmul.f32 %v1232, %v1319
      %v1374 = vmul.f32 %v1232, %v1320
      %v1375 = vmul.f32 %v1232, %v1321
      %v1376 = vmul.f32 %v1232, %v1322
      %v1377 = vmul.f32 %v1232, %v1323
      %v1378 = vmul.f32 %v1236, %v1306
      %v1379 = vmul.f32 %v1236, %v1307
      %v1380 = vmul.f32 %v1236, %v1308
      %v1381 = vmul.f32 %v1236, %v1309
      %v1382 = vmul.f32 %v1236, %v1310
      %v1383 = vmul.f32 %v1236, %v1311
      %v1384 = vmul.f32 %v1236, %v1312
      %v1385 = vmul.f32 %v1236, %v1313
      %v1386 = vmul.f32 %v1236, %v1314
      %v1387 = vmul.f32 %v1236, %v1315
      %v1388 = vmul.f32 %v1236, %v1316
      %v1389 = vmul.f32 %v1236, %v1317
      %v1390 = vmul.f32 %v1236, %v1318
      %v1391 = vmul.f32 %v1236, %v1319
      %v1392 = vmul.f32 %v1236, %v1320
      %v1393 = vmul.f32 %v1236, %v1321
      %v1394 = vmul.f32 %v1236, %v1322
      %v1395 = vmul.f32 %v1236, %v1323
      %v1396 = vmul.f32 %v1240, %v1306
      %v1397 = vmul.f32 %v1240, %v1307
      %v1398 = vmul.f32 %v1240, %v1308
      %v1399 = vmul.f32 %v1240, %v1309
      %v1400 = vmul.f32 %v1240, %v1310
      %v1401 = vmul.f32 %v1240, %v1311
      %v1402 = vmul.f32 %v1240, %v1312
      %v1403 = vmul.f32 %v1240, %v1313
      %v1404 = vmul.f32 %v1240, %v1314
      %v1405 = vmul.f32 %v1240, %v1315
      %v1406 = vmul.f32 %v1240, %v1316
      %v1407 = vmul.f32 %v1240, %v1317
      %v1408 = vmul.f32 %v1240, %v1318
      %v1409 = vmul.f32 %v1240, %v1319
      %v1410 = vmul.f32 %v1240, %v1320
      %v1411 = vmul.f32 %v1240, %v1321
      %v1412 = vmul.f32 %v1240, %v1322
      %v1413 = vmul.f32 %v1240, %v1323
      %v1414 = vmul.f32 %v1244, %v1306
      %v1415 = vmul.f32 %v1244, %v1307
      %v1416 = vmul.f32 %v1244, %v1308
      %v1417 = vmul.f32 %v1244, %v1309
      %v1418 = vmul.f32 %v1244, %v1310
      %v1419 = vmul.f32 %v1244, %v1311
      %v1420 = vmul.f32 %v1244, %v1312
      %v1421 = vmul.f32 %v1244, %v1313
      %v1422 = vmul.f32 %v1244, %v1314
      %v1423 = vmul.f32 %v1244, %v1315
      %v1424 = vmul.f32 %v1244, %v1316
      %v1425 = vmul.f32 %v1244, %v1317
      %v1426 = vmul.f32 %v1244, %v1318
      %v1427 = vmul.f32 %v1244, %v1319
      %v1428 = vmul.f32 %v1244, %v1320
      %v1429 = vmul.f32 %v1244, %v1321
      %v1430 = vmul.f32 %v1244, %v1322
      %v1431 = vmul.f32 %v1244, %v1323
      %v1432 = vmul.f32 %v1248, %v1306
      %v1433 = vmul.f32 %v1248, %v1307
      %v1434 = vmul.f32 %v1248, %v1308
      %v1435 = vmul.f32 %v1248, %v1309
      %v1436 = vmul.f32 %v1248, %v1310
      %v1437 = vmul.f32 %v1248, %v1311
      %v1438 = vmul.f32 %v1248, %v1312
      %v1439 = vmul.f32 %v1248, %v1313
      %v1440 = vmul.f32 %v1248, %v1314
      %v1441 = vmul.f32 %v1248, %v1315
      %v1442 = vmul.f32 %v1248, %v1316
      %v1443 = vmul.f32 %v1248, %v1317
      %v1444 = vmul.f32 %v1248, %v1318
      %v1445 = vmul.f32 %v1248, %v1319
      %v1446 = vmul.f32 %v1248, %v1320
      %v1447 = vmul.f32 %v1248, %v1321
      %v1448 = vmul.f32 %v1248, %v1322
      %v1449 = vmul.f32 %v1248, %v1323
      %v1450 = vmul.f32 %v1252, %v1306
      %v1451 = vmul.f32 %v1252, %v1307
      %v1452 = vmul.f32 %v1252, %v1308
      %v1453 = vmul.f32 %v1252, %v1309
      %v1454 = vmul.f32 %v1252, %v1310
      %v1455 = vmul.f32 %v1252, %v1311
      %v1456 = vmul.f32 %v1252, %v1312
      %v1457 = vmul.f32 %v1252, %v1313
      %v1458 = vmul.f32 %v1252, %v1314
      %v1459 = vmul.f32 %v1252, %v1315
      %v1460 = vmul.f32 %v1252, %v1316
      %v1461 = vmul.f32 %v1252, %v1317
      %v1462 = vmul.f32 %v1252, %v1318
      %v1463 = vmul.f32 %v1252, %v1319
      %v1464 = vmul.f32 %v1252, %v1320
      %v1465 = vmul.f32 %v1252, %v1321
      %v1466 = vmul.f32 %v1252, %v1322
      %v1467 = vmul.f32 %v1252, %v1323
      %v1468 = vmul.f32 %v1256, %v1306
      %v1469 = vmul.f32 %v1256, %v1307
      %v1470 = vmul.f32 %v1256, %v1308
      %v1471 = vmul.f32 %v1256, %v1309
      %v1472 = vmul.f32 %v1256, %v1310
      %v1473 = vmul.f32 %v1256, %v1311
      %v1474 = vmul.f32 %v1256, %v1312
      %v1475 = vmul.f32 %v1256, %v1313
      %v1476 = vmul.f32 %v1256, %v1314
      %v1477 = vmul.f32 %v1256, %v1315
      %v1478 = vmul.f32 %v1256, %v1316
      %v1479 = vmul.f32 %v1256, %v1317
      %v1480 = vmul.f32 %v1256, %v1318
      %v1481 = vmul.f32 %v1256, %v1319
      %v1482 = vmul.f32 %v1256, %v1320
      %v1483 = vmul.f32 %v1256, %v1321
      %v1484 = vmul.f32 %v1256, %v1322
      %v1485 = vmul.f32 %v1256, %v1323
      %v1486 = vmul.f32 %v1260, %v1306
      %v1487 = vmul.f32 %v1260, %v1307
      %v1488 = vmul.f32 %v1260, %v1308
      %v1489 = vmul.f32 %v1260, %v1309
      %v1490 = vmul.f32 %v1260, %v1310
      %v1491 = vmul.f32 %v1260, %v1311
      %v1492 = vmul.f32 %v1260, %v1312
      %v1493 = vmul.f32 %v1260, %v1313
      %v1494 = vmul.f32 %v1260, %v1314
      %v1495 = vmul.f32 %v1260, %v1315
      %v1496 = vmul.f32 %v1260, %v1316
      %v1497 = vmul.f32 %v1260, %v1317
      %v1498 = vmul.f32 %v1260, %v1318
      %v1499 = vmul.f32 %v1260, %v1319
      %v1500 = vmul.f32 %v1260, %v1320
      %v1501 = vmul.f32 %v1260, %v1321
      %v1502 = vmul.f32 %v1260, %v1322
      %v1503 = vmul.f32 %v1260, %v1323
      %v1504 = vmul.f32 %v1264, %v1306
      %v1505 = vmul.f32 %v1264, %v1307
      %v1506 = vmul.f32 %v1264, %v1308
      %v1507 = vmul.f32 %v1264, %v1309
      %v1508 = vmul.f32 %v1264, %v1310
      %v1509 = vmul.f32 %v1264, %v1311
      %v1510 = vmul.f32 %v1264, %v1312
      %v1511 = vmul.f32 %v1264, %v1313
      %v1512 = vmul.f32 %v1264, %v1314
      %v1513 = vmul.f32 %v1264, %v1315
      %v1514 = vmul.f32 %v1264, %v1316
      %v1515 = vmul.f32 %v1264, %v1317
      %v1516 = vmul.f32 %v1264, %v1318
      %v1517 = vmul.f32 %v1264, %v1319
      %v1518 = vmul.f32 %v1264, %v1320
      %v1519 = vmul.f32 %v1264, %v1321
      %v1520 = vmul.f32 %v1264, %v1322
      %v1521 = vmul.f32 %v1264, %v1323
      %v1522 = vmul.f32 %v1268, %v1306
      %v1523 = vmul.f32 %v1268, %v1307
      %v1524 = vmul.f32 %v1268, %v1308
      %v1525 = vmul.f32 %v1268, %v1309
      %v1526 = vmul.f32 %v1268, %v1310
      %v1527 = vmul.f32 %v1268, %v1311
      %v1528 = vmul.f32 %v1268, %v1312
      %v1529 = vmul.f32 %v1268, %v1313
      %v1530 = vmul.f32 %v1268, %v1314
      %v1531 = vmul.f32 %v1268, %v1315
      %v1532 = vmul.f32 %v1268, %v1316
      %v1533 = vmul.f32 %v1268, %v1317
      %v1534 = vmul.f32 %v1268, %v1318
      %v1535 = vmul.f32 %v1268, %v1319
      %v1536 = vmul.f32 %v1268, %v1320
      %v1537 = vmul.f32 %v1268, %v1321
      %v1538 = vmul.f32 %v1268, %v1322
      %v1539 = vmul.f32 %v1268, %v1323
      %v1540 = vadd.f32 %v1006, %v1324
      %v1541 = vadd.f32 %v1007, %v1325
      %v1542 = vadd.f32 %v1008, %v1326
      %v1543 = vadd.f32 %v1009, %v1327
      %v1544 = vadd.f32 %v1010, %v1328
      %v1545 = vadd.f32 %v1011, %v1329
      %v1546 = vadd.f32 %v1012, %v1330
      %v1547 = vadd.f32 %v1013, %v1331
      %v1548 = vadd.f32 %v1014, %v1332
      %v1549 = vadd.f32 %v1015, %v1333
      %v1550 = vadd.f32 %v1016, %v1334
      %v1551 = vadd.f32 %v1017, %v1335
      %v1552 = vadd.f32 %v1018, %v1336
      %v1553 = vadd.f32 %v1019, %v1337
      %v1554 = vadd.f32 %v1020, %v1338
      %v1555 = vadd.f32 %v1021, %v1339
      %v1556 = vadd.f32 %v1022, %v1340
      %v1557 = vadd.f32 %v1023, %v1341
      %v1558 = vadd.f32 %v1024, %v1342
      %v1559 = vadd.f32 %v1025, %v1343
      %v1560 = vadd.f32 %v1026, %v1344
      %v1561 = vadd.f32 %v1027, %v1345
      %v1562 = vadd.f32 %v1028, %v1346
      %v1563 = vadd.f32 %v1029, %v1347
      %v1564 = vadd.f32 %v1030, %v1348
      %v1565 = vadd.f32 %v1031, %v1349
      %v1566 = vadd.f32 %v1032, %v1350
      %v1567 = vadd.f32 %v1033, %v1351
      %v1568 = vadd.f32 %v1034, %v1352
      %v1569 = vadd.f32 %v1035, %v1353
      %v1570 = vadd.f32 %v1036, %v1354
      %v1571 = vadd.f32 %v1037, %v1355
      %v1572 = vadd.f32 %v1038, %v1356
      %v1573 = vadd.f32 %v1039, %v1357
      %v1574 = vadd.f32 %v1040, %v1358
      %v1575 = vadd.f32 %v1041, %v1359
      %v1576 = vadd.f32 %v1042, %v1360
      %v1577 = vadd.f32 %v1043, %v1361
      %v1578 = vadd.f32 %v1044, %v1362
      %v1579 = vadd.f32 %v1045, %v1363
      %v1580 = vadd.f32 %v1046, %v1364
      %v1581 = vadd.f32 %v1047, %v1365
      %v1582 = vadd.f32 %v1048, %v1366
      %v1583 = vadd.f32 %v1049, %v1367
      %v1584 = vadd.f32 %v1050, %v1368
      %v1585 = vadd.f32 %v1051, %v1369
      %v1586 = vadd.f32 %v1052, %v1370
      %v1587 = vadd.f32 %v1053, %v1371
      %v1588 = vadd.f32 %v1054, %v1372
      %v1589 = vadd.f32 %v1055, %v1373
      %v1590 = vadd.f32 %v1056, %v1374
      %v1591 = vadd.f32 %v1057, %v1375
      %v1592 = vadd.f32 %v1058, %v1376
      %v1593 = vadd.f32 %v1059, %v1377
      %v1594 = vadd.f32 %v1060, %v1378
      %v1595 = vadd.f32 %v1061, %v1379
      %v1596 = vadd.f32 %v1062, %v1380
      %v1597 = vadd.f32 %v1063, %v1381
      %v1598 = vadd.f32 %v1064, %v1382
      %v1599 = vadd.f32 %v1065, %v1383
      %v1600 = vadd.f32 %v1066, %v1384
      %v1601 = vadd.f32 %v1067, %v1385
      %v1602 = vadd.f32 %v1068, %v1386
      %v1603 = vadd.f32 %v1069, %v1387
      %v1604 = vadd.f32 %v1070, %v1388
      %v1605 = vadd.f32 %v1071, %v1389
      %v1606 = vadd.f32 %v1072, %v1390
      %v1607 = vadd.f32 %v1073, %v1391
      %v1608 = vadd.f32 %v1074, %v1392
      %v1609 = vadd.f32 %v1075, %v1393
      %v1610 = vadd.f32 %v1076, %v1394
      %v1611 = vadd.f32 %v1077, %v1395
      %v1612 = vadd.f32 %v1078, %v1396
      %v1613 = vadd.f32 %v1079, %v1397
      %v1614 = vadd.f32 %v1080, %v1398
      %v1615 = vadd.f32 %v1081, %v1399
      %v1616 = vadd.f32 %v1082, %v1400
      %v1617 = vadd.f32 %v1083, %v1401
      %v1618 = vadd.f32 %v1084, %v1402
      %v1619 = vadd.f32 %v1085, %v1403
      %v1620 = vadd.f32 %v1086, %v1404
      %v1621 = vadd.f32 %v1087, %v1405
      %v1622 = vadd.f32 %v1088, %v1406
      %v1623 = vadd.f32 %v1089, %v1407
      %v1624 = vadd.f32 %v1090, %v1408
      %v1625 = vadd.f32 %v1091, %v1409
      %v1626 = vadd.f32 %v1092, %v1410
      %v1627 = vadd.f32 %v1093, %v1411
      %v1628 = vadd.f32 %v1094, %v1412
      %v1629 = vadd.f32 %v1095, %v1413
      %v1630 = vadd.f32 %v1096, %v1414
      %v1631 = vadd.f32 %v1097, %v1415
      %v1632 = vadd.f32 %v1098, %v1416
      %v1633 = vadd.f32 %v1099, %v1417
      %v1634 = vadd.f32 %v1100, %v1418
      %v1635 = vadd.f32 %v1101, %v1419
      %v1636 = vadd.f32 %v1102, %v1420
      %v1637 = vadd.f32 %v1103, %v1421
      %v1638 = vadd.f32 %v1104, %v1422
      %v1639 = vadd.f32 %v1105, %v1423
      %v1640 = vadd.f32 %v1106, %v1424
      %v1641 = vadd.f32 %v1107, %v1425
      %v1642 = vadd.f32 %v1108, %v1426
      %v1643 = vadd.f32 %v1109, %v1427
      %v1644 = vadd.f32 %v1110, %v1428
      %v1645 = vadd.f32 %v1111, %v1429
      %v1646 = vadd.f32 %v1112, %v1430
      %v1647 = vadd.f32 %v1113, %v1431
      %v1648 = vadd.f32 %v1114, %v1432
      %v1649 = vadd.f32 %v1115, %v1433
      %v1650 = vadd.f32 %v1116, %v1434
      %v1651 = vadd.f32 %v1117, %v1435
      %v1652 = vadd.f32 %v1118, %v1436
      %v1653 = vadd.f32 %v1119, %v1437
      %v1654 = vadd.f32 %v1120, %v1438
      %v1655 = vadd.f32 %v1121, %v1439
      %v1656 = vadd.f32 %v1122, %v1440
      %v1657 = vadd.f32 %v1123, %v1441
      %v1658 = vadd.f32 %v1124, %v1442
      %v1659 = vadd.f32 %v1125, %v1443
      %v1660 = vadd.f32 %v1126, %v1444
      %v1661 = vadd.f32 %v1127, %v1445
      %v1662 = vadd.f32 %v1128, %v1446
      %v1663 = vadd.f32 %v1129, %v1447
      %v1664 = vadd.f32 %v1130, %v1448
      %v1665 = vadd.f32 %v1131, %v1449
      %v1666 = vadd.f32 %v1132, %v1450
      %v1667 = vadd.f32 %v1133, %v1451
      %v1668 = vadd.f32 %v1134, %v1452
      %v1669 = vadd.f32 %v1135, %v1453
      %v1670 = vadd.f32 %v1136, %v1454
      %v1671 = vadd.f32 %v1137, %v1455
      %v1672 = vadd.f32 %v1138, %v1456
      %v1673 = vadd.f32 %v1139, %v1457
      %v1674 = vadd.f32 %v1140, %v1458
      %v1675 = vadd.f32 %v1141, %v1459
      %v1676 = vadd.f32 %v1142, %v1460
      %v1677 = vadd.f32 %v1143, %v1461
      %v1678 = vadd.f32 %v1144, %v1462
      %v1679 = vadd.f32 %v1145, %v1463
      %v1680 = vadd.f32 %v1146, %v1464
      %v1681 = vadd.f32 %v1147, %v1465
      %v1682 = vadd.f32 %v1148, %v1466
      %v1683 = vadd.f32 %v1149, %v1467
      %v1684 = vadd.f32 %v1150, %v1468
      %v1685 = vadd.f32 %v1151, %v1469
      %v1686 = vadd.f32 %v1152, %v1470
      %v1687 = vadd.f32 %v1153, %v1471
      %v1688 = vadd.f32 %v1154, %v1472
      %v1689 = vadd.f32 %v1155, %v1473
      %v1690 = vadd.f32 %v1156, %v1474
      %v1691 = vadd.f32 %v1157, %v1475
      %v1692 = vadd.f32 %v1158, %v1476
      %v1693 = vadd.f32 %v1159, %v1477
      %v1694 = vadd.f32 %v1160, %v1478
      %v1695 = vadd.f32 %v1161, %v1479
      %v1696 = vadd.f32 %v1162, %v1480
      %v1697 = vadd.f32 %v1163, %v1481
      %v1698 = vadd.f32 %v1164, %v1482
      %v1699 = vadd.f32 %v1165, %v1483
      %v1700 = vadd.f32 %v1166, %v1484
      %v1701 = vadd.f32 %v1167, %v1485
      %v1702 = vadd.f32 %v1168, %v1486
      %v1703 = vadd.f32 %v1169, %v1487
      %v1704 = vadd.f32 %v1170, %v1488
      %v1705 = vadd.f32 %v1171, %v1489
      %v1706 = vadd.f32 %v1172, %v1490
      %v1707 = vadd.f32 %v1173, %v1491
      %v1708 = vadd.f32 %v1174, %v1492
      %v1709 = vadd.f32 %v1175, %v1493
      %v1710 = vadd.f32 %v1176, %v1494
      %v1711 = vadd.f32 %v1177, %v1495
      %v1712 = vadd.f32 %v1178, %v1496
      %v1713 = vadd.f32 %v1179, %v1497
      %v1714 = vadd.f32 %v1180, %v1498
      %v1715 = vadd.f32 %v1181, %v1499
      %v1716 = vadd.f32 %v1182, %v1500
      %v1717 = vadd.f32 %v1183, %v1501
      %v1718 = vadd.f32 %v1184, %v1502
      %v1719 = vadd.f32 %v1185, %v1503
      %v1720 = vadd.f32 %v1186, %v1504
      %v1721 = vadd.f32 %v1187, %v1505
      %v1722 = vadd.f32 %v1188, %v1506
      %v1723 = vadd.f32 %v1189, %v1507
      %v1724 = vadd.f32 %v1190, %v1508
      %v1725 = vadd.f32 %v1191, %v1509
      %v1726 = vadd.f32 %v1192, %v1510
      %v1727 = vadd.f32 %v1193, %v1511
      %v1728 = vadd.f32 %v1194, %v1512
      %v1729 = vadd.f32 %v1195, %v1513
      %v1730 = vadd.f32 %v1196, %v1514
      %v1731 = vadd.f32 %v1197, %v1515
      %v1732 = vadd.f32 %v1198, %v1516
      %v1733 = vadd.f32 %v1199, %v1517
      %v1734 = vadd.f32 %v1200, %v1518
      %v1735 = vadd.f32 %v1201, %v1519
      %v1736 = vadd.f32 %v1202, %v1520
      %v1737 = vadd.f32 %v1203, %v1521
      %v1738 = vadd.f32 %v1204, %v1522
      %v1739 = vadd.f32 %v1205, %v1523
      %v1740 = vadd.f32 %v1206, %v1524
      %v1741 = vadd.f32 %v1207, %v1525
      %v1742 = vadd.f32 %v1208, %v1526
      %v1743 = vadd.f32 %v1209, %v1527
      %v1744 = vadd.f32 %v1210, %v1528
      %v1745 = vadd.f32 %v1211, %v1529
      %v1746 = vadd.f32 %v1212, %v1530
      %v1747 = vadd.f32 %v1213, %v1531
      %v1748 = vadd.f32 %v1214, %v1532
      %v1749 = vadd.f32 %v1215, %v1533
      %v1750 = vadd.f32 %v1216, %v1534
      %v1751 = vadd.f32 %v1217, %v1535
      %v1752 = vadd.f32 %v1218, %v1536
      %v1753 = vadd.f32 %v1219, %v1537
      %v1754 = vadd.f32 %v1220, %v1538
      %v1755 = vadd.f32 %v1221, %v1539
      %1756 = vrot.lane.b32.xlu0 %v1540, 16
      %v1757 = vpop.permute.xlu0 %1756
      %1758 = vrot.lane.b32.xlu0 %v1558, 16
      %v1759 = vpop.permute.xlu0 %1758
      %1760 = vrot.lane.b32.xlu0 %v1576, 16
      %v1761 = vpop.permute.xlu0 %1760
      %1762 = vrot.lane.b32.xlu0 %v1594, 16
      %v1763 = vpop.permute.xlu0 %1762
      %1764 = vrot.lane.b32.xlu0 %v1541, 16
      %v1765 = vpop.permute.xlu0 %1764
      %1766 = vrot.lane.b32.xlu0 %v1559, 16
      %v1767 = vpop.permute.xlu0 %1766
      %1768 = vrot.lane.b32.xlu0 %v1577, 16
      %v1769 = vpop.permute.xlu0 %1768
      %1770 = vrot.lane.b32.xlu0 %v1595, 16
      %v1771 = vpop.permute.xlu0 %1770
      %1772 = vrot.lane.b32.xlu0 %v1542, 16
      %v1773 = vpop.permute.xlu0 %1772
      %1774 = vrot.lane.b32.xlu0 %v1560, 16
      %v1775 = vpop.permute.xlu0 %1774
      %1776 = vrot.lane.b32.xlu0 %v1578, 16
      %v1777 = vpop.permute.xlu0 %1776
      %1778 = vrot.lane.b32.xlu0 %v1596, 16
      %v1779 = vpop.permute.xlu0 %1778
      %1780 = vrot.lane.b32.xlu0 %v1543, 16
      %v1781 = vpop.permute.xlu0 %1780
      %1782 = vrot.lane.b32.xlu0 %v1561, 16
      %v1783 = vpop.permute.xlu0 %1782
      %1784 = vrot.lane.b32.xlu0 %v1579, 16
      %v1785 = vpop.permute.xlu0 %1784
      %1786 = vrot.lane.b32.xlu0 %v1597, 16
      %v1787 = vpop.permute.xlu0 %1786
      %1788 = vrot.lane.b32.xlu0 %v1544, 16
      %v1789 = vpop.permute.xlu0 %1788
      %1790 = vrot.lane.b32.xlu0 %v1562, 16
      %v1791 = vpop.permute.xlu0 %1790
      %1792 = vrot.lane.b32.xlu0 %v1580, 16
      %v1793 = vpop.permute.xlu0 %1792
      %1794 = vrot.lane.b32.xlu0 %v1598, 16
      %v1795 = vpop.permute.xlu0 %1794
      %1796 = vrot.lane.b32.xlu0 %v1545, 16
      %v1797 = vpop.permute.xlu0 %1796
      %1798 = vrot.lane.b32.xlu0 %v1563, 16
      %v1799 = vpop.permute.xlu0 %1798
      %1800 = vrot.lane.b32.xlu0 %v1581, 16
      %v1801 = vpop.permute.xlu0 %1800
      %1802 = vrot.lane.b32.xlu0 %v1599, 16
      %v1803 = vpop.permute.xlu0 %1802
      %1804 = vrot.lane.b32.xlu0 %v1546, 16
      %v1805 = vpop.permute.xlu0 %1804
      %1806 = vrot.lane.b32.xlu0 %v1564, 16
      %v1807 = vpop.permute.xlu0 %1806
      %1808 = vrot.lane.b32.xlu0 %v1582, 16
      %v1809 = vpop.permute.xlu0 %1808
      %1810 = vrot.lane.b32.xlu0 %v1600, 16
      %v1811 = vpop.permute.xlu0 %1810
      %1812 = vrot.lane.b32.xlu0 %v1547, 16
      %v1813 = vpop.permute.xlu0 %1812
      %1814 = vrot.lane.b32.xlu0 %v1565, 16
      %v1815 = vpop.permute.xlu0 %1814
      %1816 = vrot.lane.b32.xlu0 %v1583, 16
      %v1817 = vpop.permute.xlu0 %1816
      %1818 = vrot.lane.b32.xlu0 %v1601, 16
      %v1819 = vpop.permute.xlu0 %1818
      %1820 = vrot.lane.b32.xlu0 %v1548, 16
      %v1821 = vpop.permute.xlu0 %1820
      %1822 = vrot.lane.b32.xlu0 %v1566, 16
      %v1823 = vpop.permute.xlu0 %1822
      %1824 = vrot.lane.b32.xlu0 %v1584, 16
      %v1825 = vpop.permute.xlu0 %1824
      %1826 = vrot.lane.b32.xlu0 %v1602, 16
      %v1827 = vpop.permute.xlu0 %1826
      %1828 = vrot.lane.b32.xlu0 %v1549, 16
      %v1829 = vpop.permute.xlu0 %1828
      %1830 = vrot.lane.b32.xlu0 %v1567, 16
      %v1831 = vpop.permute.xlu0 %1830
      %1832 = vrot.lane.b32.xlu0 %v1585, 16
      %v1833 = vpop.permute.xlu0 %1832
      %1834 = vrot.lane.b32.xlu0 %v1603, 16
      %v1835 = vpop.permute.xlu0 %1834
      %1836 = vrot.lane.b32.xlu0 %v1550, 16
      %v1837 = vpop.permute.xlu0 %1836
      %1838 = vrot.lane.b32.xlu0 %v1568, 16
      %v1839 = vpop.permute.xlu0 %1838
      %1840 = vrot.lane.b32.xlu0 %v1586, 16
      %v1841 = vpop.permute.xlu0 %1840
      %1842 = vrot.lane.b32.xlu0 %v1604, 16
      %v1843 = vpop.permute.xlu0 %1842
      %1844 = vrot.lane.b32.xlu0 %v1551, 16
      %v1845 = vpop.permute.xlu0 %1844
      %1846 = vrot.lane.b32.xlu0 %v1569, 16
      %v1847 = vpop.permute.xlu0 %1846
      %1848 = vrot.lane.b32.xlu0 %v1587, 16
      %v1849 = vpop.permute.xlu0 %1848
      %1850 = vrot.lane.b32.xlu0 %v1605, 16
      %v1851 = vpop.permute.xlu0 %1850
      %1852 = vrot.lane.b32.xlu0 %v1552, 16
      %v1853 = vpop.permute.xlu0 %1852
      %1854 = vrot.lane.b32.xlu0 %v1570, 16
      %v1855 = vpop.permute.xlu0 %1854
      %1856 = vrot.lane.b32.xlu0 %v1588, 16
      %v1857 = vpop.permute.xlu0 %1856
      %1858 = vrot.lane.b32.xlu0 %v1606, 16
      %v1859 = vpop.permute.xlu0 %1858
      %1860 = vrot.lane.b32.xlu0 %v1553, 16
      %v1861 = vpop.permute.xlu0 %1860
      %1862 = vrot.lane.b32.xlu0 %v1571, 16
      %v1863 = vpop.permute.xlu0 %1862
      %1864 = vrot.lane.b32.xlu0 %v1589, 16
      %v1865 = vpop.permute.xlu0 %1864
      %1866 = vrot.lane.b32.xlu0 %v1607, 16
      %v1867 = vpop.permute.xlu0 %1866
      %1868 = vrot.lane.b32.xlu0 %v1554, 16
      %v1869 = vpop.permute.xlu0 %1868
      %1870 = vrot.lane.b32.xlu0 %v1572, 16
      %v1871 = vpop.permute.xlu0 %1870
      %1872 = vrot.lane.b32.xlu0 %v1590, 16
      %v1873 = vpop.permute.xlu0 %1872
      %1874 = vrot.lane.b32.xlu0 %v1608, 16
      %v1875 = vpop.permute.xlu0 %1874
      %1876 = vrot.lane.b32.xlu0 %v1555, 16
      %v1877 = vpop.permute.xlu0 %1876
      %1878 = vrot.lane.b32.xlu0 %v1573, 16
      %v1879 = vpop.permute.xlu0 %1878
      %1880 = vrot.lane.b32.xlu0 %v1591, 16
      %v1881 = vpop.permute.xlu0 %1880
      %1882 = vrot.lane.b32.xlu0 %v1609, 16
      %v1883 = vpop.permute.xlu0 %1882
      %1884 = vrot.lane.b32.xlu0 %v1556, 16
      %v1885 = vpop.permute.xlu0 %1884
      %1886 = vrot.lane.b32.xlu0 %v1574, 16
      %v1887 = vpop.permute.xlu0 %1886
      %1888 = vrot.lane.b32.xlu0 %v1592, 16
      %v1889 = vpop.permute.xlu0 %1888
      %1890 = vrot.lane.b32.xlu0 %v1610, 16
      %v1891 = vpop.permute.xlu0 %1890
      %1892 = vrot.lane.b32.xlu0 %v1557, 16
      %v1893 = vpop.permute.xlu0 %1892
      %1894 = vrot.lane.b32.xlu0 %v1575, 16
      %v1895 = vpop.permute.xlu0 %1894
      %1896 = vrot.lane.b32.xlu0 %v1593, 16
      %v1897 = vpop.permute.xlu0 %1896
      %1898 = vrot.lane.b32.xlu0 %v1611, 16
      %v1899 = vpop.permute.xlu0 %1898
      %v1900 = vlaneseq
      %v1901 = vand.u32 %v1900, 127
      %vm1902 = vcmp.lt.s32.totalorder %v1901, 16
      %v1903 = vsel %vm1902, %v1885, %v1893
      %v1904 = vsel %vm1902, %v1887, %v1895
      %v1905 = vsel %vm1902, %v1889, %v1897
      %v1906 = vsel %vm1902, %v1891, %v1899
      %v1907 = vsel %vm1902, %v1877, %v1885
      %v1908 = vsel %vm1902, %v1879, %v1887
      %v1909 = vsel %vm1902, %v1881, %v1889
      %v1910 = vsel %vm1902, %v1883, %v1891
      %v1911 = vsel %vm1902, %v1869, %v1877
      %v1912 = vsel %vm1902, %v1871, %v1879
      %v1913 = vsel %vm1902, %v1873, %v1881
      %v1914 = vsel %vm1902, %v1875, %v1883
      %v1915 = vsel %vm1902, %v1861, %v1869
      %v1916 = vsel %vm1902, %v1863, %v1871
      %v1917 = vsel %vm1902, %v1865, %v1873
      %v1918 = vsel %vm1902, %v1867, %v1875
      %v1919 = vsel %vm1902, %v1853, %v1861
      %v1920 = vsel %vm1902, %v1855, %v1863
      %v1921 = vsel %vm1902, %v1857, %v1865
      %v1922 = vsel %vm1902, %v1859, %v1867
      %v1923 = vsel %vm1902, %v1845, %v1853
      %v1924 = vsel %vm1902, %v1847, %v1855
      %v1925 = vsel %vm1902, %v1849, %v1857
      %v1926 = vsel %vm1902, %v1851, %v1859
      %v1927 = vsel %vm1902, %v1837, %v1845
      %v1928 = vsel %vm1902, %v1839, %v1847
      %v1929 = vsel %vm1902, %v1841, %v1849
      %v1930 = vsel %vm1902, %v1843, %v1851
      %v1931 = vsel %vm1902, %v1829, %v1837
      %v1932 = vsel %vm1902, %v1831, %v1839
      %v1933 = vsel %vm1902, %v1833, %v1841
      %v1934 = vsel %vm1902, %v1835, %v1843
      %v1935 = vsel %vm1902, %v1821, %v1829
      %v1936 = vsel %vm1902, %v1823, %v1831
      %v1937 = vsel %vm1902, %v1825, %v1833
      %v1938 = vsel %vm1902, %v1827, %v1835
      %v1939 = vsel %vm1902, %v1813, %v1821
      %v1940 = vsel %vm1902, %v1815, %v1823
      %v1941 = vsel %vm1902, %v1817, %v1825
      %v1942 = vsel %vm1902, %v1819, %v1827
      %v1943 = vsel %vm1902, %v1805, %v1813
      %v1944 = vsel %vm1902, %v1807, %v1815
      %v1945 = vsel %vm1902, %v1809, %v1817
      %v1946 = vsel %vm1902, %v1811, %v1819
      %v1947 = vsel %vm1902, %v1797, %v1805
      %v1948 = vsel %vm1902, %v1799, %v1807
      %v1949 = vsel %vm1902, %v1801, %v1809
      %v1950 = vsel %vm1902, %v1803, %v1811
      %v1951 = vsel %vm1902, %v1789, %v1797
      %v1952 = vsel %vm1902, %v1791, %v1799
      %v1953 = vsel %vm1902, %v1793, %v1801
      %v1954 = vsel %vm1902, %v1795, %v1803
      %v1955 = vsel %vm1902, %v1781, %v1789
      %v1956 = vsel %vm1902, %v1783, %v1791
      %v1957 = vsel %vm1902, %v1785, %v1793
      %v1958 = vsel %vm1902, %v1787, %v1795
      %v1959 = vsel %vm1902, %v1773, %v1781
      %v1960 = vsel %vm1902, %v1775, %v1783
      %v1961 = vsel %vm1902, %v1777, %v1785
      %v1962 = vsel %vm1902, %v1779, %v1787
      %v1963 = vsel %vm1902, %v1765, %v1773
      %v1964 = vsel %vm1902, %v1767, %v1775
      %v1965 = vsel %vm1902, %v1769, %v1777
      %v1966 = vsel %vm1902, %v1771, %v1779
      %v1967 = vsel %vm1902, %v1757, %v1765
      %v1968 = vsel %vm1902, %v1759, %v1767
      %v1969 = vsel %vm1902, %v1761, %v1769
      %v1970 = vsel %vm1902, %v1763, %v1771
      %v1971 = vsel %vm1902, %v1893, %v1757
      %v1972 = vsel %vm1902, %v1895, %v1759
      %v1973 = vsel %vm1902, %v1897, %v1761
      %v1974 = vsel %vm1902, %v1899, %v1763
      %v1975 = vadd.f32 %v1612, %v1971
      %v1976 = vadd.f32 %v1613, %v1967
      %v1977 = vadd.f32 %v1614, %v1963
      %v1978 = vadd.f32 %v1615, %v1959
      %v1979 = vadd.f32 %v1616, %v1955
      %v1980 = vadd.f32 %v1617, %v1951
      %v1981 = vadd.f32 %v1618, %v1947
      %v1982 = vadd.f32 %v1619, %v1943
      %v1983 = vadd.f32 %v1620, %v1939
      %v1984 = vadd.f32 %v1621, %v1935
      %v1985 = vadd.f32 %v1622, %v1931
      %v1986 = vadd.f32 %v1623, %v1927
      %v1987 = vadd.f32 %v1624, %v1923
      %v1988 = vadd.f32 %v1625, %v1919
      %v1989 = vadd.f32 %v1626, %v1915
      %v1990 = vadd.f32 %v1627, %v1911
      %v1991 = vadd.f32 %v1628, %v1907
      %v1992 = vadd.f32 %v1629, %v1903
      %v1993 = vadd.f32 %v1630, %v1972
      %v1994 = vadd.f32 %v1631, %v1968
      %v1995 = vadd.f32 %v1632, %v1964
      %v1996 = vadd.f32 %v1633, %v1960
      %v1997 = vadd.f32 %v1634, %v1956
      %v1998 = vadd.f32 %v1635, %v1952
      %v1999 = vadd.f32 %v1636, %v1948
      %v2000 = vadd.f32 %v1637, %v1944
      %v2001 = vadd.f32 %v1638, %v1940
      %v2002 = vadd.f32 %v1639, %v1936
      %v2003 = vadd.f32 %v1640, %v1932
      %v2004 = vadd.f32 %v1641, %v1928
      %v2005 = vadd.f32 %v1642, %v1924
      %v2006 = vadd.f32 %v1643, %v1920
      %v2007 = vadd.f32 %v1644, %v1916
      %v2008 = vadd.f32 %v1645, %v1912
      %v2009 = vadd.f32 %v1646, %v1908
      %v2010 = vadd.f32 %v1647, %v1904
      %v2011 = vadd.f32 %v1648, %v1973
      %v2012 = vadd.f32 %v1649, %v1969
      %v2013 = vadd.f32 %v1650, %v1965
      %v2014 = vadd.f32 %v1651, %v1961
      %v2015 = vadd.f32 %v1652, %v1957
      %v2016 = vadd.f32 %v1653, %v1953
      %v2017 = vadd.f32 %v1654, %v1949
      %v2018 = vadd.f32 %v1655, %v1945
      %v2019 = vadd.f32 %v1656, %v1941
      %v2020 = vadd.f32 %v1657, %v1937
      %v2021 = vadd.f32 %v1658, %v1933
      %v2022 = vadd.f32 %v1659, %v1929
      %v2023 = vadd.f32 %v1660, %v1925
      %v2024 = vadd.f32 %v1661, %v1921
      %v2025 = vadd.f32 %v1662, %v1917
      %v2026 = vadd.f32 %v1663, %v1913
      %v2027 = vadd.f32 %v1664, %v1909
      %v2028 = vadd.f32 %v1665, %v1905
      %v2029 = vadd.f32 %v1666, %v1974
      %v2030 = vadd.f32 %v1667, %v1970
      %v2031 = vadd.f32 %v1668, %v1966
      %v2032 = vadd.f32 %v1669, %v1962
      %v2033 = vadd.f32 %v1670, %v1958
      %v2034 = vadd.f32 %v1671, %v1954
      %v2035 = vadd.f32 %v1672, %v1950
      %v2036 = vadd.f32 %v1673, %v1946
      %v2037 = vadd.f32 %v1674, %v1942
      %v2038 = vadd.f32 %v1675, %v1938
      %v2039 = vadd.f32 %v1676, %v1934
      %v2040 = vadd.f32 %v1677, %v1930
      %v2041 = vadd.f32 %v1678, %v1926
      %v2042 = vadd.f32 %v1679, %v1922
      %v2043 = vadd.f32 %v1680, %v1918
      %v2044 = vadd.f32 %v1681, %v1914
      %v2045 = vadd.f32 %v1682, %v1910
      %v2046 = vadd.f32 %v1683, %v1906
      %2047 = vrot.lane.b32.xlu0 %v1684, 112
      %v2048 = vpop.permute.xlu0 %2047
      %2049 = vrot.lane.b32.xlu0 %v1702, 112
      %v2050 = vpop.permute.xlu0 %2049
      %2051 = vrot.lane.b32.xlu0 %v1720, 112
      %v2052 = vpop.permute.xlu0 %2051
      %2053 = vrot.lane.b32.xlu0 %v1738, 112
      %v2054 = vpop.permute.xlu0 %2053
      %2055 = vrot.lane.b32.xlu0 %v1685, 112
      %v2056 = vpop.permute.xlu0 %2055
      %2057 = vrot.lane.b32.xlu0 %v1703, 112
      %v2058 = vpop.permute.xlu0 %2057
      %2059 = vrot.lane.b32.xlu0 %v1721, 112
      %v2060 = vpop.permute.xlu0 %2059
      %2061 = vrot.lane.b32.xlu0 %v1739, 112
      %v2062 = vpop.permute.xlu0 %2061
      %2063 = vrot.lane.b32.xlu0 %v1686, 112
      %v2064 = vpop.permute.xlu0 %2063
      %2065 = vrot.lane.b32.xlu0 %v1704, 112
      %v2066 = vpop.permute.xlu0 %2065
      %2067 = vrot.lane.b32.xlu0 %v1722, 112
      %v2068 = vpop.permute.xlu0 %2067
      %2069 = vrot.lane.b32.xlu0 %v1740, 112
      %v2070 = vpop.permute.xlu0 %2069
      %2071 = vrot.lane.b32.xlu0 %v1687, 112
      %v2072 = vpop.permute.xlu0 %2071
      %2073 = vrot.lane.b32.xlu0 %v1705, 112
      %v2074 = vpop.permute.xlu0 %2073
      %2075 = vrot.lane.b32.xlu0 %v1723, 112
      %v2076 = vpop.permute.xlu0 %2075
      %2077 = vrot.lane.b32.xlu0 %v1741, 112
      %v2078 = vpop.permute.xlu0 %2077
      %2079 = vrot.lane.b32.xlu0 %v1688, 112
      %v2080 = vpop.permute.xlu0 %2079
      %2081 = vrot.lane.b32.xlu0 %v1706, 112
      %v2082 = vpop.permute.xlu0 %2081
      %2083 = vrot.lane.b32.xlu0 %v1724, 112
      %v2084 = vpop.permute.xlu0 %2083
      %2085 = vrot.lane.b32.xlu0 %v1742, 112
      %v2086 = vpop.permute.xlu0 %2085
      %2087 = vrot.lane.b32.xlu0 %v1689, 112
      %v2088 = vpop.permute.xlu0 %2087
      %2089 = vrot.lane.b32.xlu0 %v1707, 112
      %v2090 = vpop.permute.xlu0 %2089
      %2091 = vrot.lane.b32.xlu0 %v1725, 112
      %v2092 = vpop.permute.xlu0 %2091
      %2093 = vrot.lane.b32.xlu0 %v1743, 112
      %v2094 = vpop.permute.xlu0 %2093
      %2095 = vrot.lane.b32.xlu0 %v1690, 112
      %v2096 = vpop.permute.xlu0 %2095
      %2097 = vrot.lane.b32.xlu0 %v1708, 112
      %v2098 = vpop.permute.xlu0 %2097
      %2099 = vrot.lane.b32.xlu0 %v1726, 112
      %v2100 = vpop.permute.xlu0 %2099
      %2101 = vrot.lane.b32.xlu0 %v1744, 112
      %v2102 = vpop.permute.xlu0 %2101
      %2103 = vrot.lane.b32.xlu0 %v1691, 112
      %v2104 = vpop.permute.xlu0 %2103
      %2105 = vrot.lane.b32.xlu0 %v1709, 112
      %v2106 = vpop.permute.xlu0 %2105
      %2107 = vrot.lane.b32.xlu0 %v1727, 112
      %v2108 = vpop.permute.xlu0 %2107
      %2109 = vrot.lane.b32.xlu0 %v1745, 112
      %v2110 = vpop.permute.xlu0 %2109
      %2111 = vrot.lane.b32.xlu0 %v1692, 112
      %v2112 = vpop.permute.xlu0 %2111
      %2113 = vrot.lane.b32.xlu0 %v1710, 112
      %v2114 = vpop.permute.xlu0 %2113
      %2115 = vrot.lane.b32.xlu0 %v1728, 112
      %v2116 = vpop.permute.xlu0 %2115
      %2117 = vrot.lane.b32.xlu0 %v1746, 112
      %v2118 = vpop.permute.xlu0 %2117
      %2119 = vrot.lane.b32.xlu0 %v1693, 112
      %v2120 = vpop.permute.xlu0 %2119
      %2121 = vrot.lane.b32.xlu0 %v1711, 112
      %v2122 = vpop.permute.xlu0 %2121
      %2123 = vrot.lane.b32.xlu0 %v1729, 112
      %v2124 = vpop.permute.xlu0 %2123
      %2125 = vrot.lane.b32.xlu0 %v1747, 112
      %v2126 = vpop.permute.xlu0 %2125
      %2127 = vrot.lane.b32.xlu0 %v1694, 112
      %v2128 = vpop.permute.xlu0 %2127
      %2129 = vrot.lane.b32.xlu0 %v1712, 112
      %v2130 = vpop.permute.xlu0 %2129
      %2131 = vrot.lane.b32.xlu0 %v1730, 112
      %v2132 = vpop.permute.xlu0 %2131
      %2133 = vrot.lane.b32.xlu0 %v1748, 112
      %v2134 = vpop.permute.xlu0 %2133
      %2135 = vrot.lane.b32.xlu0 %v1695, 112
      %v2136 = vpop.permute.xlu0 %2135
      %2137 = vrot.lane.b32.xlu0 %v1713, 112
      %v2138 = vpop.permute.xlu0 %2137
      %2139 = vrot.lane.b32.xlu0 %v1731, 112
      %v2140 = vpop.permute.xlu0 %2139
      %2141 = vrot.lane.b32.xlu0 %v1749, 112
      %v2142 = vpop.permute.xlu0 %2141
      %2143 = vrot.lane.b32.xlu0 %v1696, 112
      %v2144 = vpop.permute.xlu0 %2143
      %2145 = vrot.lane.b32.xlu0 %v1714, 112
      %v2146 = vpop.permute.xlu0 %2145
      %2147 = vrot.lane.b32.xlu0 %v1732, 112
      %v2148 = vpop.permute.xlu0 %2147
      %2149 = vrot.lane.b32.xlu0 %v1750, 112
      %v2150 = vpop.permute.xlu0 %2149
      %2151 = vrot.lane.b32.xlu0 %v1697, 112
      %v2152 = vpop.permute.xlu0 %2151
      %2153 = vrot.lane.b32.xlu0 %v1715, 112
      %v2154 = vpop.permute.xlu0 %2153
      %2155 = vrot.lane.b32.xlu0 %v1733, 112
      %v2156 = vpop.permute.xlu0 %2155
      %2157 = vrot.lane.b32.xlu0 %v1751, 112
      %v2158 = vpop.permute.xlu0 %2157
      %2159 = vrot.lane.b32.xlu0 %v1698, 112
      %v2160 = vpop.permute.xlu0 %2159
      %2161 = vrot.lane.b32.xlu0 %v1716, 112
      %v2162 = vpop.permute.xlu0 %2161
      %2163 = vrot.lane.b32.xlu0 %v1734, 112
      %v2164 = vpop.permute.xlu0 %2163
      %2165 = vrot.lane.b32.xlu0 %v1752, 112
      %v2166 = vpop.permute.xlu0 %2165
      %2167 = vrot.lane.b32.xlu0 %v1699, 112
      %v2168 = vpop.permute.xlu0 %2167
      %2169 = vrot.lane.b32.xlu0 %v1717, 112
      %v2170 = vpop.permute.xlu0 %2169
      %2171 = vrot.lane.b32.xlu0 %v1735, 112
      %v2172 = vpop.permute.xlu0 %2171
      %2173 = vrot.lane.b32.xlu0 %v1753, 112
      %v2174 = vpop.permute.xlu0 %2173
      %2175 = vrot.lane.b32.xlu0 %v1700, 112
      %v2176 = vpop.permute.xlu0 %2175
      %2177 = vrot.lane.b32.xlu0 %v1718, 112
      %v2178 = vpop.permute.xlu0 %2177
      %2179 = vrot.lane.b32.xlu0 %v1736, 112
      %v2180 = vpop.permute.xlu0 %2179
      %2181 = vrot.lane.b32.xlu0 %v1754, 112
      %v2182 = vpop.permute.xlu0 %2181
      %2183 = vrot.lane.b32.xlu0 %v1701, 112
      %v2184 = vpop.permute.xlu0 %2183
      %2185 = vrot.lane.b32.xlu0 %v1719, 112
      %v2186 = vpop.permute.xlu0 %2185
      %2187 = vrot.lane.b32.xlu0 %v1737, 112
      %v2188 = vpop.permute.xlu0 %2187
      %2189 = vrot.lane.b32.xlu0 %v1755, 112
      %v2190 = vpop.permute.xlu0 %2189
      %vm2191 = vcmp.lt.s32.totalorder %v1901, 112
      %v2192 = vsel %vm2191, %v2176, %v2184
      %v2193 = vsel %vm2191, %v2178, %v2186
      %v2194 = vsel %vm2191, %v2180, %v2188
      %v2195 = vsel %vm2191, %v2182, %v2190
      %v2196 = vsel %vm2191, %v2168, %v2176
      %v2197 = vsel %vm2191, %v2170, %v2178
      %v2198 = vsel %vm2191, %v2172, %v2180
      %v2199 = vsel %vm2191, %v2174, %v2182
      %v2200 = vsel %vm2191, %v2160, %v2168
      %v2201 = vsel %vm2191, %v2162, %v2170
      %v2202 = vsel %vm2191, %v2164, %v2172
      %v2203 = vsel %vm2191, %v2166, %v2174
      %v2204 = vsel %vm2191, %v2152, %v2160
      %v2205 = vsel %vm2191, %v2154, %v2162
      %v2206 = vsel %vm2191, %v2156, %v2164
      %v2207 = vsel %vm2191, %v2158, %v2166
      %v2208 = vsel %vm2191, %v2144, %v2152
      %v2209 = vsel %vm2191, %v2146, %v2154
      %v2210 = vsel %vm2191, %v2148, %v2156
      %v2211 = vsel %vm2191, %v2150, %v2158
      %v2212 = vsel %vm2191, %v2136, %v2144
      %v2213 = vsel %vm2191, %v2138, %v2146
      %v2214 = vsel %vm2191, %v2140, %v2148
      %v2215 = vsel %vm2191, %v2142, %v2150
      %v2216 = vsel %vm2191, %v2128, %v2136
      %v2217 = vsel %vm2191, %v2130, %v2138
      %v2218 = vsel %vm2191, %v2132, %v2140
      %v2219 = vsel %vm2191, %v2134, %v2142
      %v2220 = vsel %vm2191, %v2120, %v2128
      %v2221 = vsel %vm2191, %v2122, %v2130
      %v2222 = vsel %vm2191, %v2124, %v2132
      %v2223 = vsel %vm2191, %v2126, %v2134
      %v2224 = vsel %vm2191, %v2112, %v2120
      %v2225 = vsel %vm2191, %v2114, %v2122
      %v2226 = vsel %vm2191, %v2116, %v2124
      %v2227 = vsel %vm2191, %v2118, %v2126
      %v2228 = vsel %vm2191, %v2104, %v2112
      %v2229 = vsel %vm2191, %v2106, %v2114
      %v2230 = vsel %vm2191, %v2108, %v2116
      %v2231 = vsel %vm2191, %v2110, %v2118
      %v2232 = vsel %vm2191, %v2096, %v2104
      %v2233 = vsel %vm2191, %v2098, %v2106
      %v2234 = vsel %vm2191, %v2100, %v2108
      %v2235 = vsel %vm2191, %v2102, %v2110
      %v2236 = vsel %vm2191, %v2088, %v2096
      %v2237 = vsel %vm2191, %v2090, %v2098
      %v2238 = vsel %vm2191, %v2092, %v2100
      %v2239 = vsel %vm2191, %v2094, %v2102
      %v2240 = vsel %vm2191, %v2080, %v2088
      %v2241 = vsel %vm2191, %v2082, %v2090
      %v2242 = vsel %vm2191, %v2084, %v2092
      %v2243 = vsel %vm2191, %v2086, %v2094
      %v2244 = vsel %vm2191, %v2072, %v2080
      %v2245 = vsel %vm2191, %v2074, %v2082
      %v2246 = vsel %vm2191, %v2076, %v2084
      %v2247 = vsel %vm2191, %v2078, %v2086
      %v2248 = vsel %vm2191, %v2064, %v2072
      %v2249 = vsel %vm2191, %v2066, %v2074
      %v2250 = vsel %vm2191, %v2068, %v2076
      %v2251 = vsel %vm2191, %v2070, %v2078
      %v2252 = vsel %vm2191, %v2056, %v2064
      %v2253 = vsel %vm2191, %v2058, %v2066
      %v2254 = vsel %vm2191, %v2060, %v2068
      %v2255 = vsel %vm2191, %v2062, %v2070
      %v2256 = vsel %vm2191, %v2048, %v2056
      %v2257 = vsel %vm2191, %v2050, %v2058
      %v2258 = vsel %vm2191, %v2052, %v2060
      %v2259 = vsel %vm2191, %v2054, %v2062
      %v2260 = vsel %vm2191, %v2184, %v2048
      %v2261 = vsel %vm2191, %v2186, %v2050
      %v2262 = vsel %vm2191, %v2188, %v2052
      %v2263 = vsel %vm2191, %v2190, %v2054
      %v2264 = vadd.f32 %v1975, %v2256
      %v2265 = vadd.f32 %v1976, %v2252
      %v2266 = vadd.f32 %v1977, %v2248
      %v2267 = vadd.f32 %v1978, %v2244
      %v2268 = vadd.f32 %v1979, %v2240
      %v2269 = vadd.f32 %v1980, %v2236
      %v2270 = vadd.f32 %v1981, %v2232
      %v2271 = vadd.f32 %v1982, %v2228
      %v2272 = vadd.f32 %v1983, %v2224
      %v2273 = vadd.f32 %v1984, %v2220
      %v2274 = vadd.f32 %v1985, %v2216
      %v2275 = vadd.f32 %v1986, %v2212
      %v2276 = vadd.f32 %v1987, %v2208
      %v2277 = vadd.f32 %v1988, %v2204
      %v2278 = vadd.f32 %v1989, %v2200
      %v2279 = vadd.f32 %v1990, %v2196
      %v2280 = vadd.f32 %v1991, %v2192
      %v2281 = vadd.f32 %v1992, %v2260
      %v2282 = vadd.f32 %v1993, %v2257
      %v2283 = vadd.f32 %v1994, %v2253
      %v2284 = vadd.f32 %v1995, %v2249
      %v2285 = vadd.f32 %v1996, %v2245
      %v2286 = vadd.f32 %v1997, %v2241
      %v2287 = vadd.f32 %v1998, %v2237
      %v2288 = vadd.f32 %v1999, %v2233
      %v2289 = vadd.f32 %v2000, %v2229
      %v2290 = vadd.f32 %v2001, %v2225
      %v2291 = vadd.f32 %v2002, %v2221
      %v2292 = vadd.f32 %v2003, %v2217
      %v2293 = vadd.f32 %v2004, %v2213
      %v2294 = vadd.f32 %v2005, %v2209
      %v2295 = vadd.f32 %v2006, %v2205
      %v2296 = vadd.f32 %v2007, %v2201
      %v2297 = vadd.f32 %v2008, %v2197
      %v2298 = vadd.f32 %v2009, %v2193
      %v2299 = vadd.f32 %v2010, %v2261
      %v2300 = vadd.f32 %v2011, %v2258
      %v2301 = vadd.f32 %v2012, %v2254
      %v2302 = vadd.f32 %v2013, %v2250
      %v2303 = vadd.f32 %v2014, %v2246
      %v2304 = vadd.f32 %v2015, %v2242
      %v2305 = vadd.f32 %v2016, %v2238
      %v2306 = vadd.f32 %v2017, %v2234
      %v2307 = vadd.f32 %v2018, %v2230
      %v2308 = vadd.f32 %v2019, %v2226
      %v2309 = vadd.f32 %v2020, %v2222
      %v2310 = vadd.f32 %v2021, %v2218
      %v2311 = vadd.f32 %v2022, %v2214
      %v2312 = vadd.f32 %v2023, %v2210
      %v2313 = vadd.f32 %v2024, %v2206
      %v2314 = vadd.f32 %v2025, %v2202
      %v2315 = vadd.f32 %v2026, %v2198
      %v2316 = vadd.f32 %v2027, %v2194
      %v2317 = vadd.f32 %v2028, %v2262
      %v2318 = vadd.f32 %v2029, %v2259
      %v2319 = vadd.f32 %v2030, %v2255
      %v2320 = vadd.f32 %v2031, %v2251
      %v2321 = vadd.f32 %v2032, %v2247
      %v2322 = vadd.f32 %v2033, %v2243
      %v2323 = vadd.f32 %v2034, %v2239
      %v2324 = vadd.f32 %v2035, %v2235
      %v2325 = vadd.f32 %v2036, %v2231
      %v2326 = vadd.f32 %v2037, %v2227
      %v2327 = vadd.f32 %v2038, %v2223
      %v2328 = vadd.f32 %v2039, %v2219
      %v2329 = vadd.f32 %v2040, %v2215
      %v2330 = vadd.f32 %v2041, %v2211
      %v2331 = vadd.f32 %v2042, %v2207
      %v2332 = vadd.f32 %v2043, %v2203
      %v2333 = vadd.f32 %v2044, %v2199
      %v2334 = vadd.f32 %v2045, %v2195
      %v2335 = vadd.f32 %v2046, %v2263
      %v2336 = vld [vmem:[%s3] sm:$0xff]
      %v2337 = vld [vmem:[%s3 + $0x8] sm:$0xff]
      %v2338 = vld [vmem:[%s3 + $0x10] sm:$0xff]
      %v2339 = vld [vmem:[%s3 + $0x18] sm:$0xff]
      %2341 = vset.pattern.permute.xlu0 0
      %2342 = vperm.xlu0 %2341, %v2336
      %v2343 = vpop.permute.xlu0 %2342
      %2346 = vset.pattern.permute.xlu0 0
      %2347 = vperm.xlu0 %2346, %v2337
      %v2348 = vpop.permute.xlu0 %2347
      %2351 = vset.pattern.permute.xlu0 0
      %2352 = vperm.xlu0 %2351, %v2338
      %v2353 = vpop.permute.xlu0 %2352
      %2356 = vset.pattern.permute.xlu0 0
      %2357 = vperm.xlu0 %2356, %v2339
      %v2358 = vpop.permute.xlu0 %2357
      %v2360 = vadd.f32 %v2264, %v2343
      %v2361 = vadd.f32 %v2265, %v2343
      %v2362 = vadd.f32 %v2266, %v2343
      %v2363 = vadd.f32 %v2267, %v2343
      %v2364 = vadd.f32 %v2268, %v2343
      %v2365 = vadd.f32 %v2269, %v2343
      %v2366 = vadd.f32 %v2270, %v2343
      %v2367 = vadd.f32 %v2271, %v2343
      %v2368 = vadd.f32 %v2272, %v2343
      %v2369 = vadd.f32 %v2273, %v2343
      %v2370 = vadd.f32 %v2274, %v2343
      %v2371 = vadd.f32 %v2275, %v2343
      %v2372 = vadd.f32 %v2276, %v2343
      %v2373 = vadd.f32 %v2277, %v2343
      %v2374 = vadd.f32 %v2278, %v2343
      %v2375 = vadd.f32 %v2279, %v2343
      %v2376 = vadd.f32 %v2280, %v2343
      %v2377 = vadd.f32 %v2281, %v2343
      %v2378 = vadd.f32 %v2282, %v2348
      %v2379 = vadd.f32 %v2283, %v2348
      %v2380 = vadd.f32 %v2284, %v2348
      %v2381 = vadd.f32 %v2285, %v2348
      %v2382 = vadd.f32 %v2286, %v2348
      %v2383 = vadd.f32 %v2287, %v2348
      %v2384 = vadd.f32 %v2288, %v2348
      %v2385 = vadd.f32 %v2289, %v2348
      %v2386 = vadd.f32 %v2290, %v2348
      %v2387 = vadd.f32 %v2291, %v2348
      %v2388 = vadd.f32 %v2292, %v2348
      %v2389 = vadd.f32 %v2293, %v2348
      %v2390 = vadd.f32 %v2294, %v2348
      %v2391 = vadd.f32 %v2295, %v2348
      %v2392 = vadd.f32 %v2296, %v2348
      %v2393 = vadd.f32 %v2297, %v2348
      %v2394 = vadd.f32 %v2298, %v2348
      %v2395 = vadd.f32 %v2299, %v2348
      %v2396 = vadd.f32 %v2300, %v2353
      %v2397 = vadd.f32 %v2301, %v2353
      %v2398 = vadd.f32 %v2302, %v2353
      %v2399 = vadd.f32 %v2303, %v2353
      %v2400 = vadd.f32 %v2304, %v2353
      %v2401 = vadd.f32 %v2305, %v2353
      %v2402 = vadd.f32 %v2306, %v2353
      %v2403 = vadd.f32 %v2307, %v2353
      %v2404 = vadd.f32 %v2308, %v2353
      %v2405 = vadd.f32 %v2309, %v2353
      %v2406 = vadd.f32 %v2310, %v2353
      %v2407 = vadd.f32 %v2311, %v2353
      %v2408 = vadd.f32 %v2312, %v2353
      %v2409 = vadd.f32 %v2313, %v2353
      %v2410 = vadd.f32 %v2314, %v2353
      %v2411 = vadd.f32 %v2315, %v2353
      %v2412 = vadd.f32 %v2316, %v2353
      %v2413 = vadd.f32 %v2317, %v2353
      %v2414 = vadd.f32 %v2318, %v2358
      %v2415 = vadd.f32 %v2319, %v2358
      %v2416 = vadd.f32 %v2320, %v2358
      %v2417 = vadd.f32 %v2321, %v2358
      %v2418 = vadd.f32 %v2322, %v2358
      %v2419 = vadd.f32 %v2323, %v2358
      %v2420 = vadd.f32 %v2324, %v2358
      %v2421 = vadd.f32 %v2325, %v2358
      %v2422 = vadd.f32 %v2326, %v2358
      %v2423 = vadd.f32 %v2327, %v2358
      %v2424 = vadd.f32 %v2328, %v2358
      %v2425 = vadd.f32 %v2329, %v2358
      %v2426 = vadd.f32 %v2330, %v2358
      %v2427 = vadd.f32 %v2331, %v2358
      %v2428 = vadd.f32 %v2332, %v2358
      %v2429 = vadd.f32 %v2333, %v2358
      %v2430 = vadd.f32 %v2334, %v2358
      %v2431 = vadd.f32 %v2335, %v2358
      %v2435 = vperm.slane %v306, 0
      %v2436 = vperm.slane %v306, 1
      %v2437 = vperm.slane %v306, 2
      %v2438 = vperm.slane %v306, 3
      %v2439 = vperm.slane %v306, 4
      %v2440 = vperm.slane %v306, 5
      %v2441 = vperm.slane %v306, 6
      %v2442 = vperm.slane %v306, 7
      %v2443 = vperm.slane %v308, 0
      %v2444 = vperm.slane %v308, 1
      %v2445 = vperm.slane %v308, 2
      %v2446 = vperm.slane %v308, 3
      %v2447 = vperm.slane %v308, 4
      %v2448 = vperm.slane %v308, 5
      %v2449 = vperm.slane %v308, 6
      %v2450 = vperm.slane %v308, 7
      %v2451 = vperm.slane %v310, 0
      %v2452 = vperm.slane %v310, 1
      %v2471 = vmul.f32 %v2360, %v2435
      %v2472 = vmul.f32 %v2361, %v2436
      %v2473 = vmul.f32 %v2362, %v2437
      %v2474 = vmul.f32 %v2363, %v2438
      %v2475 = vmul.f32 %v2364, %v2439
      %v2476 = vmul.f32 %v2365, %v2440
      %v2477 = vmul.f32 %v2366, %v2441
      %v2478 = vmul.f32 %v2367, %v2442
      %v2479 = vmul.f32 %v2368, %v2443
      %v2480 = vmul.f32 %v2369, %v2444
      %v2481 = vmul.f32 %v2370, %v2445
      %v2482 = vmul.f32 %v2371, %v2446
      %v2483 = vmul.f32 %v2372, %v2447
      %v2484 = vmul.f32 %v2373, %v2448
      %v2485 = vmul.f32 %v2374, %v2449
      %v2486 = vmul.f32 %v2375, %v2450
      %v2487 = vmul.f32 %v2376, %v2451
      %v2488 = vmul.f32 %v2377, %v2452
      %v2489 = vmul.f32 %v2378, %v2435
      %v2490 = vmul.f32 %v2379, %v2436
      %v2491 = vmul.f32 %v2380, %v2437
      %v2492 = vmul.f32 %v2381, %v2438
      %v2493 = vmul.f32 %v2382, %v2439
      %v2494 = vmul.f32 %v2383, %v2440
      %v2495 = vmul.f32 %v2384, %v2441
      %v2496 = vmul.f32 %v2385, %v2442
      %v2497 = vmul.f32 %v2386, %v2443
      %v2498 = vmul.f32 %v2387, %v2444
      %v2499 = vmul.f32 %v2388, %v2445
      %v2500 = vmul.f32 %v2389, %v2446
      %v2501 = vmul.f32 %v2390, %v2447
      %v2502 = vmul.f32 %v2391, %v2448
      %v2503 = vmul.f32 %v2392, %v2449
      %v2504 = vmul.f32 %v2393, %v2450
      %v2505 = vmul.f32 %v2394, %v2451
      %v2506 = vmul.f32 %v2395, %v2452
      %v2507 = vmul.f32 %v2396, %v2435
      %v2508 = vmul.f32 %v2397, %v2436
      %v2509 = vmul.f32 %v2398, %v2437
      %v2510 = vmul.f32 %v2399, %v2438
      %v2511 = vmul.f32 %v2400, %v2439
      %v2512 = vmul.f32 %v2401, %v2440
      %v2513 = vmul.f32 %v2402, %v2441
      %v2514 = vmul.f32 %v2403, %v2442
      %v2515 = vmul.f32 %v2404, %v2443
      %v2516 = vmul.f32 %v2405, %v2444
      %v2517 = vmul.f32 %v2406, %v2445
      %v2518 = vmul.f32 %v2407, %v2446
      %v2519 = vmul.f32 %v2408, %v2447
      %v2520 = vmul.f32 %v2409, %v2448
      %v2521 = vmul.f32 %v2410, %v2449
      %v2522 = vmul.f32 %v2411, %v2450
      %v2523 = vmul.f32 %v2412, %v2451
      %v2524 = vmul.f32 %v2413, %v2452
      %v2525 = vmul.f32 %v2414, %v2435
      %v2526 = vmul.f32 %v2415, %v2436
      %v2527 = vmul.f32 %v2416, %v2437
      %v2528 = vmul.f32 %v2417, %v2438
      %v2529 = vmul.f32 %v2418, %v2439
      %v2530 = vmul.f32 %v2419, %v2440
      %v2531 = vmul.f32 %v2420, %v2441
      %v2532 = vmul.f32 %v2421, %v2442
      %v2533 = vmul.f32 %v2422, %v2443
      %v2534 = vmul.f32 %v2423, %v2444
      %v2535 = vmul.f32 %v2424, %v2445
      %v2536 = vmul.f32 %v2425, %v2446
      %v2537 = vmul.f32 %v2426, %v2447
      %v2538 = vmul.f32 %v2427, %v2448
      %v2539 = vmul.f32 %v2428, %v2449
      %v2540 = vmul.f32 %v2429, %v2450
      %v2541 = vmul.f32 %v2430, %v2451
      %v2542 = vmul.f32 %v2431, %v2452
      %v2543 = vld [vmem:[%s4] sm:$0xf]
      %v2544 = vld [vmem:[%s4 + $0x4] sm:$0xf]
      %v2545 = vld [vmem:[%s4 + $0x8] sm:$0xf]
      %v2546 = vld [vmem:[%s4 + $0xc] sm:$0xf]
      %v2547 = vld [vmem:[%s4 + $0x10] sm:$0xf]
      %v2548 = vld [vmem:[%s4 + $0x14] sm:$0xf]
      %v2549 = vld [vmem:[%s4 + $0x18] sm:$0xf]
      %v2550 = vld [vmem:[%s4 + $0x1c] sm:$0xf]
      %v2551 = vld [vmem:[%s4 + $0x20] sm:$0xf]
      %v2552 = vld [vmem:[%s4 + $0x24] sm:$0xf]
      %v2553 = vld [vmem:[%s4 + $0x28] sm:$0xf]
      %v2554 = vld [vmem:[%s4 + $0x2c] sm:$0xf]
      %2555 = vrot.lane.b32.xlu0 %v2471, 1
      %v2556 = vpop.permute.xlu0 %2555
      %2557 = vrot.lane.b32.xlu0 %v2489, 1
      %v2558 = vpop.permute.xlu0 %2557
      %2559 = vrot.lane.b32.xlu0 %v2507, 1
      %v2560 = vpop.permute.xlu0 %2559
      %2561 = vrot.lane.b32.xlu0 %v2525, 1
      %v2562 = vpop.permute.xlu0 %2561
      %2563 = vrot.lane.b32.xlu0 %v2472, 1
      %v2564 = vpop.permute.xlu0 %2563
      %2565 = vrot.lane.b32.xlu0 %v2490, 1
      %v2566 = vpop.permute.xlu0 %2565
      %2567 = vrot.lane.b32.xlu0 %v2508, 1
      %v2568 = vpop.permute.xlu0 %2567
      %2569 = vrot.lane.b32.xlu0 %v2526, 1
      %v2570 = vpop.permute.xlu0 %2569
      %2571 = vrot.lane.b32.xlu0 %v2473, 1
      %v2572 = vpop.permute.xlu0 %2571
      %2573 = vrot.lane.b32.xlu0 %v2491, 1
      %v2574 = vpop.permute.xlu0 %2573
      %2575 = vrot.lane.b32.xlu0 %v2509, 1
      %v2576 = vpop.permute.xlu0 %2575
      %2577 = vrot.lane.b32.xlu0 %v2527, 1
      %v2578 = vpop.permute.xlu0 %2577
      %2579 = vrot.lane.b32.xlu0 %v2474, 1
      %v2580 = vpop.permute.xlu0 %2579
      %2581 = vrot.lane.b32.xlu0 %v2492, 1
      %v2582 = vpop.permute.xlu0 %2581
      %2583 = vrot.lane.b32.xlu0 %v2510, 1
      %v2584 = vpop.permute.xlu0 %2583
      %2585 = vrot.lane.b32.xlu0 %v2528, 1
      %v2586 = vpop.permute.xlu0 %2585
      %2587 = vrot.lane.b32.xlu0 %v2475, 1
      %v2588 = vpop.permute.xlu0 %2587
      %2589 = vrot.lane.b32.xlu0 %v2493, 1
      %v2590 = vpop.permute.xlu0 %2589
      %2591 = vrot.lane.b32.xlu0 %v2511, 1
      %v2592 = vpop.permute.xlu0 %2591
      %2593 = vrot.lane.b32.xlu0 %v2529, 1
      %v2594 = vpop.permute.xlu0 %2593
      %2595 = vrot.lane.b32.xlu0 %v2476, 1
      %v2596 = vpop.permute.xlu0 %2595
      %2597 = vrot.lane.b32.xlu0 %v2494, 1
      %v2598 = vpop.permute.xlu0 %2597
      %2599 = vrot.lane.b32.xlu0 %v2512, 1
      %v2600 = vpop.permute.xlu0 %2599
      %2601 = vrot.lane.b32.xlu0 %v2530, 1
      %v2602 = vpop.permute.xlu0 %2601
      %2603 = vrot.lane.b32.xlu0 %v2477, 1
      %v2604 = vpop.permute.xlu0 %2603
      %2605 = vrot.lane.b32.xlu0 %v2495, 1
      %v2606 = vpop.permute.xlu0 %2605
      %2607 = vrot.lane.b32.xlu0 %v2513, 1
      %v2608 = vpop.permute.xlu0 %2607
      %2609 = vrot.lane.b32.xlu0 %v2531, 1
      %v2610 = vpop.permute.xlu0 %2609
      %2611 = vrot.lane.b32.xlu0 %v2478, 1
      %v2612 = vpop.permute.xlu0 %2611
      %2613 = vrot.lane.b32.xlu0 %v2496, 1
      %v2614 = vpop.permute.xlu0 %2613
      %2615 = vrot.lane.b32.xlu0 %v2514, 1
      %v2616 = vpop.permute.xlu0 %2615
      %2617 = vrot.lane.b32.xlu0 %v2532, 1
      %v2618 = vpop.permute.xlu0 %2617
      %2619 = vrot.lane.b32.xlu0 %v2479, 1
      %v2620 = vpop.permute.xlu0 %2619
      %2621 = vrot.lane.b32.xlu0 %v2497, 1
      %v2622 = vpop.permute.xlu0 %2621
      %2623 = vrot.lane.b32.xlu0 %v2515, 1
      %v2624 = vpop.permute.xlu0 %2623
      %2625 = vrot.lane.b32.xlu0 %v2533, 1
      %v2626 = vpop.permute.xlu0 %2625
      %2627 = vrot.lane.b32.xlu0 %v2480, 1
      %v2628 = vpop.permute.xlu0 %2627
      %2629 = vrot.lane.b32.xlu0 %v2498, 1
      %v2630 = vpop.permute.xlu0 %2629
      %2631 = vrot.lane.b32.xlu0 %v2516, 1
      %v2632 = vpop.permute.xlu0 %2631
      %2633 = vrot.lane.b32.xlu0 %v2534, 1
      %v2634 = vpop.permute.xlu0 %2633
      %2635 = vrot.lane.b32.xlu0 %v2481, 1
      %v2636 = vpop.permute.xlu0 %2635
      %2637 = vrot.lane.b32.xlu0 %v2499, 1
      %v2638 = vpop.permute.xlu0 %2637
      %2639 = vrot.lane.b32.xlu0 %v2517, 1
      %v2640 = vpop.permute.xlu0 %2639
      %2641 = vrot.lane.b32.xlu0 %v2535, 1
      %v2642 = vpop.permute.xlu0 %2641
      %2643 = vrot.lane.b32.xlu0 %v2482, 1
      %v2644 = vpop.permute.xlu0 %2643
      %2645 = vrot.lane.b32.xlu0 %v2500, 1
      %v2646 = vpop.permute.xlu0 %2645
      %2647 = vrot.lane.b32.xlu0 %v2518, 1
      %v2648 = vpop.permute.xlu0 %2647
      %2649 = vrot.lane.b32.xlu0 %v2536, 1
      %v2650 = vpop.permute.xlu0 %2649
      %2651 = vrot.lane.b32.xlu0 %v2483, 1
      %v2652 = vpop.permute.xlu0 %2651
      %2653 = vrot.lane.b32.xlu0 %v2501, 1
      %v2654 = vpop.permute.xlu0 %2653
      %2655 = vrot.lane.b32.xlu0 %v2519, 1
      %v2656 = vpop.permute.xlu0 %2655
      %2657 = vrot.lane.b32.xlu0 %v2537, 1
      %v2658 = vpop.permute.xlu0 %2657
      %2659 = vrot.lane.b32.xlu0 %v2484, 1
      %v2660 = vpop.permute.xlu0 %2659
      %2661 = vrot.lane.b32.xlu0 %v2502, 1
      %v2662 = vpop.permute.xlu0 %2661
      %2663 = vrot.lane.b32.xlu0 %v2520, 1
      %v2664 = vpop.permute.xlu0 %2663
      %2665 = vrot.lane.b32.xlu0 %v2538, 1
      %v2666 = vpop.permute.xlu0 %2665
      %2667 = vrot.lane.b32.xlu0 %v2485, 1
      %v2668 = vpop.permute.xlu0 %2667
      %2669 = vrot.lane.b32.xlu0 %v2503, 1
      %v2670 = vpop.permute.xlu0 %2669
      %2671 = vrot.lane.b32.xlu0 %v2521, 1
      %v2672 = vpop.permute.xlu0 %2671
      %2673 = vrot.lane.b32.xlu0 %v2539, 1
      %v2674 = vpop.permute.xlu0 %2673
      %2675 = vrot.lane.b32.xlu0 %v2486, 1
      %v2676 = vpop.permute.xlu0 %2675
      %2677 = vrot.lane.b32.xlu0 %v2504, 1
      %v2678 = vpop.permute.xlu0 %2677
      %2679 = vrot.lane.b32.xlu0 %v2522, 1
      %v2680 = vpop.permute.xlu0 %2679
      %2681 = vrot.lane.b32.xlu0 %v2540, 1
      %v2682 = vpop.permute.xlu0 %2681
      %2683 = vrot.lane.b32.xlu0 %v2487, 1
      %v2684 = vpop.permute.xlu0 %2683
      %2685 = vrot.lane.b32.xlu0 %v2505, 1
      %v2686 = vpop.permute.xlu0 %2685
      %2687 = vrot.lane.b32.xlu0 %v2523, 1
      %v2688 = vpop.permute.xlu0 %2687
      %2689 = vrot.lane.b32.xlu0 %v2541, 1
      %v2690 = vpop.permute.xlu0 %2689
      %2691 = vrot.lane.b32.xlu0 %v2488, 1
      %v2692 = vpop.permute.xlu0 %2691
      %2693 = vrot.lane.b32.xlu0 %v2506, 1
      %v2694 = vpop.permute.xlu0 %2693
      %2695 = vrot.lane.b32.xlu0 %v2524, 1
      %v2696 = vpop.permute.xlu0 %2695
      %2697 = vrot.lane.b32.xlu0 %v2542, 1
      %v2698 = vpop.permute.xlu0 %2697
      %vm2699 = vcmp.lt.s32.totalorder %v1901, 1
      %v2700 = vsel %vm2699, %v2684, %v2692
      %v2701 = vsel %vm2699, %v2686, %v2694
      %v2702 = vsel %vm2699, %v2688, %v2696
      %v2703 = vsel %vm2699, %v2690, %v2698
      %v2704 = vsel %vm2699, %v2676, %v2684
      %v2705 = vsel %vm2699, %v2678, %v2686
      %v2706 = vsel %vm2699, %v2680, %v2688
      %v2707 = vsel %vm2699, %v2682, %v2690
      %v2708 = vsel %vm2699, %v2668, %v2676
      %v2709 = vsel %vm2699, %v2670, %v2678
      %v2710 = vsel %vm2699, %v2672, %v2680
      %v2711 = vsel %vm2699, %v2674, %v2682
      %v2712 = vsel %vm2699, %v2660, %v2668
      %v2713 = vsel %vm2699, %v2662, %v2670
      %v2714 = vsel %vm2699, %v2664, %v2672
      %v2715 = vsel %vm2699, %v2666, %v2674
      %v2716 = vsel %vm2699, %v2652, %v2660
      %v2717 = vsel %vm2699, %v2654, %v2662
      %v2718 = vsel %vm2699, %v2656, %v2664
      %v2719 = vsel %vm2699, %v2658, %v2666
      %v2720 = vsel %vm2699, %v2644, %v2652
      %v2721 = vsel %vm2699, %v2646, %v2654
      %v2722 = vsel %vm2699, %v2648, %v2656
      %v2723 = vsel %vm2699, %v2650, %v2658
      %v2724 = vsel %vm2699, %v2636, %v2644
      %v2725 = vsel %vm2699, %v2638, %v2646
      %v2726 = vsel %vm2699, %v2640, %v2648
      %v2727 = vsel %vm2699, %v2642, %v2650
      %v2728 = vsel %vm2699, %v2628, %v2636
      %v2729 = vsel %vm2699, %v2630, %v2638
      %v2730 = vsel %vm2699, %v2632, %v2640
      %v2731 = vsel %vm2699, %v2634, %v2642
      %v2732 = vsel %vm2699, %v2620, %v2628
      %v2733 = vsel %vm2699, %v2622, %v2630
      %v2734 = vsel %vm2699, %v2624, %v2632
      %v2735 = vsel %vm2699, %v2626, %v2634
      %v2736 = vsel %vm2699, %v2612, %v2620
      %v2737 = vsel %vm2699, %v2614, %v2622
      %v2738 = vsel %vm2699, %v2616, %v2624
      %v2739 = vsel %vm2699, %v2618, %v2626
      %v2740 = vsel %vm2699, %v2604, %v2612
      %v2741 = vsel %vm2699, %v2606, %v2614
      %v2742 = vsel %vm2699, %v2608, %v2616
      %v2743 = vsel %vm2699, %v2610, %v2618
      %v2744 = vsel %vm2699, %v2596, %v2604
      %v2745 = vsel %vm2699, %v2598, %v2606
      %v2746 = vsel %vm2699, %v2600, %v2608
      %v2747 = vsel %vm2699, %v2602, %v2610
      %v2748 = vsel %vm2699, %v2588, %v2596
      %v2749 = vsel %vm2699, %v2590, %v2598
      %v2750 = vsel %vm2699, %v2592, %v2600
      %v2751 = vsel %vm2699, %v2594, %v2602
      %v2752 = vsel %vm2699, %v2580, %v2588
      %v2753 = vsel %vm2699, %v2582, %v2590
      %v2754 = vsel %vm2699, %v2584, %v2592
      %v2755 = vsel %vm2699, %v2586, %v2594
      %v2756 = vsel %vm2699, %v2572, %v2580
      %v2757 = vsel %vm2699, %v2574, %v2582
      %v2758 = vsel %vm2699, %v2576, %v2584
      %v2759 = vsel %vm2699, %v2578, %v2586
      %v2760 = vsel %vm2699, %v2564, %v2572
      %v2761 = vsel %vm2699, %v2566, %v2574
      %v2762 = vsel %vm2699, %v2568, %v2576
      %v2763 = vsel %vm2699, %v2570, %v2578
      %v2764 = vsel %vm2699, %v2556, %v2564
      %v2765 = vsel %vm2699, %v2558, %v2566
      %v2766 = vsel %vm2699, %v2560, %v2568
      %v2767 = vsel %vm2699, %v2562, %v2570
      %v2768 = vsel %vm2699, %v2692, %v2556
      %v2769 = vsel %vm2699, %v2694, %v2558
      %v2770 = vsel %vm2699, %v2696, %v2560
      %v2771 = vsel %vm2699, %v2698, %v2562
      %v2775 = vperm.slane %v312, 0
      %v2776 = vperm.slane %v312, 1
      %v2777 = vperm.slane %v312, 2
      %v2778 = vperm.slane %v312, 3
      %v2779 = vperm.slane %v312, 4
      %v2780 = vperm.slane %v312, 5
      %v2781 = vperm.slane %v312, 6
      %v2782 = vperm.slane %v312, 7
      %v2783 = vperm.slane %v314, 0
      %v2784 = vperm.slane %v314, 1
      %v2785 = vperm.slane %v314, 2
      %v2786 = vperm.slane %v314, 3
      %v2787 = vperm.slane %v314, 4
      %v2788 = vperm.slane %v314, 5
      %v2789 = vperm.slane %v314, 6
      %v2790 = vperm.slane %v314, 7
      %v2791 = vperm.slane %v316, 0
      %v2792 = vperm.slane %v316, 1
      %v2811 = vmul.f32 %v2768, %v2775
      %v2812 = vmul.f32 %v2764, %v2776
      %v2813 = vmul.f32 %v2760, %v2777
      %v2814 = vmul.f32 %v2756, %v2778
      %v2815 = vmul.f32 %v2752, %v2779
      %v2816 = vmul.f32 %v2748, %v2780
      %v2817 = vmul.f32 %v2744, %v2781
      %v2818 = vmul.f32 %v2740, %v2782
      %v2819 = vmul.f32 %v2736, %v2783
      %v2820 = vmul.f32 %v2732, %v2784
      %v2821 = vmul.f32 %v2728, %v2785
      %v2822 = vmul.f32 %v2724, %v2786
      %v2823 = vmul.f32 %v2720, %v2787
      %v2824 = vmul.f32 %v2716, %v2788
      %v2825 = vmul.f32 %v2712, %v2789
      %v2826 = vmul.f32 %v2708, %v2790
      %v2827 = vmul.f32 %v2704, %v2791
      %v2828 = vmul.f32 %v2700, %v2792
      %v2829 = vmul.f32 %v2769, %v2775
      %v2830 = vmul.f32 %v2765, %v2776
      %v2831 = vmul.f32 %v2761, %v2777
      %v2832 = vmul.f32 %v2757, %v2778
      %v2833 = vmul.f32 %v2753, %v2779
      %v2834 = vmul.f32 %v2749, %v2780
      %v2835 = vmul.f32 %v2745, %v2781
      %v2836 = vmul.f32 %v2741, %v2782
      %v2837 = vmul.f32 %v2737, %v2783
      %v2838 = vmul.f32 %v2733, %v2784
      %v2839 = vmul.f32 %v2729, %v2785
      %v2840 = vmul.f32 %v2725, %v2786
      %v2841 = vmul.f32 %v2721, %v2787
      %v2842 = vmul.f32 %v2717, %v2788
      %v2843 = vmul.f32 %v2713, %v2789
      %v2844 = vmul.f32 %v2709, %v2790
      %v2845 = vmul.f32 %v2705, %v2791
      %v2846 = vmul.f32 %v2701, %v2792
      %v2847 = vmul.f32 %v2770, %v2775
      %v2848 = vmul.f32 %v2766, %v2776
      %v2849 = vmul.f32 %v2762, %v2777
      %v2850 = vmul.f32 %v2758, %v2778
      %v2851 = vmul.f32 %v2754, %v2779
      %v2852 = vmul.f32 %v2750, %v2780
      %v2853 = vmul.f32 %v2746, %v2781
      %v2854 = vmul.f32 %v2742, %v2782
      %v2855 = vmul.f32 %v2738, %v2783
      %v2856 = vmul.f32 %v2734, %v2784
      %v2857 = vmul.f32 %v2730, %v2785
      %v2858 = vmul.f32 %v2726, %v2786
      %v2859 = vmul.f32 %v2722, %v2787
      %v2860 = vmul.f32 %v2718, %v2788
      %v2861 = vmul.f32 %v2714, %v2789
      %v2862 = vmul.f32 %v2710, %v2790
      %v2863 = vmul.f32 %v2706, %v2791
      %v2864 = vmul.f32 %v2702, %v2792
      %v2865 = vmul.f32 %v2771, %v2775
      %v2866 = vmul.f32 %v2767, %v2776
      %v2867 = vmul.f32 %v2763, %v2777
      %v2868 = vmul.f32 %v2759, %v2778
      %v2869 = vmul.f32 %v2755, %v2779
      %v2870 = vmul.f32 %v2751, %v2780
      %v2871 = vmul.f32 %v2747, %v2781
      %v2872 = vmul.f32 %v2743, %v2782
      %v2873 = vmul.f32 %v2739, %v2783
      %v2874 = vmul.f32 %v2735, %v2784
      %v2875 = vmul.f32 %v2731, %v2785
      %v2876 = vmul.f32 %v2727, %v2786
      %v2877 = vmul.f32 %v2723, %v2787
      %v2878 = vmul.f32 %v2719, %v2788
      %v2879 = vmul.f32 %v2715, %v2789
      %v2880 = vmul.f32 %v2711, %v2790
      %v2881 = vmul.f32 %v2707, %v2791
      %v2882 = vmul.f32 %v2703, %v2792
      %2883 = vrot.lane.b32.xlu0 %v2471, 127
      %v2884 = vpop.permute.xlu0 %2883
      %2885 = vrot.lane.b32.xlu0 %v2489, 127
      %v2886 = vpop.permute.xlu0 %2885
      %2887 = vrot.lane.b32.xlu0 %v2507, 127
      %v2888 = vpop.permute.xlu0 %2887
      %2889 = vrot.lane.b32.xlu0 %v2525, 127
      %v2890 = vpop.permute.xlu0 %2889
      %2891 = vrot.lane.b32.xlu0 %v2472, 127
      %v2892 = vpop.permute.xlu0 %2891
      %2893 = vrot.lane.b32.xlu0 %v2490, 127
      %v2894 = vpop.permute.xlu0 %2893
      %2895 = vrot.lane.b32.xlu0 %v2508, 127
      %v2896 = vpop.permute.xlu0 %2895
      %2897 = vrot.lane.b32.xlu0 %v2526, 127
      %v2898 = vpop.permute.xlu0 %2897
      %2899 = vrot.lane.b32.xlu0 %v2473, 127
      %v2900 = vpop.permute.xlu0 %2899
      %2901 = vrot.lane.b32.xlu0 %v2491, 127
      %v2902 = vpop.permute.xlu0 %2901
      %2903 = vrot.lane.b32.xlu0 %v2509, 127
      %v2904 = vpop.permute.xlu0 %2903
      %2905 = vrot.lane.b32.xlu0 %v2527, 127
      %v2906 = vpop.permute.xlu0 %2905
      %2907 = vrot.lane.b32.xlu0 %v2474, 127
      %v2908 = vpop.permute.xlu0 %2907
      %2909 = vrot.lane.b32.xlu0 %v2492, 127
      %v2910 = vpop.permute.xlu0 %2909
      %2911 = vrot.lane.b32.xlu0 %v2510, 127
      %v2912 = vpop.permute.xlu0 %2911
      %2913 = vrot.lane.b32.xlu0 %v2528, 127
      %v2914 = vpop.permute.xlu0 %2913
      %2915 = vrot.lane.b32.xlu0 %v2475, 127
      %v2916 = vpop.permute.xlu0 %2915
      %2917 = vrot.lane.b32.xlu0 %v2493, 127
      %v2918 = vpop.permute.xlu0 %2917
      %2919 = vrot.lane.b32.xlu0 %v2511, 127
      %v2920 = vpop.permute.xlu0 %2919
      %2921 = vrot.lane.b32.xlu0 %v2529, 127
      %v2922 = vpop.permute.xlu0 %2921
      %2923 = vrot.lane.b32.xlu0 %v2476, 127
      %v2924 = vpop.permute.xlu0 %2923
      %2925 = vrot.lane.b32.xlu0 %v2494, 127
      %v2926 = vpop.permute.xlu0 %2925
      %2927 = vrot.lane.b32.xlu0 %v2512, 127
      %v2928 = vpop.permute.xlu0 %2927
      %2929 = vrot.lane.b32.xlu0 %v2530, 127
      %v2930 = vpop.permute.xlu0 %2929
      %2931 = vrot.lane.b32.xlu0 %v2477, 127
      %v2932 = vpop.permute.xlu0 %2931
      %2933 = vrot.lane.b32.xlu0 %v2495, 127
      %v2934 = vpop.permute.xlu0 %2933
      %2935 = vrot.lane.b32.xlu0 %v2513, 127
      %v2936 = vpop.permute.xlu0 %2935
      %2937 = vrot.lane.b32.xlu0 %v2531, 127
      %v2938 = vpop.permute.xlu0 %2937
      %2939 = vrot.lane.b32.xlu0 %v2478, 127
      %v2940 = vpop.permute.xlu0 %2939
      %2941 = vrot.lane.b32.xlu0 %v2496, 127
      %v2942 = vpop.permute.xlu0 %2941
      %2943 = vrot.lane.b32.xlu0 %v2514, 127
      %v2944 = vpop.permute.xlu0 %2943
      %2945 = vrot.lane.b32.xlu0 %v2532, 127
      %v2946 = vpop.permute.xlu0 %2945
      %2947 = vrot.lane.b32.xlu0 %v2479, 127
      %v2948 = vpop.permute.xlu0 %2947
      %2949 = vrot.lane.b32.xlu0 %v2497, 127
      %v2950 = vpop.permute.xlu0 %2949
      %2951 = vrot.lane.b32.xlu0 %v2515, 127
      %v2952 = vpop.permute.xlu0 %2951
      %2953 = vrot.lane.b32.xlu0 %v2533, 127
      %v2954 = vpop.permute.xlu0 %2953
      %2955 = vrot.lane.b32.xlu0 %v2480, 127
      %v2956 = vpop.permute.xlu0 %2955
      %2957 = vrot.lane.b32.xlu0 %v2498, 127
      %v2958 = vpop.permute.xlu0 %2957
      %2959 = vrot.lane.b32.xlu0 %v2516, 127
      %v2960 = vpop.permute.xlu0 %2959
      %2961 = vrot.lane.b32.xlu0 %v2534, 127
      %v2962 = vpop.permute.xlu0 %2961
      %2963 = vrot.lane.b32.xlu0 %v2481, 127
      %v2964 = vpop.permute.xlu0 %2963
      %2965 = vrot.lane.b32.xlu0 %v2499, 127
      %v2966 = vpop.permute.xlu0 %2965
      %2967 = vrot.lane.b32.xlu0 %v2517, 127
      %v2968 = vpop.permute.xlu0 %2967
      %2969 = vrot.lane.b32.xlu0 %v2535, 127
      %v2970 = vpop.permute.xlu0 %2969
      %2971 = vrot.lane.b32.xlu0 %v2482, 127
      %v2972 = vpop.permute.xlu0 %2971
      %2973 = vrot.lane.b32.xlu0 %v2500, 127
      %v2974 = vpop.permute.xlu0 %2973
      %2975 = vrot.lane.b32.xlu0 %v2518, 127
      %v2976 = vpop.permute.xlu0 %2975
      %2977 = vrot.lane.b32.xlu0 %v2536, 127
      %v2978 = vpop.permute.xlu0 %2977
      %2979 = vrot.lane.b32.xlu0 %v2483, 127
      %v2980 = vpop.permute.xlu0 %2979
      %2981 = vrot.lane.b32.xlu0 %v2501, 127
      %v2982 = vpop.permute.xlu0 %2981
      %2983 = vrot.lane.b32.xlu0 %v2519, 127
      %v2984 = vpop.permute.xlu0 %2983
      %2985 = vrot.lane.b32.xlu0 %v2537, 127
      %v2986 = vpop.permute.xlu0 %2985
      %2987 = vrot.lane.b32.xlu0 %v2484, 127
      %v2988 = vpop.permute.xlu0 %2987
      %2989 = vrot.lane.b32.xlu0 %v2502, 127
      %v2990 = vpop.permute.xlu0 %2989
      %2991 = vrot.lane.b32.xlu0 %v2520, 127
      %v2992 = vpop.permute.xlu0 %2991
      %2993 = vrot.lane.b32.xlu0 %v2538, 127
      %v2994 = vpop.permute.xlu0 %2993
      %2995 = vrot.lane.b32.xlu0 %v2485, 127
      %v2996 = vpop.permute.xlu0 %2995
      %2997 = vrot.lane.b32.xlu0 %v2503, 127
      %v2998 = vpop.permute.xlu0 %2997
      %2999 = vrot.lane.b32.xlu0 %v2521, 127
      %v3000 = vpop.permute.xlu0 %2999
      %3001 = vrot.lane.b32.xlu0 %v2539, 127
      %v3002 = vpop.permute.xlu0 %3001
      %3003 = vrot.lane.b32.xlu0 %v2486, 127
      %v3004 = vpop.permute.xlu0 %3003
      %3005 = vrot.lane.b32.xlu0 %v2504, 127
      %v3006 = vpop.permute.xlu0 %3005
      %3007 = vrot.lane.b32.xlu0 %v2522, 127
      %v3008 = vpop.permute.xlu0 %3007
      %3009 = vrot.lane.b32.xlu0 %v2540, 127
      %v3010 = vpop.permute.xlu0 %3009
      %3011 = vrot.lane.b32.xlu0 %v2487, 127
      %v3012 = vpop.permute.xlu0 %3011
      %3013 = vrot.lane.b32.xlu0 %v2505, 127
      %v3014 = vpop.permute.xlu0 %3013
      %3015 = vrot.lane.b32.xlu0 %v2523, 127
      %v3016 = vpop.permute.xlu0 %3015
      %3017 = vrot.lane.b32.xlu0 %v2541, 127
      %v3018 = vpop.permute.xlu0 %3017
      %3019 = vrot.lane.b32.xlu0 %v2488, 127
      %v3020 = vpop.permute.xlu0 %3019
      %3021 = vrot.lane.b32.xlu0 %v2506, 127
      %v3022 = vpop.permute.xlu0 %3021
      %3023 = vrot.lane.b32.xlu0 %v2524, 127
      %v3024 = vpop.permute.xlu0 %3023
      %3025 = vrot.lane.b32.xlu0 %v2542, 127
      %v3026 = vpop.permute.xlu0 %3025
      %vm3027 = vcmp.lt.s32.totalorder %v1901, 127
      %v3028 = vsel %vm3027, %v3012, %v3020
      %v3029 = vsel %vm3027, %v3014, %v3022
      %v3030 = vsel %vm3027, %v3016, %v3024
      %v3031 = vsel %vm3027, %v3018, %v3026
      %v3032 = vsel %vm3027, %v3004, %v3012
      %v3033 = vsel %vm3027, %v3006, %v3014
      %v3034 = vsel %vm3027, %v3008, %v3016
      %v3035 = vsel %vm3027, %v3010, %v3018
      %v3036 = vsel %vm3027, %v2996, %v3004
      %v3037 = vsel %vm3027, %v2998, %v3006
      %v3038 = vsel %vm3027, %v3000, %v3008
      %v3039 = vsel %vm3027, %v3002, %v3010
      %v3040 = vsel %vm3027, %v2988, %v2996
      %v3041 = vsel %vm3027, %v2990, %v2998
      %v3042 = vsel %vm3027, %v2992, %v3000
      %v3043 = vsel %vm3027, %v2994, %v3002
      %v3044 = vsel %vm3027, %v2980, %v2988
      %v3045 = vsel %vm3027, %v2982, %v2990
      %v3046 = vsel %vm3027, %v2984, %v2992
      %v3047 = vsel %vm3027, %v2986, %v2994
      %v3048 = vsel %vm3027, %v2972, %v2980
      %v3049 = vsel %vm3027, %v2974, %v2982
      %v3050 = vsel %vm3027, %v2976, %v2984
      %v3051 = vsel %vm3027, %v2978, %v2986
      %v3052 = vsel %vm3027, %v2964, %v2972
      %v3053 = vsel %vm3027, %v2966, %v2974
      %v3054 = vsel %vm3027, %v2968, %v2976
      %v3055 = vsel %vm3027, %v2970, %v2978
      %v3056 = vsel %vm3027, %v2956, %v2964
      %v3057 = vsel %vm3027, %v2958, %v2966
      %v3058 = vsel %vm3027, %v2960, %v2968
      %v3059 = vsel %vm3027, %v2962, %v2970
      %v3060 = vsel %vm3027, %v2948, %v2956
      %v3061 = vsel %vm3027, %v2950, %v2958
      %v3062 = vsel %vm3027, %v2952, %v2960
      %v3063 = vsel %vm3027, %v2954, %v2962
      %v3064 = vsel %vm3027, %v2940, %v2948
      %v3065 = vsel %vm3027, %v2942, %v2950
      %v3066 = vsel %vm3027, %v2944, %v2952
      %v3067 = vsel %vm3027, %v2946, %v2954
      %v3068 = vsel %vm3027, %v2932, %v2940
      %v3069 = vsel %vm3027, %v2934, %v2942
      %v3070 = vsel %vm3027, %v2936, %v2944
      %v3071 = vsel %vm3027, %v2938, %v2946
      %v3072 = vsel %vm3027, %v2924, %v2932
      %v3073 = vsel %vm3027, %v2926, %v2934
      %v3074 = vsel %vm3027, %v2928, %v2936
      %v3075 = vsel %vm3027, %v2930, %v2938
      %v3076 = vsel %vm3027, %v2916, %v2924
      %v3077 = vsel %vm3027, %v2918, %v2926
      %v3078 = vsel %vm3027, %v2920, %v2928
      %v3079 = vsel %vm3027, %v2922, %v2930
      %v3080 = vsel %vm3027, %v2908, %v2916
      %v3081 = vsel %vm3027, %v2910, %v2918
      %v3082 = vsel %vm3027, %v2912, %v2920
      %v3083 = vsel %vm3027, %v2914, %v2922
      %v3084 = vsel %vm3027, %v2900, %v2908
      %v3085 = vsel %vm3027, %v2902, %v2910
      %v3086 = vsel %vm3027, %v2904, %v2912
      %v3087 = vsel %vm3027, %v2906, %v2914
      %v3088 = vsel %vm3027, %v2892, %v2900
      %v3089 = vsel %vm3027, %v2894, %v2902
      %v3090 = vsel %vm3027, %v2896, %v2904
      %v3091 = vsel %vm3027, %v2898, %v2906
      %v3092 = vsel %vm3027, %v2884, %v2892
      %v3093 = vsel %vm3027, %v2886, %v2894
      %v3094 = vsel %vm3027, %v2888, %v2896
      %v3095 = vsel %vm3027, %v2890, %v2898
      %v3096 = vsel %vm3027, %v3020, %v2884
      %v3097 = vsel %vm3027, %v3022, %v2886
      %v3098 = vsel %vm3027, %v3024, %v2888
      %v3099 = vsel %vm3027, %v3026, %v2890
      %v3103 = vperm.slane %v318, 0
      %v3104 = vperm.slane %v318, 1
      %v3105 = vperm.slane %v318, 2
      %v3106 = vperm.slane %v318, 3
      %v3107 = vperm.slane %v318, 4
      %v3108 = vperm.slane %v318, 5
      %v3109 = vperm.slane %v318, 6
      %v3110 = vperm.slane %v318, 7
      %v3111 = vperm.slane %v320, 0
      %v3112 = vperm.slane %v320, 1
      %v3113 = vperm.slane %v320, 2
      %v3114 = vperm.slane %v320, 3
      %v3115 = vperm.slane %v320, 4
      %v3116 = vperm.slane %v320, 5
      %v3117 = vperm.slane %v320, 6
      %v3118 = vperm.slane %v320, 7
      %v3119 = vperm.slane %v322, 0
      %v3120 = vperm.slane %v322, 1
      %v3139 = vmul.f32 %v3092, %v3103
      %v3140 = vmul.f32 %v3088, %v3104
      %v3141 = vmul.f32 %v3084, %v3105
      %v3142 = vmul.f32 %v3080, %v3106
      %v3143 = vmul.f32 %v3076, %v3107
      %v3144 = vmul.f32 %v3072, %v3108
      %v3145 = vmul.f32 %v3068, %v3109
      %v3146 = vmul.f32 %v3064, %v3110
      %v3147 = vmul.f32 %v3060, %v3111
      %v3148 = vmul.f32 %v3056, %v3112
      %v3149 = vmul.f32 %v3052, %v3113
      %v3150 = vmul.f32 %v3048, %v3114
      %v3151 = vmul.f32 %v3044, %v3115
      %v3152 = vmul.f32 %v3040, %v3116
      %v3153 = vmul.f32 %v3036, %v3117
      %v3154 = vmul.f32 %v3032, %v3118
      %v3155 = vmul.f32 %v3028, %v3119
      %v3156 = vmul.f32 %v3096, %v3120
      %v3157 = vmul.f32 %v3093, %v3103
      %v3158 = vmul.f32 %v3089, %v3104
      %v3159 = vmul.f32 %v3085, %v3105
      %v3160 = vmul.f32 %v3081, %v3106
      %v3161 = vmul.f32 %v3077, %v3107
      %v3162 = vmul.f32 %v3073, %v3108
      %v3163 = vmul.f32 %v3069, %v3109
      %v3164 = vmul.f32 %v3065, %v3110
      %v3165 = vmul.f32 %v3061, %v3111
      %v3166 = vmul.f32 %v3057, %v3112
      %v3167 = vmul.f32 %v3053, %v3113
      %v3168 = vmul.f32 %v3049, %v3114
      %v3169 = vmul.f32 %v3045, %v3115
      %v3170 = vmul.f32 %v3041, %v3116
      %v3171 = vmul.f32 %v3037, %v3117
      %v3172 = vmul.f32 %v3033, %v3118
      %v3173 = vmul.f32 %v3029, %v3119
      %v3174 = vmul.f32 %v3097, %v3120
      %v3175 = vmul.f32 %v3094, %v3103
      %v3176 = vmul.f32 %v3090, %v3104
      %v3177 = vmul.f32 %v3086, %v3105
      %v3178 = vmul.f32 %v3082, %v3106
      %v3179 = vmul.f32 %v3078, %v3107
      %v3180 = vmul.f32 %v3074, %v3108
      %v3181 = vmul.f32 %v3070, %v3109
      %v3182 = vmul.f32 %v3066, %v3110
      %v3183 = vmul.f32 %v3062, %v3111
      %v3184 = vmul.f32 %v3058, %v3112
      %v3185 = vmul.f32 %v3054, %v3113
      %v3186 = vmul.f32 %v3050, %v3114
      %v3187 = vmul.f32 %v3046, %v3115
      %v3188 = vmul.f32 %v3042, %v3116
      %v3189 = vmul.f32 %v3038, %v3117
      %v3190 = vmul.f32 %v3034, %v3118
      %v3191 = vmul.f32 %v3030, %v3119
      %v3192 = vmul.f32 %v3098, %v3120
      %v3193 = vmul.f32 %v3095, %v3103
      %v3194 = vmul.f32 %v3091, %v3104
      %v3195 = vmul.f32 %v3087, %v3105
      %v3196 = vmul.f32 %v3083, %v3106
      %v3197 = vmul.f32 %v3079, %v3107
      %v3198 = vmul.f32 %v3075, %v3108
      %v3199 = vmul.f32 %v3071, %v3109
      %v3200 = vmul.f32 %v3067, %v3110
      %v3201 = vmul.f32 %v3063, %v3111
      %v3202 = vmul.f32 %v3059, %v3112
      %v3203 = vmul.f32 %v3055, %v3113
      %v3204 = vmul.f32 %v3051, %v3114
      %v3205 = vmul.f32 %v3047, %v3115
      %v3206 = vmul.f32 %v3043, %v3116
      %v3207 = vmul.f32 %v3039, %v3117
      %v3208 = vmul.f32 %v3035, %v3118
      %v3209 = vmul.f32 %v3031, %v3119
      %v3210 = vmul.f32 %v3099, %v3120
      %v3211 = vpack.c.bf16 %v2829, %v2811
      %v3212 = vpack.c.bf16 %v2830, %v2812
      %v3213 = vpack.c.bf16 %v2831, %v2813
      %v3214 = vpack.c.bf16 %v2832, %v2814
      %v3215 = vpack.c.bf16 %v2833, %v2815
      %v3216 = vpack.c.bf16 %v2834, %v2816
      %v3217 = vpack.c.bf16 %v2835, %v2817
      %v3218 = vpack.c.bf16 %v2836, %v2818
      %v3219 = vpack.c.bf16 %v2837, %v2819
      %v3220 = vpack.c.bf16 %v2838, %v2820
      %v3221 = vpack.c.bf16 %v2839, %v2821
      %v3222 = vpack.c.bf16 %v2840, %v2822
      %v3223 = vpack.c.bf16 %v2841, %v2823
      %v3224 = vpack.c.bf16 %v2842, %v2824
      %v3225 = vpack.c.bf16 %v2843, %v2825
      %v3226 = vpack.c.bf16 %v2844, %v2826
      %v3227 = vpack.c.bf16 %v2845, %v2827
      %v3228 = vpack.c.bf16 %v2846, %v2828
      %v3229 = vpack.c.bf16 %v2865, %v2847
      %v3230 = vpack.c.bf16 %v2866, %v2848
      %v3231 = vpack.c.bf16 %v2867, %v2849
      %v3232 = vpack.c.bf16 %v2868, %v2850
      %v3233 = vpack.c.bf16 %v2869, %v2851
      %v3234 = vpack.c.bf16 %v2870, %v2852
      %v3235 = vpack.c.bf16 %v2871, %v2853
      %v3236 = vpack.c.bf16 %v2872, %v2854
      %v3237 = vpack.c.bf16 %v2873, %v2855
      %v3238 = vpack.c.bf16 %v2874, %v2856
      %v3239 = vpack.c.bf16 %v2875, %v2857
      %v3240 = vpack.c.bf16 %v2876, %v2858
      %v3241 = vpack.c.bf16 %v2877, %v2859
      %v3242 = vpack.c.bf16 %v2878, %v2860
      %v3243 = vpack.c.bf16 %v2879, %v2861
      %v3244 = vpack.c.bf16 %v2880, %v2862
      %v3245 = vpack.c.bf16 %v2881, %v2863
      %v3246 = vpack.c.bf16 %v2882, %v2864
      %v3247 = vpack.c.bf16 %v2489, %v2471
      %v3248 = vpack.c.bf16 %v2490, %v2472
      %v3249 = vpack.c.bf16 %v2491, %v2473
      %v3250 = vpack.c.bf16 %v2492, %v2474
      %v3251 = vpack.c.bf16 %v2493, %v2475
      %v3252 = vpack.c.bf16 %v2494, %v2476
      %v3253 = vpack.c.bf16 %v2495, %v2477
      %v3254 = vpack.c.bf16 %v2496, %v2478
      %v3255 = vpack.c.bf16 %v2497, %v2479
      %v3256 = vpack.c.bf16 %v2498, %v2480
      %v3257 = vpack.c.bf16 %v2499, %v2481
      %v3258 = vpack.c.bf16 %v2500, %v2482
      %v3259 = vpack.c.bf16 %v2501, %v2483
      %v3260 = vpack.c.bf16 %v2502, %v2484
      %v3261 = vpack.c.bf16 %v2503, %v2485
      %v3262 = vpack.c.bf16 %v2504, %v2486
      %v3263 = vpack.c.bf16 %v2505, %v2487
      %v3264 = vpack.c.bf16 %v2506, %v2488
      %v3265 = vpack.c.bf16 %v2525, %v2507
      %v3266 = vpack.c.bf16 %v2526, %v2508
      %v3267 = vpack.c.bf16 %v2527, %v2509
      %v3268 = vpack.c.bf16 %v2528, %v2510
      %v3269 = vpack.c.bf16 %v2529, %v2511
      %v3270 = vpack.c.bf16 %v2530, %v2512
      %v3271 = vpack.c.bf16 %v2531, %v2513
      %v3272 = vpack.c.bf16 %v2532, %v2514
      %v3273 = vpack.c.bf16 %v2533, %v2515
      %v3274 = vpack.c.bf16 %v2534, %v2516
      %v3275 = vpack.c.bf16 %v2535, %v2517
      %v3276 = vpack.c.bf16 %v2536, %v2518
      %v3277 = vpack.c.bf16 %v2537, %v2519
      %v3278 = vpack.c.bf16 %v2538, %v2520
      %v3279 = vpack.c.bf16 %v2539, %v2521
      %v3280 = vpack.c.bf16 %v2540, %v2522
      %v3281 = vpack.c.bf16 %v2541, %v2523
      %v3282 = vpack.c.bf16 %v2542, %v2524
      %v3283 = vpack.c.bf16 %v3157, %v3139
      %v3284 = vpack.c.bf16 %v3158, %v3140
      %v3285 = vpack.c.bf16 %v3159, %v3141
      %v3286 = vpack.c.bf16 %v3160, %v3142
      %v3287 = vpack.c.bf16 %v3161, %v3143
      %v3288 = vpack.c.bf16 %v3162, %v3144
      %v3289 = vpack.c.bf16 %v3163, %v3145
      %v3290 = vpack.c.bf16 %v3164, %v3146
      %v3291 = vpack.c.bf16 %v3165, %v3147
      %v3292 = vpack.c.bf16 %v3166, %v3148
      %v3293 = vpack.c.bf16 %v3167, %v3149
      %v3294 = vpack.c.bf16 %v3168, %v3150
      %v3295 = vpack.c.bf16 %v3169, %v3151
      %v3296 = vpack.c.bf16 %v3170, %v3152
      %v3297 = vpack.c.bf16 %v3171, %v3153
      %v3298 = vpack.c.bf16 %v3172, %v3154
      %v3299 = vpack.c.bf16 %v3173, %v3155
      %v3300 = vpack.c.bf16 %v3174, %v3156
      %v3301 = vpack.c.bf16 %v3193, %v3175
      %v3302 = vpack.c.bf16 %v3194, %v3176
      %v3303 = vpack.c.bf16 %v3195, %v3177
      %v3304 = vpack.c.bf16 %v3196, %v3178
      %v3305 = vpack.c.bf16 %v3197, %v3179
      %v3306 = vpack.c.bf16 %v3198, %v3180
      %v3307 = vpack.c.bf16 %v3199, %v3181
      %v3308 = vpack.c.bf16 %v3200, %v3182
      %v3309 = vpack.c.bf16 %v3201, %v3183
      %v3310 = vpack.c.bf16 %v3202, %v3184
      %v3311 = vpack.c.bf16 %v3203, %v3185
      %v3312 = vpack.c.bf16 %v3204, %v3186
      %v3313 = vpack.c.bf16 %v3205, %v3187
      %v3314 = vpack.c.bf16 %v3206, %v3188
      %v3315 = vpack.c.bf16 %v3207, %v3189
      %v3316 = vpack.c.bf16 %v3208, %v3190
      %v3317 = vpack.c.bf16 %v3209, %v3191
      %v3318 = vpack.c.bf16 %v3210, %v3192
      %v3331 = vunpack.c.l.b16 %v2543
      %v3332 = vunpack.c.l.b16 %v2544
      %v3333 = vunpack.c.l.b16 %v2545
      %v3334 = vunpack.c.l.b16 %v2546
      %v3335 = vunpack.c.l.b16 %v2547
      %v3336 = vunpack.c.l.b16 %v2548
      %v3337 = vunpack.c.l.b16 %v2549
      %v3338 = vunpack.c.l.b16 %v2550
      %v3339 = vunpack.c.l.b16 %v2551
      %v3340 = vunpack.c.l.b16 %v2552
      %v3341 = vunpack.c.l.b16 %v2553
      %v3342 = vunpack.c.l.b16 %v2554
      %v3343 = vpack.c.b16 %v3332, %v3331
      %v3344 = vpack.c.b16 %v3334, %v3333
      %v3345 = vpack.c.b16 %v3336, %v3335
      %v3346 = vpack.c.b16 %v3338, %v3337
      %v3347 = vpack.c.b16 %v3340, %v3339
      %v3348 = vpack.c.b16 %v3342, %v3341
      %vm3349 = vcmask 785408
      %v3351 = vsel %vm3349, %v3343, 0
      %v3354 = vsel %vm3349, %v3344, 0
      %v3357 = vsel %vm3349, %v3345, 0
      %v3360 = vsel %vm3349, %v3346, 0
      %v3363 = vsel %vm3349, %v3347, 0
      %v3366 = vsel %vm3349, %v3348, 0
      %3368 = vmatpush.bf16.msra.mxu0 0
      %3369 = vmatpush.bf16.msra.mxu0 0
      %3370 = vmatpush.bf16.msra.mxu0 %v3301
      %3371 = vmatpush.bf16.msra.mxu0 %v3283
      %3372 = vmatpush.bf16.msra.mxu0 %v3265
      %3373 = vmatpush.bf16.msra.mxu0 %v3247
      %3374 = vmatpush.bf16.msra.mxu0 %v3229
      %3375 = vmatpush.bf16.msra.mxu0 %v3211
      %3376 = vmatmul.bf16.gmra.mxu0 %v3351
      %v3377 = vpop.f32.mrf.mxu0
      %v3378 = vadd.f32 0.0, %v3377
      %v3379 = vpop.f32.mrf.mxu0
      %v3380 = vadd.f32 0.0, %v3379
      %3381 = vmatmul.bf16.gmra.mxu0 %v3354
      %v3382 = vpop.f32.mrf.mxu0
      %v3383 = vadd.f32 0.0, %v3382
      %v3384 = vpop.f32.mrf.mxu0
      %v3385 = vadd.f32 0.0, %v3384
      %3386 = vmatmul.bf16.gmra.mxu0 %v3357
      %v3387 = vpop.f32.mrf.mxu0
      %v3388 = vadd.f32 0.0, %v3387
      %v3389 = vpop.f32.mrf.mxu0
      %v3390 = vadd.f32 0.0, %v3389
      %3391 = vmatmul.bf16.gmra.mxu0 %v3360
      %v3392 = vpop.f32.mrf.mxu0
      %v3393 = vadd.f32 0.0, %v3392
      %v3394 = vpop.f32.mrf.mxu0
      %v3395 = vadd.f32 0.0, %v3394
      %3396 = vmatmul.bf16.gmra.mxu0 %v3363
      %v3397 = vpop.f32.mrf.mxu0
      %v3398 = vadd.f32 0.0, %v3397
      %v3399 = vpop.f32.mrf.mxu0
      %v3400 = vadd.f32 0.0, %v3399
      %3401 = vmatmul.bf16.gmra.mxu0 %v3366
      %v3402 = vpop.f32.mrf.mxu0
      %v3403 = vadd.f32 0.0, %v3402
      %v3404 = vpop.f32.mrf.mxu0
      %v3405 = vadd.f32 0.0, %v3404
      %3406 = vdwg.mxu0
      %3407 = vmatpush.bf16.msra.mxu0 0
      %3408 = vmatpush.bf16.msra.mxu0 0
      %3409 = vmatpush.bf16.msra.mxu0 %v3302
      %3410 = vmatpush.bf16.msra.mxu0 %v3284
      %3411 = vmatpush.bf16.msra.mxu0 %v3266
      %3412 = vmatpush.bf16.msra.mxu0 %v3248
      %3413 = vmatpush.bf16.msra.mxu0 %v3230
      %3414 = vmatpush.bf16.msra.mxu0 %v3212
      %3415 = vmatmul.bf16.gmra.mxu0 %v3351
      %v3416 = vpop.f32.mrf.mxu0
      %v3417 = vadd.f32 0.0, %v3416
      %v3418 = vpop.f32.mrf.mxu0
      %v3419 = vadd.f32 0.0, %v3418
      %3420 = vmatmul.bf16.gmra.mxu0 %v3354
      %v3421 = vpop.f32.mrf.mxu0
      %v3422 = vadd.f32 0.0, %v3421
      %v3423 = vpop.f32.mrf.mxu0
      %v3424 = vadd.f32 0.0, %v3423
      %3425 = vmatmul.bf16.gmra.mxu0 %v3357
      %v3426 = vpop.f32.mrf.mxu0
      %v3427 = vadd.f32 0.0, %v3426
      %v3428 = vpop.f32.mrf.mxu0
      %v3429 = vadd.f32 0.0, %v3428
      %3430 = vmatmul.bf16.gmra.mxu0 %v3360
      %v3431 = vpop.f32.mrf.mxu0
      %v3432 = vadd.f32 0.0, %v3431
      %v3433 = vpop.f32.mrf.mxu0
      %v3434 = vadd.f32 0.0, %v3433
      %3435 = vmatmul.bf16.gmra.mxu0 %v3363
      %v3436 = vpop.f32.mrf.mxu0
      %v3437 = vadd.f32 0.0, %v3436
      %v3438 = vpop.f32.mrf.mxu0
      %v3439 = vadd.f32 0.0, %v3438
      %3440 = vmatmul.bf16.gmra.mxu0 %v3366
      %v3441 = vpop.f32.mrf.mxu0
      %v3442 = vadd.f32 0.0, %v3441
      %v3443 = vpop.f32.mrf.mxu0
      %v3444 = vadd.f32 0.0, %v3443
      %3445 = vdwg.mxu0
      %3446 = vmatpush.bf16.msra.mxu0 0
      %3447 = vmatpush.bf16.msra.mxu0 0
      %3448 = vmatpush.bf16.msra.mxu0 %v3303
      %3449 = vmatpush.bf16.msra.mxu0 %v3285
      %3450 = vmatpush.bf16.msra.mxu0 %v3267
      %3451 = vmatpush.bf16.msra.mxu0 %v3249
      %3452 = vmatpush.bf16.msra.mxu0 %v3231
      %3453 = vmatpush.bf16.msra.mxu0 %v3213
      %3454 = vmatmul.bf16.gmra.mxu0 %v3351
      %v3455 = vpop.f32.mrf.mxu0
      %v3456 = vadd.f32 0.0, %v3455
      %v3457 = vpop.f32.mrf.mxu0
      %v3458 = vadd.f32 0.0, %v3457
      %3459 = vmatmul.bf16.gmra.mxu0 %v3354
      %v3460 = vpop.f32.mrf.mxu0
      %v3461 = vadd.f32 0.0, %v3460
      %v3462 = vpop.f32.mrf.mxu0
      %v3463 = vadd.f32 0.0, %v3462
      %3464 = vmatmul.bf16.gmra.mxu0 %v3357
      %v3465 = vpop.f32.mrf.mxu0
      %v3466 = vadd.f32 0.0, %v3465
      %v3467 = vpop.f32.mrf.mxu0
      %v3468 = vadd.f32 0.0, %v3467
      %3469 = vmatmul.bf16.gmra.mxu0 %v3360
      %v3470 = vpop.f32.mrf.mxu0
      %v3471 = vadd.f32 0.0, %v3470
      %v3472 = vpop.f32.mrf.mxu0
      %v3473 = vadd.f32 0.0, %v3472
      %3474 = vmatmul.bf16.gmra.mxu0 %v3363
      %v3475 = vpop.f32.mrf.mxu0
      %v3476 = vadd.f32 0.0, %v3475
      %v3477 = vpop.f32.mrf.mxu0
      %v3478 = vadd.f32 0.0, %v3477
      %3479 = vmatmul.bf16.gmra.mxu0 %v3366
      %v3480 = vpop.f32.mrf.mxu0
      %v3481 = vadd.f32 0.0, %v3480
      %v3482 = vpop.f32.mrf.mxu0
      %v3483 = vadd.f32 0.0, %v3482
      %3484 = vdwg.mxu0
      %3485 = vmatpush.bf16.msra.mxu0 0
      %3486 = vmatpush.bf16.msra.mxu0 0
      %3487 = vmatpush.bf16.msra.mxu0 %v3304
      %3488 = vmatpush.bf16.msra.mxu0 %v3286
      %3489 = vmatpush.bf16.msra.mxu0 %v3268
      %3490 = vmatpush.bf16.msra.mxu0 %v3250
      %3491 = vmatpush.bf16.msra.mxu0 %v3232
      %3492 = vmatpush.bf16.msra.mxu0 %v3214
      %3493 = vmatmul.bf16.gmra.mxu0 %v3351
      %v3494 = vpop.f32.mrf.mxu0
      %v3495 = vadd.f32 0.0, %v3494
      %v3496 = vpop.f32.mrf.mxu0
      %v3497 = vadd.f32 0.0, %v3496
      %3498 = vmatmul.bf16.gmra.mxu0 %v3354
      %v3499 = vpop.f32.mrf.mxu0
      %v3500 = vadd.f32 0.0, %v3499
      %v3501 = vpop.f32.mrf.mxu0
      %v3502 = vadd.f32 0.0, %v3501
      %3503 = vmatmul.bf16.gmra.mxu0 %v3357
      %v3504 = vpop.f32.mrf.mxu0
      %v3505 = vadd.f32 0.0, %v3504
      %v3506 = vpop.f32.mrf.mxu0
      %v3507 = vadd.f32 0.0, %v3506
      %3508 = vmatmul.bf16.gmra.mxu0 %v3360
      %v3509 = vpop.f32.mrf.mxu0
      %v3510 = vadd.f32 0.0, %v3509
      %v3511 = vpop.f32.mrf.mxu0
      %v3512 = vadd.f32 0.0, %v3511
      %3513 = vmatmul.bf16.gmra.mxu0 %v3363
      %v3514 = vpop.f32.mrf.mxu0
      %v3515 = vadd.f32 0.0, %v3514
      %v3516 = vpop.f32.mrf.mxu0
      %v3517 = vadd.f32 0.0, %v3516
      %3518 = vmatmul.bf16.gmra.mxu0 %v3366
      %v3519 = vpop.f32.mrf.mxu0
      %v3520 = vadd.f32 0.0, %v3519
      %v3521 = vpop.f32.mrf.mxu0
      %v3522 = vadd.f32 0.0, %v3521
      %3523 = vdwg.mxu0
      %3524 = vmatpush.bf16.msra.mxu0 0
      %3525 = vmatpush.bf16.msra.mxu0 0
      %3526 = vmatpush.bf16.msra.mxu0 %v3305
      %3527 = vmatpush.bf16.msra.mxu0 %v3287
      %3528 = vmatpush.bf16.msra.mxu0 %v3269
      %3529 = vmatpush.bf16.msra.mxu0 %v3251
      %3530 = vmatpush.bf16.msra.mxu0 %v3233
      %3531 = vmatpush.bf16.msra.mxu0 %v3215
      %3532 = vmatmul.bf16.gmra.mxu0 %v3351
      %v3533 = vpop.f32.mrf.mxu0
      %v3534 = vadd.f32 0.0, %v3533
      %v3535 = vpop.f32.mrf.mxu0
      %v3536 = vadd.f32 0.0, %v3535
      %3537 = vmatmul.bf16.gmra.mxu0 %v3354
      %v3538 = vpop.f32.mrf.mxu0
      %v3539 = vadd.f32 0.0, %v3538
      %v3540 = vpop.f32.mrf.mxu0
      %v3541 = vadd.f32 0.0, %v3540
      %3542 = vmatmul.bf16.gmra.mxu0 %v3357
      %v3543 = vpop.f32.mrf.mxu0
      %v3544 = vadd.f32 0.0, %v3543
      %v3545 = vpop.f32.mrf.mxu0
      %v3546 = vadd.f32 0.0, %v3545
      %3547 = vmatmul.bf16.gmra.mxu0 %v3360
      %v3548 = vpop.f32.mrf.mxu0
      %v3549 = vadd.f32 0.0, %v3548
      %v3550 = vpop.f32.mrf.mxu0
      %v3551 = vadd.f32 0.0, %v3550
      %3552 = vmatmul.bf16.gmra.mxu0 %v3363
      %v3553 = vpop.f32.mrf.mxu0
      %v3554 = vadd.f32 0.0, %v3553
      %v3555 = vpop.f32.mrf.mxu0
      %v3556 = vadd.f32 0.0, %v3555
      %3557 = vmatmul.bf16.gmra.mxu0 %v3366
      %v3558 = vpop.f32.mrf.mxu0
      %v3559 = vadd.f32 0.0, %v3558
      %v3560 = vpop.f32.mrf.mxu0
      %v3561 = vadd.f32 0.0, %v3560
      %3562 = vdwg.mxu0
      %3563 = vmatpush.bf16.msra.mxu0 0
      %3564 = vmatpush.bf16.msra.mxu0 0
      %3565 = vmatpush.bf16.msra.mxu0 %v3306
      %3566 = vmatpush.bf16.msra.mxu0 %v3288
      %3567 = vmatpush.bf16.msra.mxu0 %v3270
      %3568 = vmatpush.bf16.msra.mxu0 %v3252
      %3569 = vmatpush.bf16.msra.mxu0 %v3234
      %3570 = vmatpush.bf16.msra.mxu0 %v3216
      %3571 = vmatmul.bf16.gmra.mxu0 %v3351
      %v3572 = vpop.f32.mrf.mxu0
      %v3573 = vadd.f32 0.0, %v3572
      %v3574 = vpop.f32.mrf.mxu0
      %v3575 = vadd.f32 0.0, %v3574
      %3576 = vmatmul.bf16.gmra.mxu0 %v3354
      %v3577 = vpop.f32.mrf.mxu0
      %v3578 = vadd.f32 0.0, %v3577
      %v3579 = vpop.f32.mrf.mxu0
      %v3580 = vadd.f32 0.0, %v3579
      %3581 = vmatmul.bf16.gmra.mxu0 %v3357
      %v3582 = vpop.f32.mrf.mxu0
      %v3583 = vadd.f32 0.0, %v3582
      %v3584 = vpop.f32.mrf.mxu0
      %v3585 = vadd.f32 0.0, %v3584
      %3586 = vmatmul.bf16.gmra.mxu0 %v3360
      %v3587 = vpop.f32.mrf.mxu0
      %v3588 = vadd.f32 0.0, %v3587
      %v3589 = vpop.f32.mrf.mxu0
      %v3590 = vadd.f32 0.0, %v3589
      %3591 = vmatmul.bf16.gmra.mxu0 %v3363
      %v3592 = vpop.f32.mrf.mxu0
      %v3593 = vadd.f32 0.0, %v3592
      %v3594 = vpop.f32.mrf.mxu0
      %v3595 = vadd.f32 0.0, %v3594
      %3596 = vmatmul.bf16.gmra.mxu0 %v3366
      %v3597 = vpop.f32.mrf.mxu0
      %v3598 = vadd.f32 0.0, %v3597
      %v3599 = vpop.f32.mrf.mxu0
      %v3600 = vadd.f32 0.0, %v3599
      %3601 = vdwg.mxu0
      %3602 = vmatpush.bf16.msra.mxu0 0
      %3603 = vmatpush.bf16.msra.mxu0 0
      %3604 = vmatpush.bf16.msra.mxu0 %v3307
      %3605 = vmatpush.bf16.msra.mxu0 %v3289
      %3606 = vmatpush.bf16.msra.mxu0 %v3271
      %3607 = vmatpush.bf16.msra.mxu0 %v3253
      %3608 = vmatpush.bf16.msra.mxu0 %v3235
      %3609 = vmatpush.bf16.msra.mxu0 %v3217
      %3610 = vmatmul.bf16.gmra.mxu0 %v3351
      %v3611 = vpop.f32.mrf.mxu0
      %v3612 = vadd.f32 0.0, %v3611
      %v3613 = vpop.f32.mrf.mxu0
      %v3614 = vadd.f32 0.0, %v3613
      %3615 = vmatmul.bf16.gmra.mxu0 %v3354
      %v3616 = vpop.f32.mrf.mxu0
      %v3617 = vadd.f32 0.0, %v3616
      %v3618 = vpop.f32.mrf.mxu0
      %v3619 = vadd.f32 0.0, %v3618
      %3620 = vmatmul.bf16.gmra.mxu0 %v3357
      %v3621 = vpop.f32.mrf.mxu0
      %v3622 = vadd.f32 0.0, %v3621
      %v3623 = vpop.f32.mrf.mxu0
      %v3624 = vadd.f32 0.0, %v3623
      %3625 = vmatmul.bf16.gmra.mxu0 %v3360
      %v3626 = vpop.f32.mrf.mxu0
      %v3627 = vadd.f32 0.0, %v3626
      %v3628 = vpop.f32.mrf.mxu0
      %v3629 = vadd.f32 0.0, %v3628
      %3630 = vmatmul.bf16.gmra.mxu0 %v3363
      %v3631 = vpop.f32.mrf.mxu0
      %v3632 = vadd.f32 0.0, %v3631
      %v3633 = vpop.f32.mrf.mxu0
      %v3634 = vadd.f32 0.0, %v3633
      %3635 = vmatmul.bf16.gmra.mxu0 %v3366
      %v3636 = vpop.f32.mrf.mxu0
      %v3637 = vadd.f32 0.0, %v3636
      %v3638 = vpop.f32.mrf.mxu0
      %v3639 = vadd.f32 0.0, %v3638
      %3640 = vdwg.mxu0
      %3641 = vmatpush.bf16.msra.mxu0 0
      %3642 = vmatpush.bf16.msra.mxu0 0
      %3643 = vmatpush.bf16.msra.mxu0 %v3308
      %3644 = vmatpush.bf16.msra.mxu0 %v3290
      %3645 = vmatpush.bf16.msra.mxu0 %v3272
      %3646 = vmatpush.bf16.msra.mxu0 %v3254
      %3647 = vmatpush.bf16.msra.mxu0 %v3236
      %3648 = vmatpush.bf16.msra.mxu0 %v3218
      %3649 = vmatmul.bf16.gmra.mxu0 %v3351
      %v3650 = vpop.f32.mrf.mxu0
      %v3651 = vadd.f32 0.0, %v3650
      %v3652 = vpop.f32.mrf.mxu0
      %v3653 = vadd.f32 0.0, %v3652
      %3654 = vmatmul.bf16.gmra.mxu0 %v3354
      %v3655 = vpop.f32.mrf.mxu0
      %v3656 = vadd.f32 0.0, %v3655
      %v3657 = vpop.f32.mrf.mxu0
      %v3658 = vadd.f32 0.0, %v3657
      %3659 = vmatmul.bf16.gmra.mxu0 %v3357
      %v3660 = vpop.f32.mrf.mxu0
      %v3661 = vadd.f32 0.0, %v3660
      %v3662 = vpop.f32.mrf.mxu0
      %v3663 = vadd.f32 0.0, %v3662
      %3664 = vmatmul.bf16.gmra.mxu0 %v3360
      %v3665 = vpop.f32.mrf.mxu0
      %v3666 = vadd.f32 0.0, %v3665
      %v3667 = vpop.f32.mrf.mxu0
      %v3668 = vadd.f32 0.0, %v3667
      %3669 = vmatmul.bf16.gmra.mxu0 %v3363
      %v3670 = vpop.f32.mrf.mxu0
      %v3671 = vadd.f32 0.0, %v3670
      %v3672 = vpop.f32.mrf.mxu0
      %v3673 = vadd.f32 0.0, %v3672
      %3674 = vmatmul.bf16.gmra.mxu0 %v3366
      %v3675 = vpop.f32.mrf.mxu0
      %v3676 = vadd.f32 0.0, %v3675
      %v3677 = vpop.f32.mrf.mxu0
      %v3678 = vadd.f32 0.0, %v3677
      %3679 = vdwg.mxu0
      %3680 = vmatpush.bf16.msra.mxu0 0
      %3681 = vmatpush.bf16.msra.mxu0 0
      %3682 = vmatpush.bf16.msra.mxu0 %v3309
      %3683 = vmatpush.bf16.msra.mxu0 %v3291
      %3684 = vmatpush.bf16.msra.mxu0 %v3273
      %3685 = vmatpush.bf16.msra.mxu0 %v3255
      %3686 = vmatpush.bf16.msra.mxu0 %v3237
      %3687 = vmatpush.bf16.msra.mxu0 %v3219
      %3688 = vmatmul.bf16.gmra.mxu0 %v3351
      %v3689 = vpop.f32.mrf.mxu0
      %v3690 = vadd.f32 0.0, %v3689
      %v3691 = vpop.f32.mrf.mxu0
      %v3692 = vadd.f32 0.0, %v3691
      %3693 = vmatmul.bf16.gmra.mxu0 %v3354
      %v3694 = vpop.f32.mrf.mxu0
      %v3695 = vadd.f32 0.0, %v3694
      %v3696 = vpop.f32.mrf.mxu0
      %v3697 = vadd.f32 0.0, %v3696
      %3698 = vmatmul.bf16.gmra.mxu0 %v3357
      %v3699 = vpop.f32.mrf.mxu0
      %v3700 = vadd.f32 0.0, %v3699
      %v3701 = vpop.f32.mrf.mxu0
      %v3702 = vadd.f32 0.0, %v3701
      %3703 = vmatmul.bf16.gmra.mxu0 %v3360
      %v3704 = vpop.f32.mrf.mxu0
      %v3705 = vadd.f32 0.0, %v3704
      %v3706 = vpop.f32.mrf.mxu0
      %v3707 = vadd.f32 0.0, %v3706
      %3708 = vmatmul.bf16.gmra.mxu0 %v3363
      %v3709 = vpop.f32.mrf.mxu0
      %v3710 = vadd.f32 0.0, %v3709
      %v3711 = vpop.f32.mrf.mxu0
      %v3712 = vadd.f32 0.0, %v3711
      %3713 = vmatmul.bf16.gmra.mxu0 %v3366
      %v3714 = vpop.f32.mrf.mxu0
      %v3715 = vadd.f32 0.0, %v3714
      %v3716 = vpop.f32.mrf.mxu0
      %v3717 = vadd.f32 0.0, %v3716
      %3718 = vdwg.mxu0
      %3719 = vmatpush.bf16.msra.mxu0 0
      %3720 = vmatpush.bf16.msra.mxu0 0
      %3721 = vmatpush.bf16.msra.mxu0 %v3310
      %3722 = vmatpush.bf16.msra.mxu0 %v3292
      %3723 = vmatpush.bf16.msra.mxu0 %v3274
      %3724 = vmatpush.bf16.msra.mxu0 %v3256
      %3725 = vmatpush.bf16.msra.mxu0 %v3238
      %3726 = vmatpush.bf16.msra.mxu0 %v3220
      %3727 = vmatmul.bf16.gmra.mxu0 %v3351
      %v3728 = vpop.f32.mrf.mxu0
      %v3729 = vadd.f32 0.0, %v3728
      %v3730 = vpop.f32.mrf.mxu0
      %v3731 = vadd.f32 0.0, %v3730
      %3732 = vmatmul.bf16.gmra.mxu0 %v3354
      %v3733 = vpop.f32.mrf.mxu0
      %v3734 = vadd.f32 0.0, %v3733
      %v3735 = vpop.f32.mrf.mxu0
      %v3736 = vadd.f32 0.0, %v3735
      %3737 = vmatmul.bf16.gmra.mxu0 %v3357
      %v3738 = vpop.f32.mrf.mxu0
      %v3739 = vadd.f32 0.0, %v3738
      %v3740 = vpop.f32.mrf.mxu0
      %v3741 = vadd.f32 0.0, %v3740
      %3742 = vmatmul.bf16.gmra.mxu0 %v3360
      %v3743 = vpop.f32.mrf.mxu0
      %v3744 = vadd.f32 0.0, %v3743
      %v3745 = vpop.f32.mrf.mxu0
      %v3746 = vadd.f32 0.0, %v3745
      %3747 = vmatmul.bf16.gmra.mxu0 %v3363
      %v3748 = vpop.f32.mrf.mxu0
      %v3749 = vadd.f32 0.0, %v3748
      %v3750 = vpop.f32.mrf.mxu0
      %v3751 = vadd.f32 0.0, %v3750
      %3752 = vmatmul.bf16.gmra.mxu0 %v3366
      %v3753 = vpop.f32.mrf.mxu0
      %v3754 = vadd.f32 0.0, %v3753
      %v3755 = vpop.f32.mrf.mxu0
      %v3756 = vadd.f32 0.0, %v3755
      %3757 = vdwg.mxu0
      %3758 = vmatpush.bf16.msra.mxu0 0
      %3759 = vmatpush.bf16.msra.mxu0 0
      %3760 = vmatpush.bf16.msra.mxu0 %v3311
      %3761 = vmatpush.bf16.msra.mxu0 %v3293
      %3762 = vmatpush.bf16.msra.mxu0 %v3275
      %3763 = vmatpush.bf16.msra.mxu0 %v3257
      %3764 = vmatpush.bf16.msra.mxu0 %v3239
      %3765 = vmatpush.bf16.msra.mxu0 %v3221
      %3766 = vmatmul.bf16.gmra.mxu0 %v3351
      %v3767 = vpop.f32.mrf.mxu0
      %v3768 = vadd.f32 0.0, %v3767
      %v3769 = vpop.f32.mrf.mxu0
      %v3770 = vadd.f32 0.0, %v3769
      %3771 = vmatmul.bf16.gmra.mxu0 %v3354
      %v3772 = vpop.f32.mrf.mxu0
      %v3773 = vadd.f32 0.0, %v3772
      %v3774 = vpop.f32.mrf.mxu0
      %v3775 = vadd.f32 0.0, %v3774
      %3776 = vmatmul.bf16.gmra.mxu0 %v3357
      %v3777 = vpop.f32.mrf.mxu0
      %v3778 = vadd.f32 0.0, %v3777
      %v3779 = vpop.f32.mrf.mxu0
      %v3780 = vadd.f32 0.0, %v3779
      %3781 = vmatmul.bf16.gmra.mxu0 %v3360
      %v3782 = vpop.f32.mrf.mxu0
      %v3783 = vadd.f32 0.0, %v3782
      %v3784 = vpop.f32.mrf.mxu0
      %v3785 = vadd.f32 0.0, %v3784
      %3786 = vmatmul.bf16.gmra.mxu0 %v3363
      %v3787 = vpop.f32.mrf.mxu0
      %v3788 = vadd.f32 0.0, %v3787
      %v3789 = vpop.f32.mrf.mxu0
      %v3790 = vadd.f32 0.0, %v3789
      %3791 = vmatmul.bf16.gmra.mxu0 %v3366
      %v3792 = vpop.f32.mrf.mxu0
      %v3793 = vadd.f32 0.0, %v3792
      %v3794 = vpop.f32.mrf.mxu0
      %v3795 = vadd.f32 0.0, %v3794
      %3796 = vdwg.mxu0
      %3797 = vmatpush.bf16.msra.mxu0 0
      %3798 = vmatpush.bf16.msra.mxu0 0
      %3799 = vmatpush.bf16.msra.mxu0 %v3312
      %3800 = vmatpush.bf16.msra.mxu0 %v3294
      %3801 = vmatpush.bf16.msra.mxu0 %v3276
      %3802 = vmatpush.bf16.msra.mxu0 %v3258
      %3803 = vmatpush.bf16.msra.mxu0 %v3240
      %3804 = vmatpush.bf16.msra.mxu0 %v3222
      %3805 = vmatmul.bf16.gmra.mxu0 %v3351
      %v3806 = vpop.f32.mrf.mxu0
      %v3807 = vadd.f32 0.0, %v3806
      %v3808 = vpop.f32.mrf.mxu0
      %v3809 = vadd.f32 0.0, %v3808
      %3810 = vmatmul.bf16.gmra.mxu0 %v3354
      %v3811 = vpop.f32.mrf.mxu0
      %v3812 = vadd.f32 0.0, %v3811
      %v3813 = vpop.f32.mrf.mxu0
      %v3814 = vadd.f32 0.0, %v3813
      %3815 = vmatmul.bf16.gmra.mxu0 %v3357
      %v3816 = vpop.f32.mrf.mxu0
      %v3817 = vadd.f32 0.0, %v3816
      %v3818 = vpop.f32.mrf.mxu0
      %v3819 = vadd.f32 0.0, %v3818
      %3820 = vmatmul.bf16.gmra.mxu0 %v3360
      %v3821 = vpop.f32.mrf.mxu0
      %v3822 = vadd.f32 0.0, %v3821
      %v3823 = vpop.f32.mrf.mxu0
      %v3824 = vadd.f32 0.0, %v3823
      %3825 = vmatmul.bf16.gmra.mxu0 %v3363
      %v3826 = vpop.f32.mrf.mxu0
      %v3827 = vadd.f32 0.0, %v3826
      %v3828 = vpop.f32.mrf.mxu0
      %v3829 = vadd.f32 0.0, %v3828
      %3830 = vmatmul.bf16.gmra.mxu0 %v3366
      %v3831 = vpop.f32.mrf.mxu0
      %v3832 = vadd.f32 0.0, %v3831
      %v3833 = vpop.f32.mrf.mxu0
      %v3834 = vadd.f32 0.0, %v3833
      %3835 = vdwg.mxu0
      %3836 = vmatpush.bf16.msra.mxu0 0
      %3837 = vmatpush.bf16.msra.mxu0 0
      %3838 = vmatpush.bf16.msra.mxu0 %v3313
      %3839 = vmatpush.bf16.msra.mxu0 %v3295
      %3840 = vmatpush.bf16.msra.mxu0 %v3277
      %3841 = vmatpush.bf16.msra.mxu0 %v3259
      %3842 = vmatpush.bf16.msra.mxu0 %v3241
      %3843 = vmatpush.bf16.msra.mxu0 %v3223
      %3844 = vmatmul.bf16.gmra.mxu0 %v3351
      %v3845 = vpop.f32.mrf.mxu0
      %v3846 = vadd.f32 0.0, %v3845
      %v3847 = vpop.f32.mrf.mxu0
      %v3848 = vadd.f32 0.0, %v3847
      %3849 = vmatmul.bf16.gmra.mxu0 %v3354
      %v3850 = vpop.f32.mrf.mxu0
      %v3851 = vadd.f32 0.0, %v3850
      %v3852 = vpop.f32.mrf.mxu0
      %v3853 = vadd.f32 0.0, %v3852
      %3854 = vmatmul.bf16.gmra.mxu0 %v3357
      %v3855 = vpop.f32.mrf.mxu0
      %v3856 = vadd.f32 0.0, %v3855
      %v3857 = vpop.f32.mrf.mxu0
      %v3858 = vadd.f32 0.0, %v3857
      %3859 = vmatmul.bf16.gmra.mxu0 %v3360
      %v3860 = vpop.f32.mrf.mxu0
      %v3861 = vadd.f32 0.0, %v3860
      %v3862 = vpop.f32.mrf.mxu0
      %v3863 = vadd.f32 0.0, %v3862
      %3864 = vmatmul.bf16.gmra.mxu0 %v3363
      %v3865 = vpop.f32.mrf.mxu0
      %v3866 = vadd.f32 0.0, %v3865
      %v3867 = vpop.f32.mrf.mxu0
      %v3868 = vadd.f32 0.0, %v3867
      %3869 = vmatmul.bf16.gmra.mxu0 %v3366
      %v3870 = vpop.f32.mrf.mxu0
      %v3871 = vadd.f32 0.0, %v3870
      %v3872 = vpop.f32.mrf.mxu0
      %v3873 = vadd.f32 0.0, %v3872
      %3874 = vdwg.mxu0
      %3875 = vmatpush.bf16.msra.mxu0 0
      %3876 = vmatpush.bf16.msra.mxu0 0
      %3877 = vmatpush.bf16.msra.mxu0 %v3314
      %3878 = vmatpush.bf16.msra.mxu0 %v3296
      %3879 = vmatpush.bf16.msra.mxu0 %v3278
      %3880 = vmatpush.bf16.msra.mxu0 %v3260
      %3881 = vmatpush.bf16.msra.mxu0 %v3242
      %3882 = vmatpush.bf16.msra.mxu0 %v3224
      %3883 = vmatmul.bf16.gmra.mxu0 %v3351
      %v3884 = vpop.f32.mrf.mxu0
      %v3885 = vadd.f32 0.0, %v3884
      %v3886 = vpop.f32.mrf.mxu0
      %v3887 = vadd.f32 0.0, %v3886
      %3888 = vmatmul.bf16.gmra.mxu0 %v3354
      %v3889 = vpop.f32.mrf.mxu0
      %v3890 = vadd.f32 0.0, %v3889
      %v3891 = vpop.f32.mrf.mxu0
      %v3892 = vadd.f32 0.0, %v3891
      %3893 = vmatmul.bf16.gmra.mxu0 %v3357
      %v3894 = vpop.f32.mrf.mxu0
      %v3895 = vadd.f32 0.0, %v3894
      %v3896 = vpop.f32.mrf.mxu0
      %v3897 = vadd.f32 0.0, %v3896
      %3898 = vmatmul.bf16.gmra.mxu0 %v3360
      %v3899 = vpop.f32.mrf.mxu0
      %v3900 = vadd.f32 0.0, %v3899
      %v3901 = vpop.f32.mrf.mxu0
      %v3902 = vadd.f32 0.0, %v3901
      %3903 = vmatmul.bf16.gmra.mxu0 %v3363
      %v3904 = vpop.f32.mrf.mxu0
      %v3905 = vadd.f32 0.0, %v3904
      %v3906 = vpop.f32.mrf.mxu0
      %v3907 = vadd.f32 0.0, %v3906
      %3908 = vmatmul.bf16.gmra.mxu0 %v3366
      %v3909 = vpop.f32.mrf.mxu0
      %v3910 = vadd.f32 0.0, %v3909
      %v3911 = vpop.f32.mrf.mxu0
      %v3912 = vadd.f32 0.0, %v3911
      %3913 = vdwg.mxu0
      %3914 = vmatpush.bf16.msra.mxu0 0
      %3915 = vmatpush.bf16.msra.mxu0 0
      %3916 = vmatpush.bf16.msra.mxu0 %v3315
      %3917 = vmatpush.bf16.msra.mxu0 %v3297
      %3918 = vmatpush.bf16.msra.mxu0 %v3279
      %3919 = vmatpush.bf16.msra.mxu0 %v3261
      %3920 = vmatpush.bf16.msra.mxu0 %v3243
      %3921 = vmatpush.bf16.msra.mxu0 %v3225
      %3922 = vmatmul.bf16.gmra.mxu0 %v3351
      %v3923 = vpop.f32.mrf.mxu0
      %v3924 = vadd.f32 0.0, %v3923
      %v3925 = vpop.f32.mrf.mxu0
      %v3926 = vadd.f32 0.0, %v3925
      %3927 = vmatmul.bf16.gmra.mxu0 %v3354
      %v3928 = vpop.f32.mrf.mxu0
      %v3929 = vadd.f32 0.0, %v3928
      %v3930 = vpop.f32.mrf.mxu0
      %v3931 = vadd.f32 0.0, %v3930
      %3932 = vmatmul.bf16.gmra.mxu0 %v3357
      %v3933 = vpop.f32.mrf.mxu0
      %v3934 = vadd.f32 0.0, %v3933
      %v3935 = vpop.f32.mrf.mxu0
      %v3936 = vadd.f32 0.0, %v3935
      %3937 = vmatmul.bf16.gmra.mxu0 %v3360
      %v3938 = vpop.f32.mrf.mxu0
      %v3939 = vadd.f32 0.0, %v3938
      %v3940 = vpop.f32.mrf.mxu0
      %v3941 = vadd.f32 0.0, %v3940
      %3942 = vmatmul.bf16.gmra.mxu0 %v3363
      %v3943 = vpop.f32.mrf.mxu0
      %v3944 = vadd.f32 0.0, %v3943
      %v3945 = vpop.f32.mrf.mxu0
      %v3946 = vadd.f32 0.0, %v3945
      %3947 = vmatmul.bf16.gmra.mxu0 %v3366
      %v3948 = vpop.f32.mrf.mxu0
      %v3949 = vadd.f32 0.0, %v3948
      %v3950 = vpop.f32.mrf.mxu0
      %v3951 = vadd.f32 0.0, %v3950
      %3952 = vdwg.mxu0
      %3953 = vmatpush.bf16.msra.mxu0 0
      %3954 = vmatpush.bf16.msra.mxu0 0
      %3955 = vmatpush.bf16.msra.mxu0 %v3316
      %3956 = vmatpush.bf16.msra.mxu0 %v3298
      %3957 = vmatpush.bf16.msra.mxu0 %v3280
      %3958 = vmatpush.bf16.msra.mxu0 %v3262
      %3959 = vmatpush.bf16.msra.mxu0 %v3244
      %3960 = vmatpush.bf16.msra.mxu0 %v3226
      %3961 = vmatmul.bf16.gmra.mxu0 %v3351
      %v3962 = vpop.f32.mrf.mxu0
      %v3963 = vadd.f32 0.0, %v3962
      %v3964 = vpop.f32.mrf.mxu0
      %v3965 = vadd.f32 0.0, %v3964
      %3966 = vmatmul.bf16.gmra.mxu0 %v3354
      %v3967 = vpop.f32.mrf.mxu0
      %v3968 = vadd.f32 0.0, %v3967
      %v3969 = vpop.f32.mrf.mxu0
      %v3970 = vadd.f32 0.0, %v3969
      %3971 = vmatmul.bf16.gmra.mxu0 %v3357
      %v3972 = vpop.f32.mrf.mxu0
      %v3973 = vadd.f32 0.0, %v3972
      %v3974 = vpop.f32.mrf.mxu0
      %v3975 = vadd.f32 0.0, %v3974
      %3976 = vmatmul.bf16.gmra.mxu0 %v3360
      %v3977 = vpop.f32.mrf.mxu0
      %v3978 = vadd.f32 0.0, %v3977
      %v3979 = vpop.f32.mrf.mxu0
      %v3980 = vadd.f32 0.0, %v3979
      %3981 = vmatmul.bf16.gmra.mxu0 %v3363
      %v3982 = vpop.f32.mrf.mxu0
      %v3983 = vadd.f32 0.0, %v3982
      %v3984 = vpop.f32.mrf.mxu0
      %v3985 = vadd.f32 0.0, %v3984
      %3986 = vmatmul.bf16.gmra.mxu0 %v3366
      %v3987 = vpop.f32.mrf.mxu0
      %v3988 = vadd.f32 0.0, %v3987
      %v3989 = vpop.f32.mrf.mxu0
      %v3990 = vadd.f32 0.0, %v3989
      %3991 = vdwg.mxu0
      %3992 = vmatpush.bf16.msra.mxu0 0
      %3993 = vmatpush.bf16.msra.mxu0 0
      %3994 = vmatpush.bf16.msra.mxu0 %v3317
      %3995 = vmatpush.bf16.msra.mxu0 %v3299
      %3996 = vmatpush.bf16.msra.mxu0 %v3281
      %3997 = vmatpush.bf16.msra.mxu0 %v3263
      %3998 = vmatpush.bf16.msra.mxu0 %v3245
      %3999 = vmatpush.bf16.msra.mxu0 %v3227
      %4000 = vmatmul.bf16.gmra.mxu0 %v3351
      %v4001 = vpop.f32.mrf.mxu0
      %v4002 = vadd.f32 0.0, %v4001
      %v4003 = vpop.f32.mrf.mxu0
      %v4004 = vadd.f32 0.0, %v4003
      %4005 = vmatmul.bf16.gmra.mxu0 %v3354
      %v4006 = vpop.f32.mrf.mxu0
      %v4007 = vadd.f32 0.0, %v4006
      %v4008 = vpop.f32.mrf.mxu0
      %v4009 = vadd.f32 0.0, %v4008
      %4010 = vmatmul.bf16.gmra.mxu0 %v3357
      %v4011 = vpop.f32.mrf.mxu0
      %v4012 = vadd.f32 0.0, %v4011
      %v4013 = vpop.f32.mrf.mxu0
      %v4014 = vadd.f32 0.0, %v4013
      %4015 = vmatmul.bf16.gmra.mxu0 %v3360
      %v4016 = vpop.f32.mrf.mxu0
      %v4017 = vadd.f32 0.0, %v4016
      %v4018 = vpop.f32.mrf.mxu0
      %v4019 = vadd.f32 0.0, %v4018
      %4020 = vmatmul.bf16.gmra.mxu0 %v3363
      %v4021 = vpop.f32.mrf.mxu0
      %v4022 = vadd.f32 0.0, %v4021
      %v4023 = vpop.f32.mrf.mxu0
      %v4024 = vadd.f32 0.0, %v4023
      %4025 = vmatmul.bf16.gmra.mxu0 %v3366
      %v4026 = vpop.f32.mrf.mxu0
      %v4027 = vadd.f32 0.0, %v4026
      %v4028 = vpop.f32.mrf.mxu0
      %v4029 = vadd.f32 0.0, %v4028
      %4030 = vdwg.mxu0
      %4031 = vmatpush.bf16.msra.mxu0 0
      %4032 = vmatpush.bf16.msra.mxu0 0
      %4033 = vmatpush.bf16.msra.mxu0 %v3318
      %4034 = vmatpush.bf16.msra.mxu0 %v3300
      %4035 = vmatpush.bf16.msra.mxu0 %v3282
      %4036 = vmatpush.bf16.msra.mxu0 %v3264
      %4037 = vmatpush.bf16.msra.mxu0 %v3246
      %4038 = vmatpush.bf16.msra.mxu0 %v3228
      %4039 = vmatmul.bf16.gmra.mxu0 %v3351
      %v4040 = vpop.f32.mrf.mxu0
      %v4041 = vadd.f32 0.0, %v4040
      %v4042 = vpop.f32.mrf.mxu0
      %v4043 = vadd.f32 0.0, %v4042
      %4044 = vmatmul.bf16.gmra.mxu0 %v3354
      %v4045 = vpop.f32.mrf.mxu0
      %v4046 = vadd.f32 0.0, %v4045
      %v4047 = vpop.f32.mrf.mxu0
      %v4048 = vadd.f32 0.0, %v4047
      %4049 = vmatmul.bf16.gmra.mxu0 %v3357
      %v4050 = vpop.f32.mrf.mxu0
      %v4051 = vadd.f32 0.0, %v4050
      %v4052 = vpop.f32.mrf.mxu0
      %v4053 = vadd.f32 0.0, %v4052
      %4054 = vmatmul.bf16.gmra.mxu0 %v3360
      %v4055 = vpop.f32.mrf.mxu0
      %v4056 = vadd.f32 0.0, %v4055
      %v4057 = vpop.f32.mrf.mxu0
      %v4058 = vadd.f32 0.0, %v4057
      %4059 = vmatmul.bf16.gmra.mxu0 %v3363
      %v4060 = vpop.f32.mrf.mxu0
      %v4061 = vadd.f32 0.0, %v4060
      %v4062 = vpop.f32.mrf.mxu0
      %v4063 = vadd.f32 0.0, %v4062
      %4064 = vmatmul.bf16.gmra.mxu0 %v3366
      %v4065 = vpop.f32.mrf.mxu0
      %v4066 = vadd.f32 0.0, %v4065
      %v4067 = vpop.f32.mrf.mxu0
      %v4068 = vadd.f32 0.0, %v4067
      %4069 = vdwg.mxu0
      %4070 = vrot.lane.b32.xlu0 %v3378, 16
      %v4071 = vpop.permute.xlu0 %4070
      %4072 = vrot.lane.b32.xlu0 %v3380, 16
      %v4073 = vpop.permute.xlu0 %4072
      %4074 = vrot.lane.b32.xlu0 %v3383, 16
      %v4075 = vpop.permute.xlu0 %4074
      %4076 = vrot.lane.b32.xlu0 %v3385, 16
      %v4077 = vpop.permute.xlu0 %4076
      %4078 = vrot.lane.b32.xlu0 %v3417, 16
      %v4079 = vpop.permute.xlu0 %4078
      %4080 = vrot.lane.b32.xlu0 %v3419, 16
      %v4081 = vpop.permute.xlu0 %4080
      %4082 = vrot.lane.b32.xlu0 %v3422, 16
      %v4083 = vpop.permute.xlu0 %4082
      %4084 = vrot.lane.b32.xlu0 %v3424, 16
      %v4085 = vpop.permute.xlu0 %4084
      %4086 = vrot.lane.b32.xlu0 %v3456, 16
      %v4087 = vpop.permute.xlu0 %4086
      %4088 = vrot.lane.b32.xlu0 %v3458, 16
      %v4089 = vpop.permute.xlu0 %4088
      %4090 = vrot.lane.b32.xlu0 %v3461, 16
      %v4091 = vpop.permute.xlu0 %4090
      %4092 = vrot.lane.b32.xlu0 %v3463, 16
      %v4093 = vpop.permute.xlu0 %4092
      %4094 = vrot.lane.b32.xlu0 %v3495, 16
      %v4095 = vpop.permute.xlu0 %4094
      %4096 = vrot.lane.b32.xlu0 %v3497, 16
      %v4097 = vpop.permute.xlu0 %4096
      %4098 = vrot.lane.b32.xlu0 %v3500, 16
      %v4099 = vpop.permute.xlu0 %4098
      %4100 = vrot.lane.b32.xlu0 %v3502, 16
      %v4101 = vpop.permute.xlu0 %4100
      %4102 = vrot.lane.b32.xlu0 %v3534, 16
      %v4103 = vpop.permute.xlu0 %4102
      %4104 = vrot.lane.b32.xlu0 %v3536, 16
      %v4105 = vpop.permute.xlu0 %4104
      %4106 = vrot.lane.b32.xlu0 %v3539, 16
      %v4107 = vpop.permute.xlu0 %4106
      %4108 = vrot.lane.b32.xlu0 %v3541, 16
      %v4109 = vpop.permute.xlu0 %4108
      %4110 = vrot.lane.b32.xlu0 %v3573, 16
      %v4111 = vpop.permute.xlu0 %4110
      %4112 = vrot.lane.b32.xlu0 %v3575, 16
      %v4113 = vpop.permute.xlu0 %4112
      %4114 = vrot.lane.b32.xlu0 %v3578, 16
      %v4115 = vpop.permute.xlu0 %4114
      %4116 = vrot.lane.b32.xlu0 %v3580, 16
      %v4117 = vpop.permute.xlu0 %4116
      %4118 = vrot.lane.b32.xlu0 %v3612, 16
      %v4119 = vpop.permute.xlu0 %4118
      %4120 = vrot.lane.b32.xlu0 %v3614, 16
      %v4121 = vpop.permute.xlu0 %4120
      %4122 = vrot.lane.b32.xlu0 %v3617, 16
      %v4123 = vpop.permute.xlu0 %4122
      %4124 = vrot.lane.b32.xlu0 %v3619, 16
      %v4125 = vpop.permute.xlu0 %4124
      %4126 = vrot.lane.b32.xlu0 %v3651, 16
      %v4127 = vpop.permute.xlu0 %4126
      %4128 = vrot.lane.b32.xlu0 %v3653, 16
      %v4129 = vpop.permute.xlu0 %4128
      %4130 = vrot.lane.b32.xlu0 %v3656, 16
      %v4131 = vpop.permute.xlu0 %4130
      %4132 = vrot.lane.b32.xlu0 %v3658, 16
      %v4133 = vpop.permute.xlu0 %4132
      %4134 = vrot.lane.b32.xlu0 %v3690, 16
      %v4135 = vpop.permute.xlu0 %4134
      %4136 = vrot.lane.b32.xlu0 %v3692, 16
      %v4137 = vpop.permute.xlu0 %4136
      %4138 = vrot.lane.b32.xlu0 %v3695, 16
      %v4139 = vpop.permute.xlu0 %4138
      %4140 = vrot.lane.b32.xlu0 %v3697, 16
      %v4141 = vpop.permute.xlu0 %4140
      %4142 = vrot.lane.b32.xlu0 %v3729, 16
      %v4143 = vpop.permute.xlu0 %4142
      %4144 = vrot.lane.b32.xlu0 %v3731, 16
      %v4145 = vpop.permute.xlu0 %4144
      %4146 = vrot.lane.b32.xlu0 %v3734, 16
      %v4147 = vpop.permute.xlu0 %4146
      %4148 = vrot.lane.b32.xlu0 %v3736, 16
      %v4149 = vpop.permute.xlu0 %4148
      %4150 = vrot.lane.b32.xlu0 %v3768, 16
      %v4151 = vpop.permute.xlu0 %4150
      %4152 = vrot.lane.b32.xlu0 %v3770, 16
      %v4153 = vpop.permute.xlu0 %4152
      %4154 = vrot.lane.b32.xlu0 %v3773, 16
      %v4155 = vpop.permute.xlu0 %4154
      %4156 = vrot.lane.b32.xlu0 %v3775, 16
      %v4157 = vpop.permute.xlu0 %4156
      %4158 = vrot.lane.b32.xlu0 %v3807, 16
      %v4159 = vpop.permute.xlu0 %4158
      %4160 = vrot.lane.b32.xlu0 %v3809, 16
      %v4161 = vpop.permute.xlu0 %4160
      %4162 = vrot.lane.b32.xlu0 %v3812, 16
      %v4163 = vpop.permute.xlu0 %4162
      %4164 = vrot.lane.b32.xlu0 %v3814, 16
      %v4165 = vpop.permute.xlu0 %4164
      %4166 = vrot.lane.b32.xlu0 %v3846, 16
      %v4167 = vpop.permute.xlu0 %4166
      %4168 = vrot.lane.b32.xlu0 %v3848, 16
      %v4169 = vpop.permute.xlu0 %4168
      %4170 = vrot.lane.b32.xlu0 %v3851, 16
      %v4171 = vpop.permute.xlu0 %4170
      %4172 = vrot.lane.b32.xlu0 %v3853, 16
      %v4173 = vpop.permute.xlu0 %4172
      %4174 = vrot.lane.b32.xlu0 %v3885, 16
      %v4175 = vpop.permute.xlu0 %4174
      %4176 = vrot.lane.b32.xlu0 %v3887, 16
      %v4177 = vpop.permute.xlu0 %4176
      %4178 = vrot.lane.b32.xlu0 %v3890, 16
      %v4179 = vpop.permute.xlu0 %4178
      %4180 = vrot.lane.b32.xlu0 %v3892, 16
      %v4181 = vpop.permute.xlu0 %4180
      %4182 = vrot.lane.b32.xlu0 %v3924, 16
      %v4183 = vpop.permute.xlu0 %4182
      %4184 = vrot.lane.b32.xlu0 %v3926, 16
      %v4185 = vpop.permute.xlu0 %4184
      %4186 = vrot.lane.b32.xlu0 %v3929, 16
      %v4187 = vpop.permute.xlu0 %4186
      %4188 = vrot.lane.b32.xlu0 %v3931, 16
      %v4189 = vpop.permute.xlu0 %4188
      %4190 = vrot.lane.b32.xlu0 %v3963, 16
      %v4191 = vpop.permute.xlu0 %4190
      %4192 = vrot.lane.b32.xlu0 %v3965, 16
      %v4193 = vpop.permute.xlu0 %4192
      %4194 = vrot.lane.b32.xlu0 %v3968, 16
      %v4195 = vpop.permute.xlu0 %4194
      %4196 = vrot.lane.b32.xlu0 %v3970, 16
      %v4197 = vpop.permute.xlu0 %4196
      %4198 = vrot.lane.b32.xlu0 %v4002, 16
      %v4199 = vpop.permute.xlu0 %4198
      %4200 = vrot.lane.b32.xlu0 %v4004, 16
      %v4201 = vpop.permute.xlu0 %4200
      %4202 = vrot.lane.b32.xlu0 %v4007, 16
      %v4203 = vpop.permute.xlu0 %4202
      %4204 = vrot.lane.b32.xlu0 %v4009, 16
      %v4205 = vpop.permute.xlu0 %4204
      %4206 = vrot.lane.b32.xlu0 %v4041, 16
      %v4207 = vpop.permute.xlu0 %4206
      %4208 = vrot.lane.b32.xlu0 %v4043, 16
      %v4209 = vpop.permute.xlu0 %4208
      %4210 = vrot.lane.b32.xlu0 %v4046, 16
      %v4211 = vpop.permute.xlu0 %4210
      %4212 = vrot.lane.b32.xlu0 %v4048, 16
      %v4213 = vpop.permute.xlu0 %4212
      %v4214 = vsel %vm1902, %v4199, %v4207
      %v4215 = vsel %vm1902, %v4201, %v4209
      %v4216 = vsel %vm1902, %v4203, %v4211
      %v4217 = vsel %vm1902, %v4205, %v4213
      %v4218 = vsel %vm1902, %v4191, %v4199
      %v4219 = vsel %vm1902, %v4193, %v4201
      %v4220 = vsel %vm1902, %v4195, %v4203
      %v4221 = vsel %vm1902, %v4197, %v4205
      %v4222 = vsel %vm1902, %v4183, %v4191
      %v4223 = vsel %vm1902, %v4185, %v4193
      %v4224 = vsel %vm1902, %v4187, %v4195
      %v4225 = vsel %vm1902, %v4189, %v4197
      %v4226 = vsel %vm1902, %v4175, %v4183
      %v4227 = vsel %vm1902, %v4177, %v4185
      %v4228 = vsel %vm1902, %v4179, %v4187
      %v4229 = vsel %vm1902, %v4181, %v4189
      %v4230 = vsel %vm1902, %v4167, %v4175
      %v4231 = vsel %vm1902, %v4169, %v4177
      %v4232 = vsel %vm1902, %v4171, %v4179
      %v4233 = vsel %vm1902, %v4173, %v4181
      %v4234 = vsel %vm1902, %v4159, %v4167
      %v4235 = vsel %vm1902, %v4161, %v4169
      %v4236 = vsel %vm1902, %v4163, %v4171
      %v4237 = vsel %vm1902, %v4165, %v4173
      %v4238 = vsel %vm1902, %v4151, %v4159
      %v4239 = vsel %vm1902, %v4153, %v4161
      %v4240 = vsel %vm1902, %v4155, %v4163
      %v4241 = vsel %vm1902, %v4157, %v4165
      %v4242 = vsel %vm1902, %v4143, %v4151
      %v4243 = vsel %vm1902, %v4145, %v4153
      %v4244 = vsel %vm1902, %v4147, %v4155
      %v4245 = vsel %vm1902, %v4149, %v4157
      %v4246 = vsel %vm1902, %v4135, %v4143
      %v4247 = vsel %vm1902, %v4137, %v4145
      %v4248 = vsel %vm1902, %v4139, %v4147
      %v4249 = vsel %vm1902, %v4141, %v4149
      %v4250 = vsel %vm1902, %v4127, %v4135
      %v4251 = vsel %vm1902, %v4129, %v4137
      %v4252 = vsel %vm1902, %v4131, %v4139
      %v4253 = vsel %vm1902, %v4133, %v4141
      %v4254 = vsel %vm1902, %v4119, %v4127
      %v4255 = vsel %vm1902, %v4121, %v4129
      %v4256 = vsel %vm1902, %v4123, %v4131
      %v4257 = vsel %vm1902, %v4125, %v4133
      %v4258 = vsel %vm1902, %v4111, %v4119
      %v4259 = vsel %vm1902, %v4113, %v4121
      %v4260 = vsel %vm1902, %v4115, %v4123
      %v4261 = vsel %vm1902, %v4117, %v4125
      %v4262 = vsel %vm1902, %v4103, %v4111
      %v4263 = vsel %vm1902, %v4105, %v4113
      %v4264 = vsel %vm1902, %v4107, %v4115
      %v4265 = vsel %vm1902, %v4109, %v4117
      %v4266 = vsel %vm1902, %v4095, %v4103
      %v4267 = vsel %vm1902, %v4097, %v4105
      %v4268 = vsel %vm1902, %v4099, %v4107
      %v4269 = vsel %vm1902, %v4101, %v4109
      %v4270 = vsel %vm1902, %v4087, %v4095
      %v4271 = vsel %vm1902, %v4089, %v4097
      %v4272 = vsel %vm1902, %v4091, %v4099
      %v4273 = vsel %vm1902, %v4093, %v4101
      %v4274 = vsel %vm1902, %v4079, %v4087
      %v4275 = vsel %vm1902, %v4081, %v4089
      %v4276 = vsel %vm1902, %v4083, %v4091
      %v4277 = vsel %vm1902, %v4085, %v4093
      %v4278 = vsel %vm1902, %v4071, %v4079
      %v4279 = vsel %vm1902, %v4073, %v4081
      %v4280 = vsel %vm1902, %v4075, %v4083
      %v4281 = vsel %vm1902, %v4077, %v4085
      %v4282 = vsel %vm1902, %v4207, %v4071
      %v4283 = vsel %vm1902, %v4209, %v4073
      %v4284 = vsel %vm1902, %v4211, %v4075
      %v4285 = vsel %vm1902, %v4213, %v4077
      %v4286 = vadd.f32 %v3388, %v4282
      %v4287 = vadd.f32 %v3427, %v4278
      %v4288 = vadd.f32 %v3466, %v4274
      %v4289 = vadd.f32 %v3505, %v4270
      %v4290 = vadd.f32 %v3544, %v4266
      %v4291 = vadd.f32 %v3583, %v4262
      %v4292 = vadd.f32 %v3622, %v4258
      %v4293 = vadd.f32 %v3661, %v4254
      %v4294 = vadd.f32 %v3700, %v4250
      %v4295 = vadd.f32 %v3739, %v4246
      %v4296 = vadd.f32 %v3778, %v4242
      %v4297 = vadd.f32 %v3817, %v4238
      %v4298 = vadd.f32 %v3856, %v4234
      %v4299 = vadd.f32 %v3895, %v4230
      %v4300 = vadd.f32 %v3934, %v4226
      %v4301 = vadd.f32 %v3973, %v4222
      %v4302 = vadd.f32 %v4012, %v4218
      %v4303 = vadd.f32 %v4051, %v4214
      %v4304 = vadd.f32 %v3390, %v4283
      %v4305 = vadd.f32 %v3429, %v4279
      %v4306 = vadd.f32 %v3468, %v4275
      %v4307 = vadd.f32 %v3507, %v4271
      %v4308 = vadd.f32 %v3546, %v4267
      %v4309 = vadd.f32 %v3585, %v4263
      %v4310 = vadd.f32 %v3624, %v4259
      %v4311 = vadd.f32 %v3663, %v4255
      %v4312 = vadd.f32 %v3702, %v4251
      %v4313 = vadd.f32 %v3741, %v4247
      %v4314 = vadd.f32 %v3780, %v4243
      %v4315 = vadd.f32 %v3819, %v4239
      %v4316 = vadd.f32 %v3858, %v4235
      %v4317 = vadd.f32 %v3897, %v4231
      %v4318 = vadd.f32 %v3936, %v4227
      %v4319 = vadd.f32 %v3975, %v4223
      %v4320 = vadd.f32 %v4014, %v4219
      %v4321 = vadd.f32 %v4053, %v4215
      %v4322 = vadd.f32 %v3393, %v4284
      %v4323 = vadd.f32 %v3432, %v4280
      %v4324 = vadd.f32 %v3471, %v4276
      %v4325 = vadd.f32 %v3510, %v4272
      %v4326 = vadd.f32 %v3549, %v4268
      %v4327 = vadd.f32 %v3588, %v4264
      %v4328 = vadd.f32 %v3627, %v4260
      %v4329 = vadd.f32 %v3666, %v4256
      %v4330 = vadd.f32 %v3705, %v4252
      %v4331 = vadd.f32 %v3744, %v4248
      %v4332 = vadd.f32 %v3783, %v4244
      %v4333 = vadd.f32 %v3822, %v4240
      %v4334 = vadd.f32 %v3861, %v4236
      %v4335 = vadd.f32 %v3900, %v4232
      %v4336 = vadd.f32 %v3939, %v4228
      %v4337 = vadd.f32 %v3978, %v4224
      %v4338 = vadd.f32 %v4017, %v4220
      %v4339 = vadd.f32 %v4056, %v4216
      %v4340 = vadd.f32 %v3395, %v4285
      %v4341 = vadd.f32 %v3434, %v4281
      %v4342 = vadd.f32 %v3473, %v4277
      %v4343 = vadd.f32 %v3512, %v4273
      %v4344 = vadd.f32 %v3551, %v4269
      %v4345 = vadd.f32 %v3590, %v4265
      %v4346 = vadd.f32 %v3629, %v4261
      %v4347 = vadd.f32 %v3668, %v4257
      %v4348 = vadd.f32 %v3707, %v4253
      %v4349 = vadd.f32 %v3746, %v4249
      %v4350 = vadd.f32 %v3785, %v4245
      %v4351 = vadd.f32 %v3824, %v4241
      %v4352 = vadd.f32 %v3863, %v4237
      %v4353 = vadd.f32 %v3902, %v4233
      %v4354 = vadd.f32 %v3941, %v4229
      %v4355 = vadd.f32 %v3980, %v4225
      %v4356 = vadd.f32 %v4019, %v4221
      %v4357 = vadd.f32 %v4058, %v4217
      %4358 = vrot.lane.b32.xlu0 %v3398, 112
      %v4359 = vpop.permute.xlu0 %4358
      %4360 = vrot.lane.b32.xlu0 %v3400, 112
      %v4361 = vpop.permute.xlu0 %4360
      %4362 = vrot.lane.b32.xlu0 %v3403, 112
      %v4363 = vpop.permute.xlu0 %4362
      %4364 = vrot.lane.b32.xlu0 %v3405, 112
      %v4365 = vpop.permute.xlu0 %4364
      %4366 = vrot.lane.b32.xlu0 %v3437, 112
      %v4367 = vpop.permute.xlu0 %4366
      %4368 = vrot.lane.b32.xlu0 %v3439, 112
      %v4369 = vpop.permute.xlu0 %4368
      %4370 = vrot.lane.b32.xlu0 %v3442, 112
      %v4371 = vpop.permute.xlu0 %4370
      %4372 = vrot.lane.b32.xlu0 %v3444, 112
      %v4373 = vpop.permute.xlu0 %4372
      %4374 = vrot.lane.b32.xlu0 %v3476, 112
      %v4375 = vpop.permute.xlu0 %4374
      %4376 = vrot.lane.b32.xlu0 %v3478, 112
      %v4377 = vpop.permute.xlu0 %4376
      %4378 = vrot.lane.b32.xlu0 %v3481, 112
      %v4379 = vpop.permute.xlu0 %4378
      %4380 = vrot.lane.b32.xlu0 %v3483, 112
      %v4381 = vpop.permute.xlu0 %4380
      %4382 = vrot.lane.b32.xlu0 %v3515, 112
      %v4383 = vpop.permute.xlu0 %4382
      %4384 = vrot.lane.b32.xlu0 %v3517, 112
      %v4385 = vpop.permute.xlu0 %4384
      %4386 = vrot.lane.b32.xlu0 %v3520, 112
      %v4387 = vpop.permute.xlu0 %4386
      %4388 = vrot.lane.b32.xlu0 %v3522, 112
      %v4389 = vpop.permute.xlu0 %4388
      %4390 = vrot.lane.b32.xlu0 %v3554, 112
      %v4391 = vpop.permute.xlu0 %4390
      %4392 = vrot.lane.b32.xlu0 %v3556, 112
      %v4393 = vpop.permute.xlu0 %4392
      %4394 = vrot.lane.b32.xlu0 %v3559, 112
      %v4395 = vpop.permute.xlu0 %4394
      %4396 = vrot.lane.b32.xlu0 %v3561, 112
      %v4397 = vpop.permute.xlu0 %4396
      %4398 = vrot.lane.b32.xlu0 %v3593, 112
      %v4399 = vpop.permute.xlu0 %4398
      %4400 = vrot.lane.b32.xlu0 %v3595, 112
      %v4401 = vpop.permute.xlu0 %4400
      %4402 = vrot.lane.b32.xlu0 %v3598, 112
      %v4403 = vpop.permute.xlu0 %4402
      %4404 = vrot.lane.b32.xlu0 %v3600, 112
      %v4405 = vpop.permute.xlu0 %4404
      %4406 = vrot.lane.b32.xlu0 %v3632, 112
      %v4407 = vpop.permute.xlu0 %4406
      %4408 = vrot.lane.b32.xlu0 %v3634, 112
      %v4409 = vpop.permute.xlu0 %4408
      %4410 = vrot.lane.b32.xlu0 %v3637, 112
      %v4411 = vpop.permute.xlu0 %4410
      %4412 = vrot.lane.b32.xlu0 %v3639, 112
      %v4413 = vpop.permute.xlu0 %4412
      %4414 = vrot.lane.b32.xlu0 %v3671, 112
      %v4415 = vpop.permute.xlu0 %4414
      %4416 = vrot.lane.b32.xlu0 %v3673, 112
      %v4417 = vpop.permute.xlu0 %4416
      %4418 = vrot.lane.b32.xlu0 %v3676, 112
      %v4419 = vpop.permute.xlu0 %4418
      %4420 = vrot.lane.b32.xlu0 %v3678, 112
      %v4421 = vpop.permute.xlu0 %4420
      %4422 = vrot.lane.b32.xlu0 %v3710, 112
      %v4423 = vpop.permute.xlu0 %4422
      %4424 = vrot.lane.b32.xlu0 %v3712, 112
      %v4425 = vpop.permute.xlu0 %4424
      %4426 = vrot.lane.b32.xlu0 %v3715, 112
      %v4427 = vpop.permute.xlu0 %4426
      %4428 = vrot.lane.b32.xlu0 %v3717, 112
      %v4429 = vpop.permute.xlu0 %4428
      %4430 = vrot.lane.b32.xlu0 %v3749, 112
      %v4431 = vpop.permute.xlu0 %4430
      %4432 = vrot.lane.b32.xlu0 %v3751, 112
      %v4433 = vpop.permute.xlu0 %4432
      %4434 = vrot.lane.b32.xlu0 %v3754, 112
      %v4435 = vpop.permute.xlu0 %4434
      %4436 = vrot.lane.b32.xlu0 %v3756, 112
      %v4437 = vpop.permute.xlu0 %4436
      %4438 = vrot.lane.b32.xlu0 %v3788, 112
      %v4439 = vpop.permute.xlu0 %4438
      %4440 = vrot.lane.b32.xlu0 %v3790, 112
      %v4441 = vpop.permute.xlu0 %4440
      %4442 = vrot.lane.b32.xlu0 %v3793, 112
      %v4443 = vpop.permute.xlu0 %4442
      %4444 = vrot.lane.b32.xlu0 %v3795, 112
      %v4445 = vpop.permute.xlu0 %4444
      %4446 = vrot.lane.b32.xlu0 %v3827, 112
      %v4447 = vpop.permute.xlu0 %4446
      %4448 = vrot.lane.b32.xlu0 %v3829, 112
      %v4449 = vpop.permute.xlu0 %4448
      %4450 = vrot.lane.b32.xlu0 %v3832, 112
      %v4451 = vpop.permute.xlu0 %4450
      %4452 = vrot.lane.b32.xlu0 %v3834, 112
      %v4453 = vpop.permute.xlu0 %4452
      %4454 = vrot.lane.b32.xlu0 %v3866, 112
      %v4455 = vpop.permute.xlu0 %4454
      %4456 = vrot.lane.b32.xlu0 %v3868, 112
      %v4457 = vpop.permute.xlu0 %4456
      %4458 = vrot.lane.b32.xlu0 %v3871, 112
      %v4459 = vpop.permute.xlu0 %4458
      %4460 = vrot.lane.b32.xlu0 %v3873, 112
      %v4461 = vpop.permute.xlu0 %4460
      %4462 = vrot.lane.b32.xlu0 %v3905, 112
      %v4463 = vpop.permute.xlu0 %4462
      %4464 = vrot.lane.b32.xlu0 %v3907, 112
      %v4465 = vpop.permute.xlu0 %4464
      %4466 = vrot.lane.b32.xlu0 %v3910, 112
      %v4467 = vpop.permute.xlu0 %4466
      %4468 = vrot.lane.b32.xlu0 %v3912, 112
      %v4469 = vpop.permute.xlu0 %4468
      %4470 = vrot.lane.b32.xlu0 %v3944, 112
      %v4471 = vpop.permute.xlu0 %4470
      %4472 = vrot.lane.b32.xlu0 %v3946, 112
      %v4473 = vpop.permute.xlu0 %4472
      %4474 = vrot.lane.b32.xlu0 %v3949, 112
      %v4475 = vpop.permute.xlu0 %4474
      %4476 = vrot.lane.b32.xlu0 %v3951, 112
      %v4477 = vpop.permute.xlu0 %4476
      %4478 = vrot.lane.b32.xlu0 %v3983, 112
      %v4479 = vpop.permute.xlu0 %4478
      %4480 = vrot.lane.b32.xlu0 %v3985, 112
      %v4481 = vpop.permute.xlu0 %4480
      %4482 = vrot.lane.b32.xlu0 %v3988, 112
      %v4483 = vpop.permute.xlu0 %4482
      %4484 = vrot.lane.b32.xlu0 %v3990, 112
      %v4485 = vpop.permute.xlu0 %4484
      %4486 = vrot.lane.b32.xlu0 %v4022, 112
      %v4487 = vpop.permute.xlu0 %4486
      %4488 = vrot.lane.b32.xlu0 %v4024, 112
      %v4489 = vpop.permute.xlu0 %4488
      %4490 = vrot.lane.b32.xlu0 %v4027, 112
      %v4491 = vpop.permute.xlu0 %4490
      %4492 = vrot.lane.b32.xlu0 %v4029, 112
      %v4493 = vpop.permute.xlu0 %4492
      %4494 = vrot.lane.b32.xlu0 %v4061, 112
      %v4495 = vpop.permute.xlu0 %4494
      %4496 = vrot.lane.b32.xlu0 %v4063, 112
      %v4497 = vpop.permute.xlu0 %4496
      %4498 = vrot.lane.b32.xlu0 %v4066, 112
      %v4499 = vpop.permute.xlu0 %4498
      %4500 = vrot.lane.b32.xlu0 %v4068, 112
      %v4501 = vpop.permute.xlu0 %4500
      %v4502 = vsel %vm2191, %v4487, %v4495
      %v4503 = vsel %vm2191, %v4489, %v4497
      %v4504 = vsel %vm2191, %v4491, %v4499
      %v4505 = vsel %vm2191, %v4493, %v4501
      %v4506 = vsel %vm2191, %v4479, %v4487
      %v4507 = vsel %vm2191, %v4481, %v4489
      %v4508 = vsel %vm2191, %v4483, %v4491
      %v4509 = vsel %vm2191, %v4485, %v4493
      %v4510 = vsel %vm2191, %v4471, %v4479
      %v4511 = vsel %vm2191, %v4473, %v4481
      %v4512 = vsel %vm2191, %v4475, %v4483
      %v4513 = vsel %vm2191, %v4477, %v4485
      %v4514 = vsel %vm2191, %v4463, %v4471
      %v4515 = vsel %vm2191, %v4465, %v4473
      %v4516 = vsel %vm2191, %v4467, %v4475
      %v4517 = vsel %vm2191, %v4469, %v4477
      %v4518 = vsel %vm2191, %v4455, %v4463
      %v4519 = vsel %vm2191, %v4457, %v4465
      %v4520 = vsel %vm2191, %v4459, %v4467
      %v4521 = vsel %vm2191, %v4461, %v4469
      %v4522 = vsel %vm2191, %v4447, %v4455
      %v4523 = vsel %vm2191, %v4449, %v4457
      %v4524 = vsel %vm2191, %v4451, %v4459
      %v4525 = vsel %vm2191, %v4453, %v4461
      %v4526 = vsel %vm2191, %v4439, %v4447
      %v4527 = vsel %vm2191, %v4441, %v4449
      %v4528 = vsel %vm2191, %v4443, %v4451
      %v4529 = vsel %vm2191, %v4445, %v4453
      %v4530 = vsel %vm2191, %v4431, %v4439
      %v4531 = vsel %vm2191, %v4433, %v4441
      %v4532 = vsel %vm2191, %v4435, %v4443
      %v4533 = vsel %vm2191, %v4437, %v4445
      %v4534 = vsel %vm2191, %v4423, %v4431
      %v4535 = vsel %vm2191, %v4425, %v4433
      %v4536 = vsel %vm2191, %v4427, %v4435
      %v4537 = vsel %vm2191, %v4429, %v4437
      %v4538 = vsel %vm2191, %v4415, %v4423
      %v4539 = vsel %vm2191, %v4417, %v4425
      %v4540 = vsel %vm2191, %v4419, %v4427
      %v4541 = vsel %vm2191, %v4421, %v4429
      %v4542 = vsel %vm2191, %v4407, %v4415
      %v4543 = vsel %vm2191, %v4409, %v4417
      %v4544 = vsel %vm2191, %v4411, %v4419
      %v4545 = vsel %vm2191, %v4413, %v4421
      %v4546 = vsel %vm2191, %v4399, %v4407
      %v4547 = vsel %vm2191, %v4401, %v4409
      %v4548 = vsel %vm2191, %v4403, %v4411
      %v4549 = vsel %vm2191, %v4405, %v4413
      %v4550 = vsel %vm2191, %v4391, %v4399
      %v4551 = vsel %vm2191, %v4393, %v4401
      %v4552 = vsel %vm2191, %v4395, %v4403
      %v4553 = vsel %vm2191, %v4397, %v4405
      %v4554 = vsel %vm2191, %v4383, %v4391
      %v4555 = vsel %vm2191, %v4385, %v4393
      %v4556 = vsel %vm2191, %v4387, %v4395
      %v4557 = vsel %vm2191, %v4389, %v4397
      %v4558 = vsel %vm2191, %v4375, %v4383
      %v4559 = vsel %vm2191, %v4377, %v4385
      %v4560 = vsel %vm2191, %v4379, %v4387
      %v4561 = vsel %vm2191, %v4381, %v4389
      %v4562 = vsel %vm2191, %v4367, %v4375
      %v4563 = vsel %vm2191, %v4369, %v4377
      %v4564 = vsel %vm2191, %v4371, %v4379
      %v4565 = vsel %vm2191, %v4373, %v4381
      %v4566 = vsel %vm2191, %v4359, %v4367
      %v4567 = vsel %vm2191, %v4361, %v4369
      %v4568 = vsel %vm2191, %v4363, %v4371
      %v4569 = vsel %vm2191, %v4365, %v4373
      %v4570 = vsel %vm2191, %v4495, %v4359
      %v4571 = vsel %vm2191, %v4497, %v4361
      %v4572 = vsel %vm2191, %v4499, %v4363
      %v4573 = vsel %vm2191, %v4501, %v4365
      %v4574 = vadd.f32 %v4286, %v4566
      %v4575 = vadd.f32 %v4287, %v4562
      %v4576 = vadd.f32 %v4288, %v4558
      %v4577 = vadd.f32 %v4289, %v4554
      %v4578 = vadd.f32 %v4290, %v4550
      %v4579 = vadd.f32 %v4291, %v4546
      %v4580 = vadd.f32 %v4292, %v4542
      %v4581 = vadd.f32 %v4293, %v4538
      %v4582 = vadd.f32 %v4294, %v4534
      %v4583 = vadd.f32 %v4295, %v4530
      %v4584 = vadd.f32 %v4296, %v4526
      %v4585 = vadd.f32 %v4297, %v4522
      %v4586 = vadd.f32 %v4298, %v4518
      %v4587 = vadd.f32 %v4299, %v4514
      %v4588 = vadd.f32 %v4300, %v4510
      %v4589 = vadd.f32 %v4301, %v4506
      %v4590 = vadd.f32 %v4302, %v4502
      %v4591 = vadd.f32 %v4303, %v4570
      %v4592 = vadd.f32 %v4304, %v4567
      %v4593 = vadd.f32 %v4305, %v4563
      %v4594 = vadd.f32 %v4306, %v4559
      %v4595 = vadd.f32 %v4307, %v4555
      %v4596 = vadd.f32 %v4308, %v4551
      %v4597 = vadd.f32 %v4309, %v4547
      %v4598 = vadd.f32 %v4310, %v4543
      %v4599 = vadd.f32 %v4311, %v4539
      %v4600 = vadd.f32 %v4312, %v4535
      %v4601 = vadd.f32 %v4313, %v4531
      %v4602 = vadd.f32 %v4314, %v4527
      %v4603 = vadd.f32 %v4315, %v4523
      %v4604 = vadd.f32 %v4316, %v4519
      %v4605 = vadd.f32 %v4317, %v4515
      %v4606 = vadd.f32 %v4318, %v4511
      %v4607 = vadd.f32 %v4319, %v4507
      %v4608 = vadd.f32 %v4320, %v4503
      %v4609 = vadd.f32 %v4321, %v4571
      %v4610 = vadd.f32 %v4322, %v4568
      %v4611 = vadd.f32 %v4323, %v4564
      %v4612 = vadd.f32 %v4324, %v4560
      %v4613 = vadd.f32 %v4325, %v4556
      %v4614 = vadd.f32 %v4326, %v4552
      %v4615 = vadd.f32 %v4327, %v4548
      %v4616 = vadd.f32 %v4328, %v4544
      %v4617 = vadd.f32 %v4329, %v4540
      %v4618 = vadd.f32 %v4330, %v4536
      %v4619 = vadd.f32 %v4331, %v4532
      %v4620 = vadd.f32 %v4332, %v4528
      %v4621 = vadd.f32 %v4333, %v4524
      %v4622 = vadd.f32 %v4334, %v4520
      %v4623 = vadd.f32 %v4335, %v4516
      %v4624 = vadd.f32 %v4336, %v4512
      %v4625 = vadd.f32 %v4337, %v4508
      %v4626 = vadd.f32 %v4338, %v4504
      %v4627 = vadd.f32 %v4339, %v4572
      %v4628 = vadd.f32 %v4340, %v4569
      %v4629 = vadd.f32 %v4341, %v4565
      %v4630 = vadd.f32 %v4342, %v4561
      %v4631 = vadd.f32 %v4343, %v4557
      %v4632 = vadd.f32 %v4344, %v4553
      %v4633 = vadd.f32 %v4345, %v4549
      %v4634 = vadd.f32 %v4346, %v4545
      %v4635 = vadd.f32 %v4347, %v4541
      %v4636 = vadd.f32 %v4348, %v4537
      %v4637 = vadd.f32 %v4349, %v4533
      %v4638 = vadd.f32 %v4350, %v4529
      %v4639 = vadd.f32 %v4351, %v4525
      %v4640 = vadd.f32 %v4352, %v4521
      %v4641 = vadd.f32 %v4353, %v4517
      %v4642 = vadd.f32 %v4354, %v4513
      %v4643 = vadd.f32 %v4355, %v4509
      %v4644 = vadd.f32 %v4356, %v4505
      %v4645 = vadd.f32 %v4357, %v4573
      %v4646 = vld [vmem:[%s5] sm:$0xff]
      %v4647 = vld [vmem:[%s5 + $0x8] sm:$0xff]
      %v4648 = vld [vmem:[%s5 + $0x10] sm:$0xff]
      %v4649 = vld [vmem:[%s5 + $0x18] sm:$0xff]
      %4651 = vset.pattern.permute.xlu0 0
      %4652 = vperm.xlu0 %4651, %v4646
      %v4653 = vpop.permute.xlu0 %4652
      %4656 = vset.pattern.permute.xlu0 0
      %4657 = vperm.xlu0 %4656, %v4647
      %v4658 = vpop.permute.xlu0 %4657
      %4661 = vset.pattern.permute.xlu0 0
      %4662 = vperm.xlu0 %4661, %v4648
      %v4663 = vpop.permute.xlu0 %4662
      %4666 = vset.pattern.permute.xlu0 0
      %4667 = vperm.xlu0 %4666, %v4649
      %v4668 = vpop.permute.xlu0 %4667
      %v4670 = vadd.f32 %v4574, %v4653
      %v4671 = vadd.f32 %v4575, %v4653
      %v4672 = vadd.f32 %v4576, %v4653
      %v4673 = vadd.f32 %v4577, %v4653
      %v4674 = vadd.f32 %v4578, %v4653
      %v4675 = vadd.f32 %v4579, %v4653
      %v4676 = vadd.f32 %v4580, %v4653
      %v4677 = vadd.f32 %v4581, %v4653
      %v4678 = vadd.f32 %v4582, %v4653
      %v4679 = vadd.f32 %v4583, %v4653
      %v4680 = vadd.f32 %v4584, %v4653
      %v4681 = vadd.f32 %v4585, %v4653
      %v4682 = vadd.f32 %v4586, %v4653
      %v4683 = vadd.f32 %v4587, %v4653
      %v4684 = vadd.f32 %v4588, %v4653
      %v4685 = vadd.f32 %v4589, %v4653
      %v4686 = vadd.f32 %v4590, %v4653
      %v4687 = vadd.f32 %v4591, %v4653
      %v4688 = vadd.f32 %v4592, %v4658
      %v4689 = vadd.f32 %v4593, %v4658
      %v4690 = vadd.f32 %v4594, %v4658
      %v4691 = vadd.f32 %v4595, %v4658
      %v4692 = vadd.f32 %v4596, %v4658
      %v4693 = vadd.f32 %v4597, %v4658
      %v4694 = vadd.f32 %v4598, %v4658
      %v4695 = vadd.f32 %v4599, %v4658
      %v4696 = vadd.f32 %v4600, %v4658
      %v4697 = vadd.f32 %v4601, %v4658
      %v4698 = vadd.f32 %v4602, %v4658
      %v4699 = vadd.f32 %v4603, %v4658
      %v4700 = vadd.f32 %v4604, %v4658
      %v4701 = vadd.f32 %v4605, %v4658
      %v4702 = vadd.f32 %v4606, %v4658
      %v4703 = vadd.f32 %v4607, %v4658
      %v4704 = vadd.f32 %v4608, %v4658
      %v4705 = vadd.f32 %v4609, %v4658
      %v4706 = vadd.f32 %v4610, %v4663
      %v4707 = vadd.f32 %v4611, %v4663
      %v4708 = vadd.f32 %v4612, %v4663
      %v4709 = vadd.f32 %v4613, %v4663
      %v4710 = vadd.f32 %v4614, %v4663
      %v4711 = vadd.f32 %v4615, %v4663
      %v4712 = vadd.f32 %v4616, %v4663
      %v4713 = vadd.f32 %v4617, %v4663
      %v4714 = vadd.f32 %v4618, %v4663
      %v4715 = vadd.f32 %v4619, %v4663
      %v4716 = vadd.f32 %v4620, %v4663
      %v4717 = vadd.f32 %v4621, %v4663
      %v4718 = vadd.f32 %v4622, %v4663
      %v4719 = vadd.f32 %v4623, %v4663
      %v4720 = vadd.f32 %v4624, %v4663
      %v4721 = vadd.f32 %v4625, %v4663
      %v4722 = vadd.f32 %v4626, %v4663
      %v4723 = vadd.f32 %v4627, %v4663
      %v4724 = vadd.f32 %v4628, %v4668
      %v4725 = vadd.f32 %v4629, %v4668
      %v4726 = vadd.f32 %v4630, %v4668
      %v4727 = vadd.f32 %v4631, %v4668
      %v4728 = vadd.f32 %v4632, %v4668
      %v4729 = vadd.f32 %v4633, %v4668
      %v4730 = vadd.f32 %v4634, %v4668
      %v4731 = vadd.f32 %v4635, %v4668
      %v4732 = vadd.f32 %v4636, %v4668
      %v4733 = vadd.f32 %v4637, %v4668
      %v4734 = vadd.f32 %v4638, %v4668
      %v4735 = vadd.f32 %v4639, %v4668
      %v4736 = vadd.f32 %v4640, %v4668
      %v4737 = vadd.f32 %v4641, %v4668
      %v4738 = vadd.f32 %v4642, %v4668
      %v4739 = vadd.f32 %v4643, %v4668
      %v4740 = vadd.f32 %v4644, %v4668
      %v4741 = vadd.f32 %v4645, %v4668
      %v4742 = vmul.f32 %v4670, %v2435
      %v4743 = vmul.f32 %v4671, %v2436
      %v4744 = vmul.f32 %v4672, %v2437
      %v4745 = vmul.f32 %v4673, %v2438
      %v4746 = vmul.f32 %v4674, %v2439
      %v4747 = vmul.f32 %v4675, %v2440
      %v4748 = vmul.f32 %v4676, %v2441
      %v4749 = vmul.f32 %v4677, %v2442
      %v4750 = vmul.f32 %v4678, %v2443
      %v4751 = vmul.f32 %v4679, %v2444
      %v4752 = vmul.f32 %v4680, %v2445
      %v4753 = vmul.f32 %v4681, %v2446
      %v4754 = vmul.f32 %v4682, %v2447
      %v4755 = vmul.f32 %v4683, %v2448
      %v4756 = vmul.f32 %v4684, %v2449
      %v4757 = vmul.f32 %v4685, %v2450
      %v4758 = vmul.f32 %v4686, %v2451
      %v4759 = vmul.f32 %v4687, %v2452
      %v4760 = vmul.f32 %v4688, %v2435
      %v4761 = vmul.f32 %v4689, %v2436
      %v4762 = vmul.f32 %v4690, %v2437
      %v4763 = vmul.f32 %v4691, %v2438
      %v4764 = vmul.f32 %v4692, %v2439
      %v4765 = vmul.f32 %v4693, %v2440
      %v4766 = vmul.f32 %v4694, %v2441
      %v4767 = vmul.f32 %v4695, %v2442
      %v4768 = vmul.f32 %v4696, %v2443
      %v4769 = vmul.f32 %v4697, %v2444
      %v4770 = vmul.f32 %v4698, %v2445
      %v4771 = vmul.f32 %v4699, %v2446
      %v4772 = vmul.f32 %v4700, %v2447
      %v4773 = vmul.f32 %v4701, %v2448
      %v4774 = vmul.f32 %v4702, %v2449
      %v4775 = vmul.f32 %v4703, %v2450
      %v4776 = vmul.f32 %v4704, %v2451
      %v4777 = vmul.f32 %v4705, %v2452
      %v4778 = vmul.f32 %v4706, %v2435
      %v4779 = vmul.f32 %v4707, %v2436
      %v4780 = vmul.f32 %v4708, %v2437
      %v4781 = vmul.f32 %v4709, %v2438
      %v4782 = vmul.f32 %v4710, %v2439
      %v4783 = vmul.f32 %v4711, %v2440
      %v4784 = vmul.f32 %v4712, %v2441
      %v4785 = vmul.f32 %v4713, %v2442
      %v4786 = vmul.f32 %v4714, %v2443
      %v4787 = vmul.f32 %v4715, %v2444
      %v4788 = vmul.f32 %v4716, %v2445
      %v4789 = vmul.f32 %v4717, %v2446
      %v4790 = vmul.f32 %v4718, %v2447
      %v4791 = vmul.f32 %v4719, %v2448
      %v4792 = vmul.f32 %v4720, %v2449
      %v4793 = vmul.f32 %v4721, %v2450
      %v4794 = vmul.f32 %v4722, %v2451
      %v4795 = vmul.f32 %v4723, %v2452
      %v4796 = vmul.f32 %v4724, %v2435
      %v4797 = vmul.f32 %v4725, %v2436
      %v4798 = vmul.f32 %v4726, %v2437
      %v4799 = vmul.f32 %v4727, %v2438
      %v4800 = vmul.f32 %v4728, %v2439
      %v4801 = vmul.f32 %v4729, %v2440
      %v4802 = vmul.f32 %v4730, %v2441
      %v4803 = vmul.f32 %v4731, %v2442
      %v4804 = vmul.f32 %v4732, %v2443
      %v4805 = vmul.f32 %v4733, %v2444
      %v4806 = vmul.f32 %v4734, %v2445
      %v4807 = vmul.f32 %v4735, %v2446
      %v4808 = vmul.f32 %v4736, %v2447
      %v4809 = vmul.f32 %v4737, %v2448
      %v4810 = vmul.f32 %v4738, %v2449
      %v4811 = vmul.f32 %v4739, %v2450
      %v4812 = vmul.f32 %v4740, %v2451
      %v4813 = vmul.f32 %v4741, %v2452
      %v4814 = vld [vmem:[%s6] sm:$0x3]
      %4815 = vrot.lane.b32.xlu0 %v4742, 1
      %v4816 = vpop.permute.xlu0 %4815
      %4817 = vrot.lane.b32.xlu0 %v4760, 1
      %v4818 = vpop.permute.xlu0 %4817
      %4819 = vrot.lane.b32.xlu0 %v4778, 1
      %v4820 = vpop.permute.xlu0 %4819
      %4821 = vrot.lane.b32.xlu0 %v4796, 1
      %v4822 = vpop.permute.xlu0 %4821
      %4823 = vrot.lane.b32.xlu0 %v4743, 1
      %v4824 = vpop.permute.xlu0 %4823
      %4825 = vrot.lane.b32.xlu0 %v4761, 1
      %v4826 = vpop.permute.xlu0 %4825
      %4827 = vrot.lane.b32.xlu0 %v4779, 1
      %v4828 = vpop.permute.xlu0 %4827
      %4829 = vrot.lane.b32.xlu0 %v4797, 1
      %v4830 = vpop.permute.xlu0 %4829
      %4831 = vrot.lane.b32.xlu0 %v4744, 1
      %v4832 = vpop.permute.xlu0 %4831
      %4833 = vrot.lane.b32.xlu0 %v4762, 1
      %v4834 = vpop.permute.xlu0 %4833
      %4835 = vrot.lane.b32.xlu0 %v4780, 1
      %v4836 = vpop.permute.xlu0 %4835
      %4837 = vrot.lane.b32.xlu0 %v4798, 1
      %v4838 = vpop.permute.xlu0 %4837
      %4839 = vrot.lane.b32.xlu0 %v4745, 1
      %v4840 = vpop.permute.xlu0 %4839
      %4841 = vrot.lane.b32.xlu0 %v4763, 1
      %v4842 = vpop.permute.xlu0 %4841
      %4843 = vrot.lane.b32.xlu0 %v4781, 1
      %v4844 = vpop.permute.xlu0 %4843
      %4845 = vrot.lane.b32.xlu0 %v4799, 1
      %v4846 = vpop.permute.xlu0 %4845
      %4847 = vrot.lane.b32.xlu0 %v4746, 1
      %v4848 = vpop.permute.xlu0 %4847
      %4849 = vrot.lane.b32.xlu0 %v4764, 1
      %v4850 = vpop.permute.xlu0 %4849
      %4851 = vrot.lane.b32.xlu0 %v4782, 1
      %v4852 = vpop.permute.xlu0 %4851
      %4853 = vrot.lane.b32.xlu0 %v4800, 1
      %v4854 = vpop.permute.xlu0 %4853
      %4855 = vrot.lane.b32.xlu0 %v4747, 1
      %v4856 = vpop.permute.xlu0 %4855
      %4857 = vrot.lane.b32.xlu0 %v4765, 1
      %v4858 = vpop.permute.xlu0 %4857
      %4859 = vrot.lane.b32.xlu0 %v4783, 1
      %v4860 = vpop.permute.xlu0 %4859
      %4861 = vrot.lane.b32.xlu0 %v4801, 1
      %v4862 = vpop.permute.xlu0 %4861
      %4863 = vrot.lane.b32.xlu0 %v4748, 1
      %v4864 = vpop.permute.xlu0 %4863
      %4865 = vrot.lane.b32.xlu0 %v4766, 1
      %v4866 = vpop.permute.xlu0 %4865
      %4867 = vrot.lane.b32.xlu0 %v4784, 1
      %v4868 = vpop.permute.xlu0 %4867
      %4869 = vrot.lane.b32.xlu0 %v4802, 1
      %v4870 = vpop.permute.xlu0 %4869
      %4871 = vrot.lane.b32.xlu0 %v4749, 1
      %v4872 = vpop.permute.xlu0 %4871
      %4873 = vrot.lane.b32.xlu0 %v4767, 1
      %v4874 = vpop.permute.xlu0 %4873
      %4875 = vrot.lane.b32.xlu0 %v4785, 1
      %v4876 = vpop.permute.xlu0 %4875
      %4877 = vrot.lane.b32.xlu0 %v4803, 1
      %v4878 = vpop.permute.xlu0 %4877
      %4879 = vrot.lane.b32.xlu0 %v4750, 1
      %v4880 = vpop.permute.xlu0 %4879
      %4881 = vrot.lane.b32.xlu0 %v4768, 1
      %v4882 = vpop.permute.xlu0 %4881
      %4883 = vrot.lane.b32.xlu0 %v4786, 1
      %v4884 = vpop.permute.xlu0 %4883
      %4885 = vrot.lane.b32.xlu0 %v4804, 1
      %v4886 = vpop.permute.xlu0 %4885
      %4887 = vrot.lane.b32.xlu0 %v4751, 1
      %v4888 = vpop.permute.xlu0 %4887
      %4889 = vrot.lane.b32.xlu0 %v4769, 1
      %v4890 = vpop.permute.xlu0 %4889
      %4891 = vrot.lane.b32.xlu0 %v4787, 1
      %v4892 = vpop.permute.xlu0 %4891
      %4893 = vrot.lane.b32.xlu0 %v4805, 1
      %v4894 = vpop.permute.xlu0 %4893
      %4895 = vrot.lane.b32.xlu0 %v4752, 1
      %v4896 = vpop.permute.xlu0 %4895
      %4897 = vrot.lane.b32.xlu0 %v4770, 1
      %v4898 = vpop.permute.xlu0 %4897
      %4899 = vrot.lane.b32.xlu0 %v4788, 1
      %v4900 = vpop.permute.xlu0 %4899
      %4901 = vrot.lane.b32.xlu0 %v4806, 1
      %v4902 = vpop.permute.xlu0 %4901
      %4903 = vrot.lane.b32.xlu0 %v4753, 1
      %v4904 = vpop.permute.xlu0 %4903
      %4905 = vrot.lane.b32.xlu0 %v4771, 1
      %v4906 = vpop.permute.xlu0 %4905
      %4907 = vrot.lane.b32.xlu0 %v4789, 1
      %v4908 = vpop.permute.xlu0 %4907
      %4909 = vrot.lane.b32.xlu0 %v4807, 1
      %v4910 = vpop.permute.xlu0 %4909
      %4911 = vrot.lane.b32.xlu0 %v4754, 1
      %v4912 = vpop.permute.xlu0 %4911
      %4913 = vrot.lane.b32.xlu0 %v4772, 1
      %v4914 = vpop.permute.xlu0 %4913
      %4915 = vrot.lane.b32.xlu0 %v4790, 1
      %v4916 = vpop.permute.xlu0 %4915
      %4917 = vrot.lane.b32.xlu0 %v4808, 1
      %v4918 = vpop.permute.xlu0 %4917
      %4919 = vrot.lane.b32.xlu0 %v4755, 1
      %v4920 = vpop.permute.xlu0 %4919
      %4921 = vrot.lane.b32.xlu0 %v4773, 1
      %v4922 = vpop.permute.xlu0 %4921
      %4923 = vrot.lane.b32.xlu0 %v4791, 1
      %v4924 = vpop.permute.xlu0 %4923
      %4925 = vrot.lane.b32.xlu0 %v4809, 1
      %v4926 = vpop.permute.xlu0 %4925
      %4927 = vrot.lane.b32.xlu0 %v4756, 1
      %v4928 = vpop.permute.xlu0 %4927
      %4929 = vrot.lane.b32.xlu0 %v4774, 1
      %v4930 = vpop.permute.xlu0 %4929
      %4931 = vrot.lane.b32.xlu0 %v4792, 1
      %v4932 = vpop.permute.xlu0 %4931
      %4933 = vrot.lane.b32.xlu0 %v4810, 1
      %v4934 = vpop.permute.xlu0 %4933
      %4935 = vrot.lane.b32.xlu0 %v4757, 1
      %v4936 = vpop.permute.xlu0 %4935
      %4937 = vrot.lane.b32.xlu0 %v4775, 1
      %v4938 = vpop.permute.xlu0 %4937
      %4939 = vrot.lane.b32.xlu0 %v4793, 1
      %v4940 = vpop.permute.xlu0 %4939
      %4941 = vrot.lane.b32.xlu0 %v4811, 1
      %v4942 = vpop.permute.xlu0 %4941
      %4943 = vrot.lane.b32.xlu0 %v4758, 1
      %v4944 = vpop.permute.xlu0 %4943
      %4945 = vrot.lane.b32.xlu0 %v4776, 1
      %v4946 = vpop.permute.xlu0 %4945
      %4947 = vrot.lane.b32.xlu0 %v4794, 1
      %v4948 = vpop.permute.xlu0 %4947
      %4949 = vrot.lane.b32.xlu0 %v4812, 1
      %v4950 = vpop.permute.xlu0 %4949
      %4951 = vrot.lane.b32.xlu0 %v4759, 1
      %v4952 = vpop.permute.xlu0 %4951
      %4953 = vrot.lane.b32.xlu0 %v4777, 1
      %v4954 = vpop.permute.xlu0 %4953
      %4955 = vrot.lane.b32.xlu0 %v4795, 1
      %v4956 = vpop.permute.xlu0 %4955
      %4957 = vrot.lane.b32.xlu0 %v4813, 1
      %v4958 = vpop.permute.xlu0 %4957
      %v4959 = vsel %vm2699, %v4944, %v4952
      %v4960 = vsel %vm2699, %v4946, %v4954
      %v4961 = vsel %vm2699, %v4948, %v4956
      %v4962 = vsel %vm2699, %v4950, %v4958
      %v4963 = vsel %vm2699, %v4936, %v4944
      %v4964 = vsel %vm2699, %v4938, %v4946
      %v4965 = vsel %vm2699, %v4940, %v4948
      %v4966 = vsel %vm2699, %v4942, %v4950
      %v4967 = vsel %vm2699, %v4928, %v4936
      %v4968 = vsel %vm2699, %v4930, %v4938
      %v4969 = vsel %vm2699, %v4932, %v4940
      %v4970 = vsel %vm2699, %v4934, %v4942
      %v4971 = vsel %vm2699, %v4920, %v4928
      %v4972 = vsel %vm2699, %v4922, %v4930
      %v4973 = vsel %vm2699, %v4924, %v4932
      %v4974 = vsel %vm2699, %v4926, %v4934
      %v4975 = vsel %vm2699, %v4912, %v4920
      %v4976 = vsel %vm2699, %v4914, %v4922
      %v4977 = vsel %vm2699, %v4916, %v4924
      %v4978 = vsel %vm2699, %v4918, %v4926
      %v4979 = vsel %vm2699, %v4904, %v4912
      %v4980 = vsel %vm2699, %v4906, %v4914
      %v4981 = vsel %vm2699, %v4908, %v4916
      %v4982 = vsel %vm2699, %v4910, %v4918
      %v4983 = vsel %vm2699, %v4896, %v4904
      %v4984 = vsel %vm2699, %v4898, %v4906
      %v4985 = vsel %vm2699, %v4900, %v4908
      %v4986 = vsel %vm2699, %v4902, %v4910
      %v4987 = vsel %vm2699, %v4888, %v4896
      %v4988 = vsel %vm2699, %v4890, %v4898
      %v4989 = vsel %vm2699, %v4892, %v4900
      %v4990 = vsel %vm2699, %v4894, %v4902
      %v4991 = vsel %vm2699, %v4880, %v4888
      %v4992 = vsel %vm2699, %v4882, %v4890
      %v4993 = vsel %vm2699, %v4884, %v4892
      %v4994 = vsel %vm2699, %v4886, %v4894
      %v4995 = vsel %vm2699, %v4872, %v4880
      %v4996 = vsel %vm2699, %v4874, %v4882
      %v4997 = vsel %vm2699, %v4876, %v4884
      %v4998 = vsel %vm2699, %v4878, %v4886
      %v4999 = vsel %vm2699, %v4864, %v4872
      %v5000 = vsel %vm2699, %v4866, %v4874
      %v5001 = vsel %vm2699, %v4868, %v4876
      %v5002 = vsel %vm2699, %v4870, %v4878
      %v5003 = vsel %vm2699, %v4856, %v4864
      %v5004 = vsel %vm2699, %v4858, %v4866
      %v5005 = vsel %vm2699, %v4860, %v4868
      %v5006 = vsel %vm2699, %v4862, %v4870
      %v5007 = vsel %vm2699, %v4848, %v4856
      %v5008 = vsel %vm2699, %v4850, %v4858
      %v5009 = vsel %vm2699, %v4852, %v4860
      %v5010 = vsel %vm2699, %v4854, %v4862
      %v5011 = vsel %vm2699, %v4840, %v4848
      %v5012 = vsel %vm2699, %v4842, %v4850
      %v5013 = vsel %vm2699, %v4844, %v4852
      %v5014 = vsel %vm2699, %v4846, %v4854
      %v5015 = vsel %vm2699, %v4832, %v4840
      %v5016 = vsel %vm2699, %v4834, %v4842
      %v5017 = vsel %vm2699, %v4836, %v4844
      %v5018 = vsel %vm2699, %v4838, %v4846
      %v5019 = vsel %vm2699, %v4824, %v4832
      %v5020 = vsel %vm2699, %v4826, %v4834
      %v5021 = vsel %vm2699, %v4828, %v4836
      %v5022 = vsel %vm2699, %v4830, %v4838
      %v5023 = vsel %vm2699, %v4816, %v4824
      %v5024 = vsel %vm2699, %v4818, %v4826
      %v5025 = vsel %vm2699, %v4820, %v4828
      %v5026 = vsel %vm2699, %v4822, %v4830
      %v5027 = vsel %vm2699, %v4952, %v4816
      %v5028 = vsel %vm2699, %v4954, %v4818
      %v5029 = vsel %vm2699, %v4956, %v4820
      %v5030 = vsel %vm2699, %v4958, %v4822
      %v5031 = vmul.f32 %v5027, %v2775
      %v5032 = vmul.f32 %v5023, %v2776
      %v5033 = vmul.f32 %v5019, %v2777
      %v5034 = vmul.f32 %v5015, %v2778
      %v5035 = vmul.f32 %v5011, %v2779
      %v5036 = vmul.f32 %v5007, %v2780
      %v5037 = vmul.f32 %v5003, %v2781
      %v5038 = vmul.f32 %v4999, %v2782
      %v5039 = vmul.f32 %v4995, %v2783
      %v5040 = vmul.f32 %v4991, %v2784
      %v5041 = vmul.f32 %v4987, %v2785
      %v5042 = vmul.f32 %v4983, %v2786
      %v5043 = vmul.f32 %v4979, %v2787
      %v5044 = vmul.f32 %v4975, %v2788
      %v5045 = vmul.f32 %v4971, %v2789
      %v5046 = vmul.f32 %v4967, %v2790
      %v5047 = vmul.f32 %v4963, %v2791
      %v5048 = vmul.f32 %v4959, %v2792
      %v5049 = vmul.f32 %v5028, %v2775
      %v5050 = vmul.f32 %v5024, %v2776
      %v5051 = vmul.f32 %v5020, %v2777
      %v5052 = vmul.f32 %v5016, %v2778
      %v5053 = vmul.f32 %v5012, %v2779
      %v5054 = vmul.f32 %v5008, %v2780
      %v5055 = vmul.f32 %v5004, %v2781
      %v5056 = vmul.f32 %v5000, %v2782
      %v5057 = vmul.f32 %v4996, %v2783
      %v5058 = vmul.f32 %v4992, %v2784
      %v5059 = vmul.f32 %v4988, %v2785
      %v5060 = vmul.f32 %v4984, %v2786
      %v5061 = vmul.f32 %v4980, %v2787
      %v5062 = vmul.f32 %v4976, %v2788
      %v5063 = vmul.f32 %v4972, %v2789
      %v5064 = vmul.f32 %v4968, %v2790
      %v5065 = vmul.f32 %v4964, %v2791
      %v5066 = vmul.f32 %v4960, %v2792
      %v5067 = vmul.f32 %v5029, %v2775
      %v5068 = vmul.f32 %v5025, %v2776
      %v5069 = vmul.f32 %v5021, %v2777
      %v5070 = vmul.f32 %v5017, %v2778
      %v5071 = vmul.f32 %v5013, %v2779
      %v5072 = vmul.f32 %v5009, %v2780
      %v5073 = vmul.f32 %v5005, %v2781
      %v5074 = vmul.f32 %v5001, %v2782
      %v5075 = vmul.f32 %v4997, %v2783
      %v5076 = vmul.f32 %v4993, %v2784
      %v5077 = vmul.f32 %v4989, %v2785
      %v5078 = vmul.f32 %v4985, %v2786
      %v5079 = vmul.f32 %v4981, %v2787
      %v5080 = vmul.f32 %v4977, %v2788
      %v5081 = vmul.f32 %v4973, %v2789
      %v5082 = vmul.f32 %v4969, %v2790
      %v5083 = vmul.f32 %v4965, %v2791
      %v5084 = vmul.f32 %v4961, %v2792
      %v5085 = vmul.f32 %v5030, %v2775
      %v5086 = vmul.f32 %v5026, %v2776
      %v5087 = vmul.f32 %v5022, %v2777
      %v5088 = vmul.f32 %v5018, %v2778
      %v5089 = vmul.f32 %v5014, %v2779
      %v5090 = vmul.f32 %v5010, %v2780
      %v5091 = vmul.f32 %v5006, %v2781
      %v5092 = vmul.f32 %v5002, %v2782
      %v5093 = vmul.f32 %v4998, %v2783
      %v5094 = vmul.f32 %v4994, %v2784
      %v5095 = vmul.f32 %v4990, %v2785
      %v5096 = vmul.f32 %v4986, %v2786
      %v5097 = vmul.f32 %v4982, %v2787
      %v5098 = vmul.f32 %v4978, %v2788
      %v5099 = vmul.f32 %v4974, %v2789
      %v5100 = vmul.f32 %v4970, %v2790
      %v5101 = vmul.f32 %v4966, %v2791
      %v5102 = vmul.f32 %v4962, %v2792
      %5103 = vrot.lane.b32.xlu0 %v4742, 127
      %v5104 = vpop.permute.xlu0 %5103
      %5105 = vrot.lane.b32.xlu0 %v4760, 127
      %v5106 = vpop.permute.xlu0 %5105
      %5107 = vrot.lane.b32.xlu0 %v4778, 127
      %v5108 = vpop.permute.xlu0 %5107
      %5109 = vrot.lane.b32.xlu0 %v4796, 127
      %v5110 = vpop.permute.xlu0 %5109
      %5111 = vrot.lane.b32.xlu0 %v4743, 127
      %v5112 = vpop.permute.xlu0 %5111
      %5113 = vrot.lane.b32.xlu0 %v4761, 127
      %v5114 = vpop.permute.xlu0 %5113
      %5115 = vrot.lane.b32.xlu0 %v4779, 127
      %v5116 = vpop.permute.xlu0 %5115
      %5117 = vrot.lane.b32.xlu0 %v4797, 127
      %v5118 = vpop.permute.xlu0 %5117
      %5119 = vrot.lane.b32.xlu0 %v4744, 127
      %v5120 = vpop.permute.xlu0 %5119
      %5121 = vrot.lane.b32.xlu0 %v4762, 127
      %v5122 = vpop.permute.xlu0 %5121
      %5123 = vrot.lane.b32.xlu0 %v4780, 127
      %v5124 = vpop.permute.xlu0 %5123
      %5125 = vrot.lane.b32.xlu0 %v4798, 127
      %v5126 = vpop.permute.xlu0 %5125
      %5127 = vrot.lane.b32.xlu0 %v4745, 127
      %v5128 = vpop.permute.xlu0 %5127
      %5129 = vrot.lane.b32.xlu0 %v4763, 127
      %v5130 = vpop.permute.xlu0 %5129
      %5131 = vrot.lane.b32.xlu0 %v4781, 127
      %v5132 = vpop.permute.xlu0 %5131
      %5133 = vrot.lane.b32.xlu0 %v4799, 127
      %v5134 = vpop.permute.xlu0 %5133
      %5135 = vrot.lane.b32.xlu0 %v4746, 127
      %v5136 = vpop.permute.xlu0 %5135
      %5137 = vrot.lane.b32.xlu0 %v4764, 127
      %v5138 = vpop.permute.xlu0 %5137
      %5139 = vrot.lane.b32.xlu0 %v4782, 127
      %v5140 = vpop.permute.xlu0 %5139
      %5141 = vrot.lane.b32.xlu0 %v4800, 127
      %v5142 = vpop.permute.xlu0 %5141
      %5143 = vrot.lane.b32.xlu0 %v4747, 127
      %v5144 = vpop.permute.xlu0 %5143
      %5145 = vrot.lane.b32.xlu0 %v4765, 127
      %v5146 = vpop.permute.xlu0 %5145
      %5147 = vrot.lane.b32.xlu0 %v4783, 127
      %v5148 = vpop.permute.xlu0 %5147
      %5149 = vrot.lane.b32.xlu0 %v4801, 127
      %v5150 = vpop.permute.xlu0 %5149
      %5151 = vrot.lane.b32.xlu0 %v4748, 127
      %v5152 = vpop.permute.xlu0 %5151
      %5153 = vrot.lane.b32.xlu0 %v4766, 127
      %v5154 = vpop.permute.xlu0 %5153
      %5155 = vrot.lane.b32.xlu0 %v4784, 127
      %v5156 = vpop.permute.xlu0 %5155
      %5157 = vrot.lane.b32.xlu0 %v4802, 127
      %v5158 = vpop.permute.xlu0 %5157
      %5159 = vrot.lane.b32.xlu0 %v4749, 127
      %v5160 = vpop.permute.xlu0 %5159
      %5161 = vrot.lane.b32.xlu0 %v4767, 127
      %v5162 = vpop.permute.xlu0 %5161
      %5163 = vrot.lane.b32.xlu0 %v4785, 127
      %v5164 = vpop.permute.xlu0 %5163
      %5165 = vrot.lane.b32.xlu0 %v4803, 127
      %v5166 = vpop.permute.xlu0 %5165
      %5167 = vrot.lane.b32.xlu0 %v4750, 127
      %v5168 = vpop.permute.xlu0 %5167
      %5169 = vrot.lane.b32.xlu0 %v4768, 127
      %v5170 = vpop.permute.xlu0 %5169
      %5171 = vrot.lane.b32.xlu0 %v4786, 127
      %v5172 = vpop.permute.xlu0 %5171
      %5173 = vrot.lane.b32.xlu0 %v4804, 127
      %v5174 = vpop.permute.xlu0 %5173
      %5175 = vrot.lane.b32.xlu0 %v4751, 127
      %v5176 = vpop.permute.xlu0 %5175
      %5177 = vrot.lane.b32.xlu0 %v4769, 127
      %v5178 = vpop.permute.xlu0 %5177
      %5179 = vrot.lane.b32.xlu0 %v4787, 127
      %v5180 = vpop.permute.xlu0 %5179
      %5181 = vrot.lane.b32.xlu0 %v4805, 127
      %v5182 = vpop.permute.xlu0 %5181
      %5183 = vrot.lane.b32.xlu0 %v4752, 127
      %v5184 = vpop.permute.xlu0 %5183
      %5185 = vrot.lane.b32.xlu0 %v4770, 127
      %v5186 = vpop.permute.xlu0 %5185
      %5187 = vrot.lane.b32.xlu0 %v4788, 127
      %v5188 = vpop.permute.xlu0 %5187
      %5189 = vrot.lane.b32.xlu0 %v4806, 127
      %v5190 = vpop.permute.xlu0 %5189
      %5191 = vrot.lane.b32.xlu0 %v4753, 127
      %v5192 = vpop.permute.xlu0 %5191
      %5193 = vrot.lane.b32.xlu0 %v4771, 127
      %v5194 = vpop.permute.xlu0 %5193
      %5195 = vrot.lane.b32.xlu0 %v4789, 127
      %v5196 = vpop.permute.xlu0 %5195
      %5197 = vrot.lane.b32.xlu0 %v4807, 127
      %v5198 = vpop.permute.xlu0 %5197
      %5199 = vrot.lane.b32.xlu0 %v4754, 127
      %v5200 = vpop.permute.xlu0 %5199
      %5201 = vrot.lane.b32.xlu0 %v4772, 127
      %v5202 = vpop.permute.xlu0 %5201
      %5203 = vrot.lane.b32.xlu0 %v4790, 127
      %v5204 = vpop.permute.xlu0 %5203
      %5205 = vrot.lane.b32.xlu0 %v4808, 127
      %v5206 = vpop.permute.xlu0 %5205
      %5207 = vrot.lane.b32.xlu0 %v4755, 127
      %v5208 = vpop.permute.xlu0 %5207
      %5209 = vrot.lane.b32.xlu0 %v4773, 127
      %v5210 = vpop.permute.xlu0 %5209
      %5211 = vrot.lane.b32.xlu0 %v4791, 127
      %v5212 = vpop.permute.xlu0 %5211
      %5213 = vrot.lane.b32.xlu0 %v4809, 127
      %v5214 = vpop.permute.xlu0 %5213
      %5215 = vrot.lane.b32.xlu0 %v4756, 127
      %v5216 = vpop.permute.xlu0 %5215
      %5217 = vrot.lane.b32.xlu0 %v4774, 127
      %v5218 = vpop.permute.xlu0 %5217
      %5219 = vrot.lane.b32.xlu0 %v4792, 127
      %v5220 = vpop.permute.xlu0 %5219
      %5221 = vrot.lane.b32.xlu0 %v4810, 127
      %v5222 = vpop.permute.xlu0 %5221
      %5223 = vrot.lane.b32.xlu0 %v4757, 127
      %v5224 = vpop.permute.xlu0 %5223
      %5225 = vrot.lane.b32.xlu0 %v4775, 127
      %v5226 = vpop.permute.xlu0 %5225
      %5227 = vrot.lane.b32.xlu0 %v4793, 127
      %v5228 = vpop.permute.xlu0 %5227
      %5229 = vrot.lane.b32.xlu0 %v4811, 127
      %v5230 = vpop.permute.xlu0 %5229
      %5231 = vrot.lane.b32.xlu0 %v4758, 127
      %v5232 = vpop.permute.xlu0 %5231
      %5233 = vrot.lane.b32.xlu0 %v4776, 127
      %v5234 = vpop.permute.xlu0 %5233
      %5235 = vrot.lane.b32.xlu0 %v4794, 127
      %v5236 = vpop.permute.xlu0 %5235
      %5237 = vrot.lane.b32.xlu0 %v4812, 127
      %v5238 = vpop.permute.xlu0 %5237
      %5239 = vrot.lane.b32.xlu0 %v4759, 127
      %v5240 = vpop.permute.xlu0 %5239
      %5241 = vrot.lane.b32.xlu0 %v4777, 127
      %v5242 = vpop.permute.xlu0 %5241
      %5243 = vrot.lane.b32.xlu0 %v4795, 127
      %v5244 = vpop.permute.xlu0 %5243
      %5245 = vrot.lane.b32.xlu0 %v4813, 127
      %v5246 = vpop.permute.xlu0 %5245
      %v5247 = vsel %vm3027, %v5232, %v5240
      %v5248 = vsel %vm3027, %v5234, %v5242
      %v5249 = vsel %vm3027, %v5236, %v5244
      %v5250 = vsel %vm3027, %v5238, %v5246
      %v5251 = vsel %vm3027, %v5224, %v5232
      %v5252 = vsel %vm3027, %v5226, %v5234
      %v5253 = vsel %vm3027, %v5228, %v5236
      %v5254 = vsel %vm3027, %v5230, %v5238
      %v5255 = vsel %vm3027, %v5216, %v5224
      %v5256 = vsel %vm3027, %v5218, %v5226
      %v5257 = vsel %vm3027, %v5220, %v5228
      %v5258 = vsel %vm3027, %v5222, %v5230
      %v5259 = vsel %vm3027, %v5208, %v5216
      %v5260 = vsel %vm3027, %v5210, %v5218
      %v5261 = vsel %vm3027, %v5212, %v5220
      %v5262 = vsel %vm3027, %v5214, %v5222
      %v5263 = vsel %vm3027, %v5200, %v5208
      %v5264 = vsel %vm3027, %v5202, %v5210
      %v5265 = vsel %vm3027, %v5204, %v5212
      %v5266 = vsel %vm3027, %v5206, %v5214
      %v5267 = vsel %vm3027, %v5192, %v5200
      %v5268 = vsel %vm3027, %v5194, %v5202
      %v5269 = vsel %vm3027, %v5196, %v5204
      %v5270 = vsel %vm3027, %v5198, %v5206
      %v5271 = vsel %vm3027, %v5184, %v5192
      %v5272 = vsel %vm3027, %v5186, %v5194
      %v5273 = vsel %vm3027, %v5188, %v5196
      %v5274 = vsel %vm3027, %v5190, %v5198
      %v5275 = vsel %vm3027, %v5176, %v5184
      %v5276 = vsel %vm3027, %v5178, %v5186
      %v5277 = vsel %vm3027, %v5180, %v5188
      %v5278 = vsel %vm3027, %v5182, %v5190
      %v5279 = vsel %vm3027, %v5168, %v5176
      %v5280 = vsel %vm3027, %v5170, %v5178
      %v5281 = vsel %vm3027, %v5172, %v5180
      %v5282 = vsel %vm3027, %v5174, %v5182
      %v5283 = vsel %vm3027, %v5160, %v5168
      %v5284 = vsel %vm3027, %v5162, %v5170
      %v5285 = vsel %vm3027, %v5164, %v5172
      %v5286 = vsel %vm3027, %v5166, %v5174
      %v5287 = vsel %vm3027, %v5152, %v5160
      %v5288 = vsel %vm3027, %v5154, %v5162
      %v5289 = vsel %vm3027, %v5156, %v5164
      %v5290 = vsel %vm3027, %v5158, %v5166
      %v5291 = vsel %vm3027, %v5144, %v5152
      %v5292 = vsel %vm3027, %v5146, %v5154
      %v5293 = vsel %vm3027, %v5148, %v5156
      %v5294 = vsel %vm3027, %v5150, %v5158
      %v5295 = vsel %vm3027, %v5136, %v5144
      %v5296 = vsel %vm3027, %v5138, %v5146
      %v5297 = vsel %vm3027, %v5140, %v5148
      %v5298 = vsel %vm3027, %v5142, %v5150
      %v5299 = vsel %vm3027, %v5128, %v5136
      %v5300 = vsel %vm3027, %v5130, %v5138
      %v5301 = vsel %vm3027, %v5132, %v5140
      %v5302 = vsel %vm3027, %v5134, %v5142
      %v5303 = vsel %vm3027, %v5120, %v5128
      %v5304 = vsel %vm3027, %v5122, %v5130
      %v5305 = vsel %vm3027, %v5124, %v5132
      %v5306 = vsel %vm3027, %v5126, %v5134
      %v5307 = vsel %vm3027, %v5112, %v5120
      %v5308 = vsel %vm3027, %v5114, %v5122
      %v5309 = vsel %vm3027, %v5116, %v5124
      %v5310 = vsel %vm3027, %v5118, %v5126
      %v5311 = vsel %vm3027, %v5104, %v5112
      %v5312 = vsel %vm3027, %v5106, %v5114
      %v5313 = vsel %vm3027, %v5108, %v5116
      %v5314 = vsel %vm3027, %v5110, %v5118
      %v5315 = vsel %vm3027, %v5240, %v5104
      %v5316 = vsel %vm3027, %v5242, %v5106
      %v5317 = vsel %vm3027, %v5244, %v5108
      %v5318 = vsel %vm3027, %v5246, %v5110
      %v5319 = vmul.f32 %v5311, %v3103
      %v5320 = vmul.f32 %v5307, %v3104
      %v5321 = vmul.f32 %v5303, %v3105
      %v5322 = vmul.f32 %v5299, %v3106
      %v5323 = vmul.f32 %v5295, %v3107
      %v5324 = vmul.f32 %v5291, %v3108
      %v5325 = vmul.f32 %v5287, %v3109
      %v5326 = vmul.f32 %v5283, %v3110
      %v5327 = vmul.f32 %v5279, %v3111
      %v5328 = vmul.f32 %v5275, %v3112
      %v5329 = vmul.f32 %v5271, %v3113
      %v5330 = vmul.f32 %v5267, %v3114
      %v5331 = vmul.f32 %v5263, %v3115
      %v5332 = vmul.f32 %v5259, %v3116
      %v5333 = vmul.f32 %v5255, %v3117
      %v5334 = vmul.f32 %v5251, %v3118
      %v5335 = vmul.f32 %v5247, %v3119
      %v5336 = vmul.f32 %v5315, %v3120
      %v5337 = vmul.f32 %v5312, %v3103
      %v5338 = vmul.f32 %v5308, %v3104
      %v5339 = vmul.f32 %v5304, %v3105
      %v5340 = vmul.f32 %v5300, %v3106
      %v5341 = vmul.f32 %v5296, %v3107
      %v5342 = vmul.f32 %v5292, %v3108
      %v5343 = vmul.f32 %v5288, %v3109
      %v5344 = vmul.f32 %v5284, %v3110
      %v5345 = vmul.f32 %v5280, %v3111
      %v5346 = vmul.f32 %v5276, %v3112
      %v5347 = vmul.f32 %v5272, %v3113
      %v5348 = vmul.f32 %v5268, %v3114
      %v5349 = vmul.f32 %v5264, %v3115
      %v5350 = vmul.f32 %v5260, %v3116
      %v5351 = vmul.f32 %v5256, %v3117
      %v5352 = vmul.f32 %v5252, %v3118
      %v5353 = vmul.f32 %v5248, %v3119
      %v5354 = vmul.f32 %v5316, %v3120
      %v5355 = vmul.f32 %v5313, %v3103
      %v5356 = vmul.f32 %v5309, %v3104
      %v5357 = vmul.f32 %v5305, %v3105
      %v5358 = vmul.f32 %v5301, %v3106
      %v5359 = vmul.f32 %v5297, %v3107
      %v5360 = vmul.f32 %v5293, %v3108
      %v5361 = vmul.f32 %v5289, %v3109
      %v5362 = vmul.f32 %v5285, %v3110
      %v5363 = vmul.f32 %v5281, %v3111
      %v5364 = vmul.f32 %v5277, %v3112
      %v5365 = vmul.f32 %v5273, %v3113
      %v5366 = vmul.f32 %v5269, %v3114
      %v5367 = vmul.f32 %v5265, %v3115
      %v5368 = vmul.f32 %v5261, %v3116
      %v5369 = vmul.f32 %v5257, %v3117
      %v5370 = vmul.f32 %v5253, %v3118
      %v5371 = vmul.f32 %v5249, %v3119
      %v5372 = vmul.f32 %v5317, %v3120
      %v5373 = vmul.f32 %v5314, %v3103
      %v5374 = vmul.f32 %v5310, %v3104
      %v5375 = vmul.f32 %v5306, %v3105
      %v5376 = vmul.f32 %v5302, %v3106
      %v5377 = vmul.f32 %v5298, %v3107
      %v5378 = vmul.f32 %v5294, %v3108
      %v5379 = vmul.f32 %v5290, %v3109
      %v5380 = vmul.f32 %v5286, %v3110
      %v5381 = vmul.f32 %v5282, %v3111
      %v5382 = vmul.f32 %v5278, %v3112
      %v5383 = vmul.f32 %v5274, %v3113
      %v5384 = vmul.f32 %v5270, %v3114
      %v5385 = vmul.f32 %v5266, %v3115
      %v5386 = vmul.f32 %v5262, %v3116
      %v5387 = vmul.f32 %v5258, %v3117
      %v5388 = vmul.f32 %v5254, %v3118
      %v5389 = vmul.f32 %v5250, %v3119
      %v5390 = vmul.f32 %v5318, %v3120
      %v5391 = vpack.c.bf16 %v5049, %v5031
      %v5392 = vpack.c.bf16 %v5050, %v5032
      %v5393 = vpack.c.bf16 %v5051, %v5033
      %v5394 = vpack.c.bf16 %v5052, %v5034
      %v5395 = vpack.c.bf16 %v5053, %v5035
      %v5396 = vpack.c.bf16 %v5054, %v5036
      %v5397 = vpack.c.bf16 %v5055, %v5037
      %v5398 = vpack.c.bf16 %v5056, %v5038
      %v5399 = vpack.c.bf16 %v5057, %v5039
      %v5400 = vpack.c.bf16 %v5058, %v5040
      %v5401 = vpack.c.bf16 %v5059, %v5041
      %v5402 = vpack.c.bf16 %v5060, %v5042
      %v5403 = vpack.c.bf16 %v5061, %v5043
      %v5404 = vpack.c.bf16 %v5062, %v5044
      %v5405 = vpack.c.bf16 %v5063, %v5045
      %v5406 = vpack.c.bf16 %v5064, %v5046
      %v5407 = vpack.c.bf16 %v5065, %v5047
      %v5408 = vpack.c.bf16 %v5066, %v5048
      %v5409 = vpack.c.bf16 %v5085, %v5067
      %v5410 = vpack.c.bf16 %v5086, %v5068
      %v5411 = vpack.c.bf16 %v5087, %v5069
      %v5412 = vpack.c.bf16 %v5088, %v5070
      %v5413 = vpack.c.bf16 %v5089, %v5071
      %v5414 = vpack.c.bf16 %v5090, %v5072
      %v5415 = vpack.c.bf16 %v5091, %v5073
      %v5416 = vpack.c.bf16 %v5092, %v5074
      %v5417 = vpack.c.bf16 %v5093, %v5075
      %v5418 = vpack.c.bf16 %v5094, %v5076
      %v5419 = vpack.c.bf16 %v5095, %v5077
      %v5420 = vpack.c.bf16 %v5096, %v5078
      %v5421 = vpack.c.bf16 %v5097, %v5079
      %v5422 = vpack.c.bf16 %v5098, %v5080
      %v5423 = vpack.c.bf16 %v5099, %v5081
      %v5424 = vpack.c.bf16 %v5100, %v5082
      %v5425 = vpack.c.bf16 %v5101, %v5083
      %v5426 = vpack.c.bf16 %v5102, %v5084
      %v5427 = vpack.c.bf16 %v4760, %v4742
      %v5428 = vpack.c.bf16 %v4761, %v4743
      %v5429 = vpack.c.bf16 %v4762, %v4744
      %v5430 = vpack.c.bf16 %v4763, %v4745
      %v5431 = vpack.c.bf16 %v4764, %v4746
      %v5432 = vpack.c.bf16 %v4765, %v4747
      %v5433 = vpack.c.bf16 %v4766, %v4748
      %v5434 = vpack.c.bf16 %v4767, %v4749
      %v5435 = vpack.c.bf16 %v4768, %v4750
      %v5436 = vpack.c.bf16 %v4769, %v4751
      %v5437 = vpack.c.bf16 %v4770, %v4752
      %v5438 = vpack.c.bf16 %v4771, %v4753
      %v5439 = vpack.c.bf16 %v4772, %v4754
      %v5440 = vpack.c.bf16 %v4773, %v4755
      %v5441 = vpack.c.bf16 %v4774, %v4756
      %v5442 = vpack.c.bf16 %v4775, %v4757
      %v5443 = vpack.c.bf16 %v4776, %v4758
      %v5444 = vpack.c.bf16 %v4777, %v4759
      %v5445 = vpack.c.bf16 %v4796, %v4778
      %v5446 = vpack.c.bf16 %v4797, %v4779
      %v5447 = vpack.c.bf16 %v4798, %v4780
      %v5448 = vpack.c.bf16 %v4799, %v4781
      %v5449 = vpack.c.bf16 %v4800, %v4782
      %v5450 = vpack.c.bf16 %v4801, %v4783
      %v5451 = vpack.c.bf16 %v4802, %v4784
      %v5452 = vpack.c.bf16 %v4803, %v4785
      %v5453 = vpack.c.bf16 %v4804, %v4786
      %v5454 = vpack.c.bf16 %v4805, %v4787
      %v5455 = vpack.c.bf16 %v4806, %v4788
      %v5456 = vpack.c.bf16 %v4807, %v4789
      %v5457 = vpack.c.bf16 %v4808, %v4790
      %v5458 = vpack.c.bf16 %v4809, %v4791
      %v5459 = vpack.c.bf16 %v4810, %v4792
      %v5460 = vpack.c.bf16 %v4811, %v4793
      %v5461 = vpack.c.bf16 %v4812, %v4794
      %v5462 = vpack.c.bf16 %v4813, %v4795
      %v5463 = vpack.c.bf16 %v5337, %v5319
      %v5464 = vpack.c.bf16 %v5338, %v5320
      %v5465 = vpack.c.bf16 %v5339, %v5321
      %v5466 = vpack.c.bf16 %v5340, %v5322
      %v5467 = vpack.c.bf16 %v5341, %v5323
      %v5468 = vpack.c.bf16 %v5342, %v5324
      %v5469 = vpack.c.bf16 %v5343, %v5325
      %v5470 = vpack.c.bf16 %v5344, %v5326
      %v5471 = vpack.c.bf16 %v5345, %v5327
      %v5472 = vpack.c.bf16 %v5346, %v5328
      %v5473 = vpack.c.bf16 %v5347, %v5329
      %v5474 = vpack.c.bf16 %v5348, %v5330
      %v5475 = vpack.c.bf16 %v5349, %v5331
      %v5476 = vpack.c.bf16 %v5350, %v5332
      %v5477 = vpack.c.bf16 %v5351, %v5333
      %v5478 = vpack.c.bf16 %v5352, %v5334
      %v5479 = vpack.c.bf16 %v5353, %v5335
      %v5480 = vpack.c.bf16 %v5354, %v5336
      %v5481 = vpack.c.bf16 %v5373, %v5355
      %v5482 = vpack.c.bf16 %v5374, %v5356
      %v5483 = vpack.c.bf16 %v5375, %v5357
      %v5484 = vpack.c.bf16 %v5376, %v5358
      %v5485 = vpack.c.bf16 %v5377, %v5359
      %v5486 = vpack.c.bf16 %v5378, %v5360
      %v5487 = vpack.c.bf16 %v5379, %v5361
      %v5488 = vpack.c.bf16 %v5380, %v5362
      %v5489 = vpack.c.bf16 %v5381, %v5363
      %v5490 = vpack.c.bf16 %v5382, %v5364
      %v5491 = vpack.c.bf16 %v5383, %v5365
      %v5492 = vpack.c.bf16 %v5384, %v5366
      %v5493 = vpack.c.bf16 %v5385, %v5367
      %v5494 = vpack.c.bf16 %v5386, %v5368
      %v5495 = vpack.c.bf16 %v5387, %v5369
      %v5496 = vpack.c.bf16 %v5388, %v5370
      %v5497 = vpack.c.bf16 %v5389, %v5371
      %v5498 = vpack.c.bf16 %v5390, %v5372
      %v5500 = vsel %vm3349, %v4814, 0
      %5502 = vmatpush.bf16.msra.mxu0 0
      %5503 = vmatpush.bf16.msra.mxu0 0
      %5504 = vmatpush.bf16.msra.mxu0 %v5481
      %5505 = vmatpush.bf16.msra.mxu0 %v5463
      %5506 = vmatpush.bf16.msra.mxu0 %v5445
      %5507 = vmatpush.bf16.msra.mxu0 %v5427
      %5508 = vmatpush.bf16.msra.mxu0 %v5409
      %5509 = vmatpush.bf16.msra.mxu0 %v5391
      %5510 = vmatmul.bf16.gmra.mxu0 %v5500
      %v5511 = vpop.f32.mrf.mxu0
      %v5512 = vadd.f32 0.0, %v5511
      %v5513 = vpop.f32.mrf.mxu0
      %5514 = vdwg.mxu0
      %5515 = vmatpush.bf16.msra.mxu0 0
      %5516 = vmatpush.bf16.msra.mxu0 0
      %5517 = vmatpush.bf16.msra.mxu0 %v5482
      %5518 = vmatpush.bf16.msra.mxu0 %v5464
      %5519 = vmatpush.bf16.msra.mxu0 %v5446
      %5520 = vmatpush.bf16.msra.mxu0 %v5428
      %5521 = vmatpush.bf16.msra.mxu0 %v5410
      %5522 = vmatpush.bf16.msra.mxu0 %v5392
      %5523 = vmatmul.bf16.gmra.mxu0 %v5500
      %v5524 = vpop.f32.mrf.mxu0
      %v5525 = vadd.f32 0.0, %v5524
      %v5526 = vpop.f32.mrf.mxu0
      %5527 = vdwg.mxu0
      %5528 = vmatpush.bf16.msra.mxu0 0
      %5529 = vmatpush.bf16.msra.mxu0 0
      %5530 = vmatpush.bf16.msra.mxu0 %v5483
      %5531 = vmatpush.bf16.msra.mxu0 %v5465
      %5532 = vmatpush.bf16.msra.mxu0 %v5447
      %5533 = vmatpush.bf16.msra.mxu0 %v5429
      %5534 = vmatpush.bf16.msra.mxu0 %v5411
      %5535 = vmatpush.bf16.msra.mxu0 %v5393
      %5536 = vmatmul.bf16.gmra.mxu0 %v5500
      %v5537 = vpop.f32.mrf.mxu0
      %v5538 = vadd.f32 0.0, %v5537
      %v5539 = vpop.f32.mrf.mxu0
      %5540 = vdwg.mxu0
      %5541 = vmatpush.bf16.msra.mxu0 0
      %5542 = vmatpush.bf16.msra.mxu0 0
      %5543 = vmatpush.bf16.msra.mxu0 %v5484
      %5544 = vmatpush.bf16.msra.mxu0 %v5466
      %5545 = vmatpush.bf16.msra.mxu0 %v5448
      %5546 = vmatpush.bf16.msra.mxu0 %v5430
      %5547 = vmatpush.bf16.msra.mxu0 %v5412
      %5548 = vmatpush.bf16.msra.mxu0 %v5394
      %5549 = vmatmul.bf16.gmra.mxu0 %v5500
      %v5550 = vpop.f32.mrf.mxu0
      %v5551 = vadd.f32 0.0, %v5550
      %v5552 = vpop.f32.mrf.mxu0
      %5553 = vdwg.mxu0
      %5554 = vmatpush.bf16.msra.mxu0 0
      %5555 = vmatpush.bf16.msra.mxu0 0
      %5556 = vmatpush.bf16.msra.mxu0 %v5485
      %5557 = vmatpush.bf16.msra.mxu0 %v5467
      %5558 = vmatpush.bf16.msra.mxu0 %v5449
      %5559 = vmatpush.bf16.msra.mxu0 %v5431
      %5560 = vmatpush.bf16.msra.mxu0 %v5413
      %5561 = vmatpush.bf16.msra.mxu0 %v5395
      %5562 = vmatmul.bf16.gmra.mxu0 %v5500
      %v5563 = vpop.f32.mrf.mxu0
      %v5564 = vadd.f32 0.0, %v5563
      %v5565 = vpop.f32.mrf.mxu0
      %5566 = vdwg.mxu0
      %5567 = vmatpush.bf16.msra.mxu0 0
      %5568 = vmatpush.bf16.msra.mxu0 0
      %5569 = vmatpush.bf16.msra.mxu0 %v5486
      %5570 = vmatpush.bf16.msra.mxu0 %v5468
      %5571 = vmatpush.bf16.msra.mxu0 %v5450
      %5572 = vmatpush.bf16.msra.mxu0 %v5432
      %5573 = vmatpush.bf16.msra.mxu0 %v5414
      %5574 = vmatpush.bf16.msra.mxu0 %v5396
      %5575 = vmatmul.bf16.gmra.mxu0 %v5500
      %v5576 = vpop.f32.mrf.mxu0
      %v5577 = vadd.f32 0.0, %v5576
      %v5578 = vpop.f32.mrf.mxu0
      %5579 = vdwg.mxu0
      %5580 = vmatpush.bf16.msra.mxu0 0
      %5581 = vmatpush.bf16.msra.mxu0 0
      %5582 = vmatpush.bf16.msra.mxu0 %v5487
      %5583 = vmatpush.bf16.msra.mxu0 %v5469
      %5584 = vmatpush.bf16.msra.mxu0 %v5451
      %5585 = vmatpush.bf16.msra.mxu0 %v5433
      %5586 = vmatpush.bf16.msra.mxu0 %v5415
      %5587 = vmatpush.bf16.msra.mxu0 %v5397
      %5588 = vmatmul.bf16.gmra.mxu0 %v5500
      %v5589 = vpop.f32.mrf.mxu0
      %v5590 = vadd.f32 0.0, %v5589
      %v5591 = vpop.f32.mrf.mxu0
      %5592 = vdwg.mxu0
      %5593 = vmatpush.bf16.msra.mxu0 0
      %5594 = vmatpush.bf16.msra.mxu0 0
      %5595 = vmatpush.bf16.msra.mxu0 %v5488
      %5596 = vmatpush.bf16.msra.mxu0 %v5470
      %5597 = vmatpush.bf16.msra.mxu0 %v5452
      %5598 = vmatpush.bf16.msra.mxu0 %v5434
      %5599 = vmatpush.bf16.msra.mxu0 %v5416
      %5600 = vmatpush.bf16.msra.mxu0 %v5398
      %5601 = vmatmul.bf16.gmra.mxu0 %v5500
      %v5602 = vpop.f32.mrf.mxu0
      %v5603 = vadd.f32 0.0, %v5602
      %v5604 = vpop.f32.mrf.mxu0
      %5605 = vdwg.mxu0
      %5606 = vmatpush.bf16.msra.mxu0 0
      %5607 = vmatpush.bf16.msra.mxu0 0
      %5608 = vmatpush.bf16.msra.mxu0 %v5489
      %5609 = vmatpush.bf16.msra.mxu0 %v5471
      %5610 = vmatpush.bf16.msra.mxu0 %v5453
      %5611 = vmatpush.bf16.msra.mxu0 %v5435
      %5612 = vmatpush.bf16.msra.mxu0 %v5417
      %5613 = vmatpush.bf16.msra.mxu0 %v5399
      %5614 = vmatmul.bf16.gmra.mxu0 %v5500
      %v5615 = vpop.f32.mrf.mxu0
      %v5616 = vadd.f32 0.0, %v5615
      %v5617 = vpop.f32.mrf.mxu0
      %5618 = vdwg.mxu0
      %5619 = vmatpush.bf16.msra.mxu0 0
      %5620 = vmatpush.bf16.msra.mxu0 0
      %5621 = vmatpush.bf16.msra.mxu0 %v5490
      %5622 = vmatpush.bf16.msra.mxu0 %v5472
      %5623 = vmatpush.bf16.msra.mxu0 %v5454
      %5624 = vmatpush.bf16.msra.mxu0 %v5436
      %5625 = vmatpush.bf16.msra.mxu0 %v5418
      %5626 = vmatpush.bf16.msra.mxu0 %v5400
      %5627 = vmatmul.bf16.gmra.mxu0 %v5500
      %v5628 = vpop.f32.mrf.mxu0
      %v5629 = vadd.f32 0.0, %v5628
      %v5630 = vpop.f32.mrf.mxu0
      %5631 = vdwg.mxu0
      %5632 = vmatpush.bf16.msra.mxu0 0
      %5633 = vmatpush.bf16.msra.mxu0 0
      %5634 = vmatpush.bf16.msra.mxu0 %v5491
      %5635 = vmatpush.bf16.msra.mxu0 %v5473
      %5636 = vmatpush.bf16.msra.mxu0 %v5455
      %5637 = vmatpush.bf16.msra.mxu0 %v5437
      %5638 = vmatpush.bf16.msra.mxu0 %v5419
      %5639 = vmatpush.bf16.msra.mxu0 %v5401
      %5640 = vmatmul.bf16.gmra.mxu0 %v5500
      %v5641 = vpop.f32.mrf.mxu0
      %v5642 = vadd.f32 0.0, %v5641
      %v5643 = vpop.f32.mrf.mxu0
      %5644 = vdwg.mxu0
      %5645 = vmatpush.bf16.msra.mxu0 0
      %5646 = vmatpush.bf16.msra.mxu0 0
      %5647 = vmatpush.bf16.msra.mxu0 %v5492
      %5648 = vmatpush.bf16.msra.mxu0 %v5474
      %5649 = vmatpush.bf16.msra.mxu0 %v5456
      %5650 = vmatpush.bf16.msra.mxu0 %v5438
      %5651 = vmatpush.bf16.msra.mxu0 %v5420
      %5652 = vmatpush.bf16.msra.mxu0 %v5402
      %5653 = vmatmul.bf16.gmra.mxu0 %v5500
      %v5654 = vpop.f32.mrf.mxu0
      %v5655 = vadd.f32 0.0, %v5654
      %v5656 = vpop.f32.mrf.mxu0
      %5657 = vdwg.mxu0
      %5658 = vmatpush.bf16.msra.mxu0 0
      %5659 = vmatpush.bf16.msra.mxu0 0
      %5660 = vmatpush.bf16.msra.mxu0 %v5493
      %5661 = vmatpush.bf16.msra.mxu0 %v5475
      %5662 = vmatpush.bf16.msra.mxu0 %v5457
      %5663 = vmatpush.bf16.msra.mxu0 %v5439
      %5664 = vmatpush.bf16.msra.mxu0 %v5421
      %5665 = vmatpush.bf16.msra.mxu0 %v5403
      %5666 = vmatmul.bf16.gmra.mxu0 %v5500
      %v5667 = vpop.f32.mrf.mxu0
      %v5668 = vadd.f32 0.0, %v5667
      %v5669 = vpop.f32.mrf.mxu0
      %5670 = vdwg.mxu0
      %5671 = vmatpush.bf16.msra.mxu0 0
      %5672 = vmatpush.bf16.msra.mxu0 0
      %5673 = vmatpush.bf16.msra.mxu0 %v5494
      %5674 = vmatpush.bf16.msra.mxu0 %v5476
      %5675 = vmatpush.bf16.msra.mxu0 %v5458
      %5676 = vmatpush.bf16.msra.mxu0 %v5440
      %5677 = vmatpush.bf16.msra.mxu0 %v5422
      %5678 = vmatpush.bf16.msra.mxu0 %v5404
      %5679 = vmatmul.bf16.gmra.mxu0 %v5500
      %v5680 = vpop.f32.mrf.mxu0
      %v5681 = vadd.f32 0.0, %v5680
      %v5682 = vpop.f32.mrf.mxu0
      %5683 = vdwg.mxu0
      %5684 = vmatpush.bf16.msra.mxu0 0
      %5685 = vmatpush.bf16.msra.mxu0 0
      %5686 = vmatpush.bf16.msra.mxu0 %v5495
      %5687 = vmatpush.bf16.msra.mxu0 %v5477
      %5688 = vmatpush.bf16.msra.mxu0 %v5459
      %5689 = vmatpush.bf16.msra.mxu0 %v5441
      %5690 = vmatpush.bf16.msra.mxu0 %v5423
      %5691 = vmatpush.bf16.msra.mxu0 %v5405
      %5692 = vmatmul.bf16.gmra.mxu0 %v5500
      %v5693 = vpop.f32.mrf.mxu0
      %v5694 = vadd.f32 0.0, %v5693
      %v5695 = vpop.f32.mrf.mxu0
      %5696 = vdwg.mxu0
      %5697 = vmatpush.bf16.msra.mxu0 0
      %5698 = vmatpush.bf16.msra.mxu0 0
      %5699 = vmatpush.bf16.msra.mxu0 %v5496
      %5700 = vmatpush.bf16.msra.mxu0 %v5478
      %5701 = vmatpush.bf16.msra.mxu0 %v5460
      %5702 = vmatpush.bf16.msra.mxu0 %v5442
      %5703 = vmatpush.bf16.msra.mxu0 %v5424
      %5704 = vmatpush.bf16.msra.mxu0 %v5406
      %5705 = vmatmul.bf16.gmra.mxu0 %v5500
      %v5706 = vpop.f32.mrf.mxu0
      %v5707 = vadd.f32 0.0, %v5706
      %v5708 = vpop.f32.mrf.mxu0
      %5709 = vdwg.mxu0
      %5710 = vmatpush.bf16.msra.mxu0 0
      %5711 = vmatpush.bf16.msra.mxu0 0
      %5712 = vmatpush.bf16.msra.mxu0 %v5497
      %5713 = vmatpush.bf16.msra.mxu0 %v5479
      %5714 = vmatpush.bf16.msra.mxu0 %v5461
      %5715 = vmatpush.bf16.msra.mxu0 %v5443
      %5716 = vmatpush.bf16.msra.mxu0 %v5425
      %5717 = vmatpush.bf16.msra.mxu0 %v5407
      %5718 = vmatmul.bf16.gmra.mxu0 %v5500
      %v5719 = vpop.f32.mrf.mxu0
      %v5720 = vadd.f32 0.0, %v5719
      %v5721 = vpop.f32.mrf.mxu0
      %5722 = vdwg.mxu0
      %5723 = vmatpush.bf16.msra.mxu0 0
      %5724 = vmatpush.bf16.msra.mxu0 0
      %5725 = vmatpush.bf16.msra.mxu0 %v5498
      %5726 = vmatpush.bf16.msra.mxu0 %v5480
      %5727 = vmatpush.bf16.msra.mxu0 %v5462
      %5728 = vmatpush.bf16.msra.mxu0 %v5444
      %5729 = vmatpush.bf16.msra.mxu0 %v5426
      %5730 = vmatpush.bf16.msra.mxu0 %v5408
      %5731 = vmatmul.bf16.gmra.mxu0 %v5500
      %v5732 = vpop.f32.mrf.mxu0
      %v5733 = vadd.f32 0.0, %v5732
      %v5734 = vpop.f32.mrf.mxu0
      %5735 = vdwg.mxu0
      %5736 = vrot.lane.b32.xlu0 %v5512, 16
      %v5737 = vpop.permute.xlu0 %5736
      %5738 = vrot.lane.b32.xlu0 %v5525, 16
      %v5739 = vpop.permute.xlu0 %5738
      %5740 = vrot.lane.b32.xlu0 %v5538, 16
      %v5741 = vpop.permute.xlu0 %5740
      %5742 = vrot.lane.b32.xlu0 %v5551, 16
      %v5743 = vpop.permute.xlu0 %5742
      %5744 = vrot.lane.b32.xlu0 %v5564, 16
      %v5745 = vpop.permute.xlu0 %5744
      %5746 = vrot.lane.b32.xlu0 %v5577, 16
      %v5747 = vpop.permute.xlu0 %5746
      %5748 = vrot.lane.b32.xlu0 %v5590, 16
      %v5749 = vpop.permute.xlu0 %5748
      %5750 = vrot.lane.b32.xlu0 %v5603, 16
      %v5751 = vpop.permute.xlu0 %5750
      %5752 = vrot.lane.b32.xlu0 %v5616, 16
      %v5753 = vpop.permute.xlu0 %5752
      %5754 = vrot.lane.b32.xlu0 %v5629, 16
      %v5755 = vpop.permute.xlu0 %5754
      %5756 = vrot.lane.b32.xlu0 %v5642, 16
      %v5757 = vpop.permute.xlu0 %5756
      %5758 = vrot.lane.b32.xlu0 %v5655, 16
      %v5759 = vpop.permute.xlu0 %5758
      %5760 = vrot.lane.b32.xlu0 %v5668, 16
      %v5761 = vpop.permute.xlu0 %5760
      %5762 = vrot.lane.b32.xlu0 %v5681, 16
      %v5763 = vpop.permute.xlu0 %5762
      %5764 = vrot.lane.b32.xlu0 %v5694, 16
      %v5765 = vpop.permute.xlu0 %5764
      %5766 = vrot.lane.b32.xlu0 %v5707, 16
      %v5767 = vpop.permute.xlu0 %5766
      %5768 = vrot.lane.b32.xlu0 %v5720, 16
      %v5769 = vpop.permute.xlu0 %5768
      %5770 = vrot.lane.b32.xlu0 %v5733, 16
      %v5771 = vpop.permute.xlu0 %5770
      %v5772 = vsel %vm1902, %v5769, %v5771
      %v5773 = vsel %vm1902, %v5767, %v5769
      %v5774 = vsel %vm1902, %v5765, %v5767
      %v5775 = vsel %vm1902, %v5763, %v5765
      %v5776 = vsel %vm1902, %v5761, %v5763
      %v5777 = vsel %vm1902, %v5759, %v5761
      %v5778 = vsel %vm1902, %v5757, %v5759
      %v5779 = vsel %vm1902, %v5755, %v5757
      %v5780 = vsel %vm1902, %v5753, %v5755
      %v5781 = vsel %vm1902, %v5751, %v5753
      %v5782 = vsel %vm1902, %v5749, %v5751
      %v5783 = vsel %vm1902, %v5747, %v5749
      %v5784 = vsel %vm1902, %v5745, %v5747
      %v5785 = vsel %vm1902, %v5743, %v5745
      %v5786 = vsel %vm1902, %v5741, %v5743
      %v5787 = vsel %vm1902, %v5739, %v5741
      %v5788 = vsel %vm1902, %v5737, %v5739
      %v5789 = vsel %vm1902, %v5771, %v5737
      %v5808 = vrot.slane %v5789, 7
      %v5809 = vrot.slane %v5788, 7
      %v5810 = vrot.slane %v5787, 7
      %v5811 = vrot.slane %v5786, 7
      %v5812 = vrot.slane %v5785, 7
      %v5813 = vrot.slane %v5784, 7
      %v5814 = vrot.slane %v5783, 7
      %v5815 = vrot.slane %v5782, 7
      %v5816 = vrot.slane %v5781, 7
      %v5817 = vrot.slane %v5780, 7
      %v5818 = vrot.slane %v5779, 7
      %v5819 = vrot.slane %v5778, 7
      %v5820 = vrot.slane %v5777, 7
      %v5821 = vrot.slane %v5776, 7
      %v5822 = vrot.slane %v5775, 7
      %v5823 = vrot.slane %v5774, 7
      %v5824 = vrot.slane %v5773, 7
      %v5825 = vrot.slane %v5772, 7
      %v5844 = vadd.f32 %v5512, %v5808
      %v5845 = vadd.f32 %v5525, %v5809
      %v5846 = vadd.f32 %v5538, %v5810
      %v5847 = vadd.f32 %v5551, %v5811
      %v5848 = vadd.f32 %v5564, %v5812
      %v5849 = vadd.f32 %v5577, %v5813
      %v5850 = vadd.f32 %v5590, %v5814
      %v5851 = vadd.f32 %v5603, %v5815
      %v5852 = vadd.f32 %v5616, %v5816
      %v5853 = vadd.f32 %v5629, %v5817
      %v5854 = vadd.f32 %v5642, %v5818
      %v5855 = vadd.f32 %v5655, %v5819
      %v5856 = vadd.f32 %v5668, %v5820
      %v5857 = vadd.f32 %v5681, %v5821
      %v5858 = vadd.f32 %v5694, %v5822
      %v5859 = vadd.f32 %v5707, %v5823
      %v5860 = vadd.f32 %v5720, %v5824
      %v5861 = vadd.f32 %v5733, %v5825
      %v5880 = vrot.slane %v5512, 2
      %v5881 = vrot.slane %v5525, 2
      %v5882 = vrot.slane %v5538, 2
      %v5883 = vrot.slane %v5551, 2
      %v5884 = vrot.slane %v5564, 2
      %v5885 = vrot.slane %v5577, 2
      %v5886 = vrot.slane %v5590, 2
      %v5887 = vrot.slane %v5603, 2
      %v5888 = vrot.slane %v5616, 2
      %v5889 = vrot.slane %v5629, 2
      %v5890 = vrot.slane %v5642, 2
      %v5891 = vrot.slane %v5655, 2
      %v5892 = vrot.slane %v5668, 2
      %v5893 = vrot.slane %v5681, 2
      %v5894 = vrot.slane %v5694, 2
      %v5895 = vrot.slane %v5707, 2
      %v5896 = vrot.slane %v5720, 2
      %v5897 = vrot.slane %v5733, 2
      %5916 = vrot.lane.b32.xlu0 %v5880, 112
      %v5917 = vpop.permute.xlu0 %5916
      %5918 = vrot.lane.b32.xlu0 %v5881, 112
      %v5919 = vpop.permute.xlu0 %5918
      %5920 = vrot.lane.b32.xlu0 %v5882, 112
      %v5921 = vpop.permute.xlu0 %5920
      %5922 = vrot.lane.b32.xlu0 %v5883, 112
      %v5923 = vpop.permute.xlu0 %5922
      %5924 = vrot.lane.b32.xlu0 %v5884, 112
      %v5925 = vpop.permute.xlu0 %5924
      %5926 = vrot.lane.b32.xlu0 %v5885, 112
      %v5927 = vpop.permute.xlu0 %5926
      %5928 = vrot.lane.b32.xlu0 %v5886, 112
      %v5929 = vpop.permute.xlu0 %5928
      %5930 = vrot.lane.b32.xlu0 %v5887, 112
      %v5931 = vpop.permute.xlu0 %5930
      %5932 = vrot.lane.b32.xlu0 %v5888, 112
      %v5933 = vpop.permute.xlu0 %5932
      %5934 = vrot.lane.b32.xlu0 %v5889, 112
      %v5935 = vpop.permute.xlu0 %5934
      %5936 = vrot.lane.b32.xlu0 %v5890, 112
      %v5937 = vpop.permute.xlu0 %5936
      %5938 = vrot.lane.b32.xlu0 %v5891, 112
      %v5939 = vpop.permute.xlu0 %5938
      %5940 = vrot.lane.b32.xlu0 %v5892, 112
      %v5941 = vpop.permute.xlu0 %5940
      %5942 = vrot.lane.b32.xlu0 %v5893, 112
      %v5943 = vpop.permute.xlu0 %5942
      %5944 = vrot.lane.b32.xlu0 %v5894, 112
      %v5945 = vpop.permute.xlu0 %5944
      %5946 = vrot.lane.b32.xlu0 %v5895, 112
      %v5947 = vpop.permute.xlu0 %5946
      %5948 = vrot.lane.b32.xlu0 %v5896, 112
      %v5949 = vpop.permute.xlu0 %5948
      %5950 = vrot.lane.b32.xlu0 %v5897, 112
      %v5951 = vpop.permute.xlu0 %5950
      %v5952 = vsel %vm2191, %v5949, %v5951
      %v5953 = vsel %vm2191, %v5947, %v5949
      %v5954 = vsel %vm2191, %v5945, %v5947
      %v5955 = vsel %vm2191, %v5943, %v5945
      %v5956 = vsel %vm2191, %v5941, %v5943
      %v5957 = vsel %vm2191, %v5939, %v5941
      %v5958 = vsel %vm2191, %v5937, %v5939
      %v5959 = vsel %vm2191, %v5935, %v5937
      %v5960 = vsel %vm2191, %v5933, %v5935
      %v5961 = vsel %vm2191, %v5931, %v5933
      %v5962 = vsel %vm2191, %v5929, %v5931
      %v5963 = vsel %vm2191, %v5927, %v5929
      %v5964 = vsel %vm2191, %v5925, %v5927
      %v5965 = vsel %vm2191, %v5923, %v5925
      %v5966 = vsel %vm2191, %v5921, %v5923
      %v5967 = vsel %vm2191, %v5919, %v5921
      %v5968 = vsel %vm2191, %v5917, %v5919
      %v5969 = vsel %vm2191, %v5951, %v5917
      %v5988 = vrot.slane %v5968, 7
      %v5989 = vrot.slane %v5967, 7
      %v5990 = vrot.slane %v5966, 7
      %v5991 = vrot.slane %v5965, 7
      %v5992 = vrot.slane %v5964, 7
      %v5993 = vrot.slane %v5963, 7
      %v5994 = vrot.slane %v5962, 7
      %v5995 = vrot.slane %v5961, 7
      %v5996 = vrot.slane %v5960, 7
      %v5997 = vrot.slane %v5959, 7
      %v5998 = vrot.slane %v5958, 7
      %v5999 = vrot.slane %v5957, 7
      %v6000 = vrot.slane %v5956, 7
      %v6001 = vrot.slane %v5955, 7
      %v6002 = vrot.slane %v5954, 7
      %v6003 = vrot.slane %v5953, 7
      %v6004 = vrot.slane %v5952, 7
      %v6005 = vrot.slane %v5969, 7
      %v6024 = vadd.f32 %v5844, %v5988
      %v6025 = vadd.f32 %v5845, %v5989
      %v6026 = vadd.f32 %v5846, %v5990
      %v6027 = vadd.f32 %v5847, %v5991
      %v6028 = vadd.f32 %v5848, %v5992
      %v6029 = vadd.f32 %v5849, %v5993
      %v6030 = vadd.f32 %v5850, %v5994
      %v6031 = vadd.f32 %v5851, %v5995
      %v6032 = vadd.f32 %v5852, %v5996
      %v6033 = vadd.f32 %v5853, %v5997
      %v6034 = vadd.f32 %v5854, %v5998
      %v6035 = vadd.f32 %v5855, %v5999
      %v6036 = vadd.f32 %v5856, %v6000
      %v6037 = vadd.f32 %v5857, %v6001
      %v6038 = vadd.f32 %v5858, %v6002
      %v6039 = vadd.f32 %v5859, %v6003
      %v6040 = vadd.f32 %v5860, %v6004
      %v6041 = vadd.f32 %v5861, %v6005
      %s6042 = sld [smem:[#allocation2]]
      %v6043 = vstv %s6042
      %v6044 = vadd.f32 %v6024, %v6043
      %v6045 = vadd.f32 %v6025, %v6043
      %v6046 = vadd.f32 %v6026, %v6043
      %v6047 = vadd.f32 %v6027, %v6043
      %v6048 = vadd.f32 %v6028, %v6043
      %v6049 = vadd.f32 %v6029, %v6043
      %v6050 = vadd.f32 %v6030, %v6043
      %v6051 = vadd.f32 %v6031, %v6043
      %v6052 = vadd.f32 %v6032, %v6043
      %v6053 = vadd.f32 %v6033, %v6043
      %v6054 = vadd.f32 %v6034, %v6043
      %v6055 = vadd.f32 %v6035, %v6043
      %v6056 = vadd.f32 %v6036, %v6043
      %v6057 = vadd.f32 %v6037, %v6043
      %v6058 = vadd.f32 %v6038, %v6043
      %v6059 = vadd.f32 %v6039, %v6043
      %v6060 = vadd.f32 %v6040, %v6043
      %v6061 = vadd.f32 %v6041, %v6043
      %v6062 = vxor.u32 %v6044, 2147483648
      %v6063 = vxor.u32 %v6045, 2147483648
      %v6064 = vxor.u32 %v6046, 2147483648
      %v6065 = vxor.u32 %v6047, 2147483648
      %v6066 = vxor.u32 %v6048, 2147483648
      %v6067 = vxor.u32 %v6049, 2147483648
      %v6068 = vxor.u32 %v6050, 2147483648
      %v6069 = vxor.u32 %v6051, 2147483648
      %v6070 = vxor.u32 %v6052, 2147483648
      %v6071 = vxor.u32 %v6053, 2147483648
      %v6072 = vxor.u32 %v6054, 2147483648
      %v6073 = vxor.u32 %v6055, 2147483648
      %v6074 = vxor.u32 %v6056, 2147483648
      %v6075 = vxor.u32 %v6057, 2147483648
      %v6076 = vxor.u32 %v6058, 2147483648
      %v6077 = vxor.u32 %v6059, 2147483648
      %v6078 = vxor.u32 %v6060, 2147483648
      %v6079 = vxor.u32 %v6061, 2147483648
      %v6080 = vmul.f32 %v6062, 1.442695
      %v6081 = vpow.pop %v6080
      %v6082 = vmul.f32 %v6063, 1.442695
      %v6083 = vpow.pop %v6082
      %v6084 = vmul.f32 %v6064, 1.442695
      %v6085 = vpow.pop %v6084
      %v6086 = vmul.f32 %v6065, 1.442695
      %v6087 = vpow.pop %v6086
      %v6088 = vmul.f32 %v6066, 1.442695
      %v6089 = vpow.pop %v6088
      %v6090 = vmul.f32 %v6067, 1.442695
      %v6091 = vpow.pop %v6090
      %v6092 = vmul.f32 %v6068, 1.442695
      %v6093 = vpow.pop %v6092
      %v6094 = vmul.f32 %v6069, 1.442695
      %v6095 = vpow.pop %v6094
      %v6096 = vmul.f32 %v6070, 1.442695
      %v6097 = vpow.pop %v6096
      %v6098 = vmul.f32 %v6071, 1.442695
      %v6099 = vpow.pop %v6098
      %v6100 = vmul.f32 %v6072, 1.442695
      %v6101 = vpow.pop %v6100
      %v6102 = vmul.f32 %v6073, 1.442695
      %v6103 = vpow.pop %v6102
      %v6104 = vmul.f32 %v6074, 1.442695
      %v6105 = vpow.pop %v6104
      %v6106 = vmul.f32 %v6075, 1.442695
      %v6107 = vpow.pop %v6106
      %v6108 = vmul.f32 %v6076, 1.442695
      %v6109 = vpow.pop %v6108
      %v6110 = vmul.f32 %v6077, 1.442695
      %v6111 = vpow.pop %v6110
      %v6112 = vmul.f32 %v6078, 1.442695
      %v6113 = vpow.pop %v6112
      %v6114 = vmul.f32 %v6079, 1.442695
      %v6115 = vpow.pop %v6114
      %v6116 = vadd.f32 %v6081, 1.0
      %v6117 = vadd.f32 %v6083, 1.0
      %v6118 = vadd.f32 %v6085, 1.0
      %v6119 = vadd.f32 %v6087, 1.0
      %v6120 = vadd.f32 %v6089, 1.0
      %v6121 = vadd.f32 %v6091, 1.0
      %v6122 = vadd.f32 %v6093, 1.0
      %v6123 = vadd.f32 %v6095, 1.0
      %v6124 = vadd.f32 %v6097, 1.0
      %v6125 = vadd.f32 %v6099, 1.0
      %v6126 = vadd.f32 %v6101, 1.0
      %v6127 = vadd.f32 %v6103, 1.0
      %v6128 = vadd.f32 %v6105, 1.0
      %v6129 = vadd.f32 %v6107, 1.0
      %v6130 = vadd.f32 %v6109, 1.0
      %v6131 = vadd.f32 %v6111, 1.0
      %v6132 = vadd.f32 %v6113, 1.0
      %v6133 = vadd.f32 %v6115, 1.0
      %v6134 = vrcp.pop %v6116
      %v6135 = vmul.f32 %v6116, %v6134
      %v6136 = vsub.f32 1.0, %v6135
      %v6137 = vmul.f32 %v6134, %v6136
      %v6138 = vadd.f32 %v6134, %v6137
      %vm6139 = vweird.f32 %v6116
      %vm6140 = vweird.f32 %v6134
      %vm6141 = vmor %vm6139, %vm6140
      %v6142 = vsel %vm6141, %v6134, %v6138
      %v6143 = vand.u32 2147483647, %v6116
      %vm6144 = vcmp.eq.f32.partialorder %v6143, 8.507059e+37
      %v6145 = vand.u32 %v6116, 2147483648
      %v6146 = vor.u32 1.1754944e-38, %v6145
      %v6147 = vsel %vm6144, %v6146, %v6142
      %v6148 = vmul.f32 1.0, %v6147
      %v6149 = vrcp.pop %v6117
      %v6150 = vmul.f32 %v6117, %v6149
      %v6151 = vsub.f32 1.0, %v6150
      %v6152 = vmul.f32 %v6149, %v6151
      %v6153 = vadd.f32 %v6149, %v6152
      %vm6154 = vweird.f32 %v6117
      %vm6155 = vweird.f32 %v6149
      %vm6156 = vmor %vm6154, %vm6155
      %v6157 = vsel %vm6156, %v6149, %v6153
      %v6158 = vand.u32 2147483647, %v6117
      %vm6159 = vcmp.eq.f32.partialorder %v6158, 8.507059e+37
      %v6160 = vand.u32 %v6117, 2147483648
      %v6161 = vor.u32 1.1754944e-38, %v6160
      %v6162 = vsel %vm6159, %v6161, %v6157
      %v6163 = vmul.f32 1.0, %v6162
      %v6164 = vrcp.pop %v6118
      %v6165 = vmul.f32 %v6118, %v6164
      %v6166 = vsub.f32 1.0, %v6165
      %v6167 = vmul.f32 %v6164, %v6166
      %v6168 = vadd.f32 %v6164, %v6167
      %vm6169 = vweird.f32 %v6118
      %vm6170 = vweird.f32 %v6164
      %vm6171 = vmor %vm6169, %vm6170
      %v6172 = vsel %vm6171, %v6164, %v6168
      %v6173 = vand.u32 2147483647, %v6118
      %vm6174 = vcmp.eq.f32.partialorder %v6173, 8.507059e+37
      %v6175 = vand.u32 %v6118, 2147483648
      %v6176 = vor.u32 1.1754944e-38, %v6175
      %v6177 = vsel %vm6174, %v6176, %v6172
      %v6178 = vmul.f32 1.0, %v6177
      %v6179 = vrcp.pop %v6119
      %v6180 = vmul.f32 %v6119, %v6179
      %v6181 = vsub.f32 1.0, %v6180
      %v6182 = vmul.f32 %v6179, %v6181
      %v6183 = vadd.f32 %v6179, %v6182
      %vm6184 = vweird.f32 %v6119
      %vm6185 = vweird.f32 %v6179
      %vm6186 = vmor %vm6184, %vm6185
      %v6187 = vsel %vm6186, %v6179, %v6183
      %v6188 = vand.u32 2147483647, %v6119
      %vm6189 = vcmp.eq.f32.partialorder %v6188, 8.507059e+37
      %v6190 = vand.u32 %v6119, 2147483648
      %v6191 = vor.u32 1.1754944e-38, %v6190
      %v6192 = vsel %vm6189, %v6191, %v6187
      %v6193 = vmul.f32 1.0, %v6192
      %v6194 = vrcp.pop %v6120
      %v6195 = vmul.f32 %v6120, %v6194
      %v6196 = vsub.f32 1.0, %v6195
      %v6197 = vmul.f32 %v6194, %v6196
      %v6198 = vadd.f32 %v6194, %v6197
      %vm6199 = vweird.f32 %v6120
      %vm6200 = vweird.f32 %v6194
      %vm6201 = vmor %vm6199, %vm6200
      %v6202 = vsel %vm6201, %v6194, %v6198
      %v6203 = vand.u32 2147483647, %v6120
      %vm6204 = vcmp.eq.f32.partialorder %v6203, 8.507059e+37
      %v6205 = vand.u32 %v6120, 2147483648
      %v6206 = vor.u32 1.1754944e-38, %v6205
      %v6207 = vsel %vm6204, %v6206, %v6202
      %v6208 = vmul.f32 1.0, %v6207
      %v6209 = vrcp.pop %v6121
      %v6210 = vmul.f32 %v6121, %v6209
      %v6211 = vsub.f32 1.0, %v6210
      %v6212 = vmul.f32 %v6209, %v6211
      %v6213 = vadd.f32 %v6209, %v6212
      %vm6214 = vweird.f32 %v6121
      %vm6215 = vweird.f32 %v6209
      %vm6216 = vmor %vm6214, %vm6215
      %v6217 = vsel %vm6216, %v6209, %v6213
      %v6218 = vand.u32 2147483647, %v6121
      %vm6219 = vcmp.eq.f32.partialorder %v6218, 8.507059e+37
      %v6220 = vand.u32 %v6121, 2147483648
      %v6221 = vor.u32 1.1754944e-38, %v6220
      %v6222 = vsel %vm6219, %v6221, %v6217
      %v6223 = vmul.f32 1.0, %v6222
      %v6224 = vrcp.pop %v6122
      %v6225 = vmul.f32 %v6122, %v6224
      %v6226 = vsub.f32 1.0, %v6225
      %v6227 = vmul.f32 %v6224, %v6226
      %v6228 = vadd.f32 %v6224, %v6227
      %vm6229 = vweird.f32 %v6122
      %vm6230 = vweird.f32 %v6224
      %vm6231 = vmor %vm6229, %vm6230
      %v6232 = vsel %vm6231, %v6224, %v6228
      %v6233 = vand.u32 2147483647, %v6122
      %vm6234 = vcmp.eq.f32.partialorder %v6233, 8.507059e+37
      %v6235 = vand.u32 %v6122, 2147483648
      %v6236 = vor.u32 1.1754944e-38, %v6235
      %v6237 = vsel %vm6234, %v6236, %v6232
      %v6238 = vmul.f32 1.0, %v6237
      %v6239 = vrcp.pop %v6123
      %v6240 = vmul.f32 %v6123, %v6239
      %v6241 = vsub.f32 1.0, %v6240
      %v6242 = vmul.f32 %v6239, %v6241
      %v6243 = vadd.f32 %v6239, %v6242
      %vm6244 = vweird.f32 %v6123
      %vm6245 = vweird.f32 %v6239
      %vm6246 = vmor %vm6244, %vm6245
      %v6247 = vsel %vm6246, %v6239, %v6243
      %v6248 = vand.u32 2147483647, %v6123
      %vm6249 = vcmp.eq.f32.partialorder %v6248, 8.507059e+37
      %v6250 = vand.u32 %v6123, 2147483648
      %v6251 = vor.u32 1.1754944e-38, %v6250
      %v6252 = vsel %vm6249, %v6251, %v6247
      %v6253 = vmul.f32 1.0, %v6252
      %v6254 = vrcp.pop %v6124
      %v6255 = vmul.f32 %v6124, %v6254
      %v6256 = vsub.f32 1.0, %v6255
      %v6257 = vmul.f32 %v6254, %v6256
      %v6258 = vadd.f32 %v6254, %v6257
      %vm6259 = vweird.f32 %v6124
      %vm6260 = vweird.f32 %v6254
      %vm6261 = vmor %vm6259, %vm6260
      %v6262 = vsel %vm6261, %v6254, %v6258
      %v6263 = vand.u32 2147483647, %v6124
      %vm6264 = vcmp.eq.f32.partialorder %v6263, 8.507059e+37
      %v6265 = vand.u32 %v6124, 2147483648
      %v6266 = vor.u32 1.1754944e-38, %v6265
      %v6267 = vsel %vm6264, %v6266, %v6262
      %v6268 = vmul.f32 1.0, %v6267
      %v6269 = vrcp.pop %v6125
      %v6270 = vmul.f32 %v6125, %v6269
      %v6271 = vsub.f32 1.0, %v6270
      %v6272 = vmul.f32 %v6269, %v6271
      %v6273 = vadd.f32 %v6269, %v6272
      %vm6274 = vweird.f32 %v6125
      %vm6275 = vweird.f32 %v6269
      %vm6276 = vmor %vm6274, %vm6275
      %v6277 = vsel %vm6276, %v6269, %v6273
      %v6278 = vand.u32 2147483647, %v6125
      %vm6279 = vcmp.eq.f32.partialorder %v6278, 8.507059e+37
      %v6280 = vand.u32 %v6125, 2147483648
      %v6281 = vor.u32 1.1754944e-38, %v6280
      %v6282 = vsel %vm6279, %v6281, %v6277
      %v6283 = vmul.f32 1.0, %v6282
      %v6284 = vrcp.pop %v6126
      %v6285 = vmul.f32 %v6126, %v6284
      %v6286 = vsub.f32 1.0, %v6285
      %v6287 = vmul.f32 %v6284, %v6286
      %v6288 = vadd.f32 %v6284, %v6287
      %vm6289 = vweird.f32 %v6126
      %vm6290 = vweird.f32 %v6284
      %vm6291 = vmor %vm6289, %vm6290
      %v6292 = vsel %vm6291, %v6284, %v6288
      %v6293 = vand.u32 2147483647, %v6126
      %vm6294 = vcmp.eq.f32.partialorder %v6293, 8.507059e+37
      %v6295 = vand.u32 %v6126, 2147483648
      %v6296 = vor.u32 1.1754944e-38, %v6295
      %v6297 = vsel %vm6294, %v6296, %v6292
      %v6298 = vmul.f32 1.0, %v6297
      %v6299 = vrcp.pop %v6127
      %v6300 = vmul.f32 %v6127, %v6299
      %v6301 = vsub.f32 1.0, %v6300
      %v6302 = vmul.f32 %v6299, %v6301
      %v6303 = vadd.f32 %v6299, %v6302
      %vm6304 = vweird.f32 %v6127
      %vm6305 = vweird.f32 %v6299
      %vm6306 = vmor %vm6304, %vm6305
      %v6307 = vsel %vm6306, %v6299, %v6303
      %v6308 = vand.u32 2147483647, %v6127
      %vm6309 = vcmp.eq.f32.partialorder %v6308, 8.507059e+37
      %v6310 = vand.u32 %v6127, 2147483648
      %v6311 = vor.u32 1.1754944e-38, %v6310
      %v6312 = vsel %vm6309, %v6311, %v6307
      %v6313 = vmul.f32 1.0, %v6312
      %v6314 = vrcp.pop %v6128
      %v6315 = vmul.f32 %v6128, %v6314
      %v6316 = vsub.f32 1.0, %v6315
      %v6317 = vmul.f32 %v6314, %v6316
      %v6318 = vadd.f32 %v6314, %v6317
      %vm6319 = vweird.f32 %v6128
      %vm6320 = vweird.f32 %v6314
      %vm6321 = vmor %vm6319, %vm6320
      %v6322 = vsel %vm6321, %v6314, %v6318
      %v6323 = vand.u32 2147483647, %v6128
      %vm6324 = vcmp.eq.f32.partialorder %v6323, 8.507059e+37
      %v6325 = vand.u32 %v6128, 2147483648
      %v6326 = vor.u32 1.1754944e-38, %v6325
      %v6327 = vsel %vm6324, %v6326, %v6322
      %v6328 = vmul.f32 1.0, %v6327
      %v6329 = vrcp.pop %v6129
      %v6330 = vmul.f32 %v6129, %v6329
      %v6331 = vsub.f32 1.0, %v6330
      %v6332 = vmul.f32 %v6329, %v6331
      %v6333 = vadd.f32 %v6329, %v6332
      %vm6334 = vweird.f32 %v6129
      %vm6335 = vweird.f32 %v6329
      %vm6336 = vmor %vm6334, %vm6335
      %v6337 = vsel %vm6336, %v6329, %v6333
      %v6338 = vand.u32 2147483647, %v6129
      %vm6339 = vcmp.eq.f32.partialorder %v6338, 8.507059e+37
      %v6340 = vand.u32 %v6129, 2147483648
      %v6341 = vor.u32 1.1754944e-38, %v6340
      %v6342 = vsel %vm6339, %v6341, %v6337
      %v6343 = vmul.f32 1.0, %v6342
      %v6344 = vrcp.pop %v6130
      %v6345 = vmul.f32 %v6130, %v6344
      %v6346 = vsub.f32 1.0, %v6345
      %v6347 = vmul.f32 %v6344, %v6346
      %v6348 = vadd.f32 %v6344, %v6347
      %vm6349 = vweird.f32 %v6130
      %vm6350 = vweird.f32 %v6344
      %vm6351 = vmor %vm6349, %vm6350
      %v6352 = vsel %vm6351, %v6344, %v6348
      %v6353 = vand.u32 2147483647, %v6130
      %vm6354 = vcmp.eq.f32.partialorder %v6353, 8.507059e+37
      %v6355 = vand.u32 %v6130, 2147483648
      %v6356 = vor.u32 1.1754944e-38, %v6355
      %v6357 = vsel %vm6354, %v6356, %v6352
      %v6358 = vmul.f32 1.0, %v6357
      %v6359 = vrcp.pop %v6131
      %v6360 = vmul.f32 %v6131, %v6359
      %v6361 = vsub.f32 1.0, %v6360
      %v6362 = vmul.f32 %v6359, %v6361
      %v6363 = vadd.f32 %v6359, %v6362
      %vm6364 = vweird.f32 %v6131
      %vm6365 = vweird.f32 %v6359
      %vm6366 = vmor %vm6364, %vm6365
      %v6367 = vsel %vm6366, %v6359, %v6363
      %v6368 = vand.u32 2147483647, %v6131
      %vm6369 = vcmp.eq.f32.partialorder %v6368, 8.507059e+37
      %v6370 = vand.u32 %v6131, 2147483648
      %v6371 = vor.u32 1.1754944e-38, %v6370
      %v6372 = vsel %vm6369, %v6371, %v6367
      %v6373 = vmul.f32 1.0, %v6372
      %v6374 = vrcp.pop %v6132
      %v6375 = vmul.f32 %v6132, %v6374
      %v6376 = vsub.f32 1.0, %v6375
      %v6377 = vmul.f32 %v6374, %v6376
      %v6378 = vadd.f32 %v6374, %v6377
      %vm6379 = vweird.f32 %v6132
      %vm6380 = vweird.f32 %v6374
      %vm6381 = vmor %vm6379, %vm6380
      %v6382 = vsel %vm6381, %v6374, %v6378
      %v6383 = vand.u32 2147483647, %v6132
      %vm6384 = vcmp.eq.f32.partialorder %v6383, 8.507059e+37
      %v6385 = vand.u32 %v6132, 2147483648
      %v6386 = vor.u32 1.1754944e-38, %v6385
      %v6387 = vsel %vm6384, %v6386, %v6382
      %v6388 = vmul.f32 1.0, %v6387
      %v6389 = vrcp.pop %v6133
      %v6390 = vmul.f32 %v6133, %v6389
      %v6391 = vsub.f32 1.0, %v6390
      %v6392 = vmul.f32 %v6389, %v6391
      %v6393 = vadd.f32 %v6389, %v6392
      %vm6394 = vweird.f32 %v6133
      %vm6395 = vweird.f32 %v6389
      %vm6396 = vmor %vm6394, %vm6395
      %v6397 = vsel %vm6396, %v6389, %v6393
      %v6398 = vand.u32 2147483647, %v6133
      %vm6399 = vcmp.eq.f32.partialorder %v6398, 8.507059e+37
      %v6400 = vand.u32 %v6133, 2147483648
      %v6401 = vor.u32 1.1754944e-38, %v6400
      %v6402 = vsel %vm6399, %v6401, %v6397
      %v6403 = vmul.f32 1.0, %v6402
      %6422 = vst [vmem:[#allocation1] sm:$0xff] %v6148
      %6423 = vst [vmem:[#allocation1 + $0x9] sm:$0xff] %v6163
      %6424 = vst [vmem:[#allocation1 + $0x12] sm:$0xff] %v6178
      %6425 = vst [vmem:[#allocation1 + $0x1b] sm:$0xff] %v6193
      %6426 = vst [vmem:[#allocation1 + $0x24] sm:$0xff] %v6208
      %6427 = vst [vmem:[#allocation1 + $0x2d] sm:$0xff] %v6223
      %6428 = vst [vmem:[#allocation1 + $0x36] sm:$0xff] %v6238
      %6429 = vst [vmem:[#allocation1 + $0x3f] sm:$0xff] %v6253
      %s6430 = scalar_lea.vmem [#allocation1], 1
      %v6431 = vld [vmem:[%s6430] ss:$9 sm:$0xff]
      %6432 = vst [vmem:[#allocation1] sm:$0xff] %v6268
      %6433 = vst [vmem:[#allocation1 + $0x9] sm:$0xff] %v6283
      %6434 = vst [vmem:[#allocation1 + $0x12] sm:$0xff] %v6298
      %6435 = vst [vmem:[#allocation1 + $0x1b] sm:$0xff] %v6313
      %6436 = vst [vmem:[#allocation1 + $0x24] sm:$0xff] %v6328
      %6437 = vst [vmem:[#allocation1 + $0x2d] sm:$0xff] %v6343
      %6438 = vst [vmem:[#allocation1 + $0x36] sm:$0xff] %v6358
      %6439 = vst [vmem:[#allocation1 + $0x3f] sm:$0xff] %v6373
      %v6440 = vld [vmem:[%s6430] ss:$9 sm:$0xff]
      %6441 = vst [vmem:[#allocation1] sm:$0xff] %v6388
      %6442 = vst [vmem:[#allocation1 + $0x9] sm:$0xff] %v6403
      %v6443 = vld [vmem:[%s6430] ss:$9 sm:$0xff]
      %6447 = vst [vmem:[%s304] sm:$0xff] %v6431
      %6448 = vst [vmem:[%s304 + $0x8] sm:$0xff] %v6440
      %v6449 = vlaneseq
      %vm6450 = vcmp.ge.s32.totalorder %v6449, 0
      %vm6451 = vcmp.lt.s32.totalorder %v6449, 256
      %vm6452 = vmand %vm6450, %vm6451
      %6453 = vst.msk [vmem:[%s304 + $0x10] sm:$0x3] %vm6452, %v6443
      %p6454 = scmp.lt.s32.totalorder %s20, 1
      %s6455 = scalar_select %p6454, %s20, 1
      %s6456 = smul.addr %s6455, 18
      %s6457 = scalar_lea.vmem %s8, %s6456
      // Predicated region
      $region53: #{deep_conv_forward.1} parent=51 // pred_check
        %p6458 = pneg %p211
      $region54: #{deep_conv_forward.1} parent=51 // pred_check_branch
        %6460 = sbr.rel (%p6458) target = $region56
      $region55: #{deep_conv_forward.1} parent=51 // pred_region
        _
      $region56: #{deep_conv_forward.1} parent=51 // pred_fallthru
        _
    $region52: #{deep_conv_forward.1} parent=5 // pred_fallthru
      _
    %p6461 = scmp.le.s32.totalorder 2, %s15
    // Predicated region
    $region57: #{deep_conv_forward.1} parent=5 // pred_check
      %p6462 = pneg %p6461
    $region58: #{deep_conv_forward.1} parent=5 // pred_check_branch
      %6464 = sbr.rel (%p6462) target = $region60
    $region59: #{deep_conv_forward.1} parent=5 // pred_region
      %s6465 = ssub.s32 %s15, 2
      // Predicated region
      $region61: #{deep_conv_forward.1} parent=59 // pred_check
        %p6466 = pneg %p217
      $region62: #{deep_conv_forward.1} parent=59 // pred_check_branch
        %6468 = sbr.rel (%p6466) target = $region64
      $region63: #{deep_conv_forward.1} parent=59 // pred_region
        %p6469 = scmp.lt.s32.totalorder %s21, 1
        %s6470 = scalar_select %p6469, %s21, 1
        %s6471 = smul.addr %s6470, 18
        %s6472 = scalar_lea.vmem %s8, %s6471
      $region64: #{deep_conv_forward.1} parent=59 // pred_fallthru
        _
    $region60: #{deep_conv_forward.1} parent=5 // pred_fallthru
      _
  $region6: #{deep_conv_forward.1} parent=0 // loop_footer
    %s19 = sadd.s32 1, %s15
  $region7: #{deep_conv_forward.1} parent=0 // loop_footer_branch
    %14 = sbr.rel target = $region3
  $region8: #{deep_conv_forward.1} parent=0 // loop_exit
    _

</llo_original>
